<compile_context>
chip_gen: v7x
topology: tpu7x:2x2x1
jax: 0.10.0
libtpu: 0.0.40
codegen_flags: <defaults>
</compile_context>

<pallas_src>
import functools

import numpy as np

import jax
import jax.numpy as jnp
from jax.experimental import pallas as pl
from jax.experimental.pallas import tpu as pltpu


# ---------------------------------------------------------------------------
# Static layout helpers (all Python ints, computed at trace time)
# ---------------------------------------------------------------------------
# conv1 input (32 rows) is stored "mod-4 major": storage pos (r%4)*8 + r//4
# holds image row r.  conv1's pooled output (14 rows) is written parity-major
# (pos 7*(i%2) + i//2 holds pooled row i), which is exactly the layout conv2's
# contiguous tap slices need.  conv2's pooled output rows are natural order.
ROW_PERM_32 = np.concatenate([np.arange(c, 32, 4) for c in range(4)])


def _make_jobs_conv1():
    jobs = []
    for s in range(2):                      # parity of the pooled output row
        starts_q = []
        for q in range(2):                  # row inside the 2x2 pooling window
            starts_q.append(
                [(c % 4) * 8 + c // 4 for c in (2 * s + q + di for di in range(5))]
            )
        jobs.append((7 * s, 7, starts_q))   # (out_row_start, n_out_rows, starts)
    return jobs


def _make_jobs_conv2():
    starts_q = []
    for q in range(2):
        starts_q.append([7 * (c % 2) + c // 2 for c in (q + di for di in range(5))])
    return [(0, 5, starts_q)]


JOBS1 = _make_jobs_conv1()
JOBS2 = _make_jobs_conv2()


# ---------------------------------------------------------------------------
# Pallas kernels
# ---------------------------------------------------------------------------
def _conv_pool_kernel(a_ref, t_ref, b_ref, o_ref, *, jobs, half):
    """Fused conv (VALID, stride 1) + bias + ReLU + 2x2 max-pool for one image.

    a_ref: (1, H, Cin*W)      bf16  input rows in the storage order encoded by `jobs`
    t_ref: (kh, Cin*W, 2*half) bf16 Toeplitz-expanded weights, cols = (parity, cout, wp)
    b_ref: (1, half)           f32  per-(cout, wp) bias
    o_ref: (1, Hp, half)       bf16 pooled output, cols = (cout, wp)
    """
    a = a_ref[0]                      # (H, Cin*W)
    bias = b_ref[...]                 # (1, half)
    kh = t_ref.shape[0]
    for out_start, nrows, starts_q in jobs:
        accs = []
        for q in range(2):            # two conv rows of the 2x2 pooling window
            st0 = starts_q[q][0]
            acc = jnp.dot(a[st0:st0 + nrows, :], t_ref[0],
                          preferred_element_type=jnp.float32)
            for di in range(1, kh):
                st = starts_q[q][di]
                acc = acc + jnp.dot(a[st:st + nrows, :], t_ref[di],
                                    preferred_element_type=jnp.float32)
            accs.append(acc)          # (nrows, 2*half) f32
        m = jnp.maximum(accs[0], accs[1])            # pool over window rows
        m = jnp.maximum(m[:, :half], m[:, half:])    # pool over window cols (even/odd halves)
        # bias is constant over each 2x2 window and ReLU is monotone, so
        # (bias + ReLU) after the max == PyTorch's relu(conv+b) then max_pool.
        o_ref[0, out_start:out_start + nrows, :] = jnp.maximum(
            m + bias, 0.0).astype(o_ref.dtype)


def _mlp_kernel(x_ref, w1_ref, b1_ref, w2_ref, b2_ref, w3_ref, b3_ref, o_ref):
    """Fused fc1->ReLU->fc2->ReLU->fc3 (bf16 operands, f32 accumulation)."""
    h = jnp.dot(x_ref[...], w1_ref[...], preferred_element_type=jnp.float32) + b1_ref[...]
    h = jnp.maximum(h, 0.0).astype(jnp.bfloat16)
    h = jnp.dot(h, w2_ref[...], preferred_element_type=jnp.float32) + b2_ref[...]
    h = jnp.maximum(h, 0.0).astype(jnp.bfloat16)
    o_ref[...] = jnp.dot(h, w3_ref[...], preferred_element_type=jnp.float32) + b3_ref[...]


# ---------------------------------------------------------------------------
# pallas_call wrappers
# ---------------------------------------------------------------------------
def conv_pool(a, t, b_pool, *, jobs, hp, half):
    """a: (N, H, Cin*W) bf16 -> (N, Hp, half) bf16 (fused conv+bias+relu+pool)."""
    N, H, cin_w = a.shape
    kh = t.shape[0]
    kernel = functools.partial(_conv_pool_kernel, jobs=jobs, half=half)
    return pl.pallas_call(
        kernel,
        out_shape=jax.ShapeDtypeStruct((N, hp, half), jnp.bfloat16),
        grid=(N,),
        in_specs=[
            pl.BlockSpec((1, H, cin_w), lambda n: (n, 0, 0)),
            pl.BlockSpec((kh, cin_w, 2 * half), lambda n: (0, 0, 0)),
            pl.BlockSpec((1, half), lambda n: (0, 0)),
        ],
        out_specs=pl.BlockSpec((1, hp, half), lambda n: (n, 0, 0)),
        compiler_params=pltpu.CompilerParams(dimension_semantics=("parallel",)),
    )(a, t, b_pool)


def mlp(x, w1, b1, w2, b2, w3, b3):
    """Fused 3-layer MLP; batch rows tiled across the grid."""
    N, K = x.shape
    out_dim = w3.shape[1]
    tm = N if N <= 256 else 256

    def _full(shape):
        return pl.BlockSpec(shape, lambda i, _s=shape: (0,) * len(_s))

    return pl.pallas_call(
        _mlp_kernel,
        out_shape=jax.ShapeDtypeStruct((N, out_dim), jnp.float32),
        grid=(pl.cdiv(N, tm),),
        in_specs=[
            pl.BlockSpec((tm, K), lambda i: (i, 0)),
            _full(w1.shape), _full(b1.shape),
            _full(w2.shape), _full(b2.shape),
            _full(w3.shape), _full(b3.shape),
        ],
        out_specs=pl.BlockSpec((tm, out_dim), lambda i: (i, 0)),
        compiler_params=pltpu.CompilerParams(dimension_semantics=("parallel",)),
    )(x, w1, b1, w2, b2, w3, b3)


# ---------------------------------------------------------------------------
# Parameter preparation (tiny, trace-time / one-off host-side transforms)
# ---------------------------------------------------------------------------
def _toeplitz_conv_weight(w, W):
    """Expand a (Cout, Cin, kh, kw) conv weight into kh matrices of shape
    (Cin*W, 2*Cout*Wp) so that each row-tap of the conv becomes a single 2-D
    matmul; output columns are ordered (col-parity, cout, wp) so the 2x2 pool's
    column reduction is a max of two contiguous lane halves."""
    Cout, Cin, kh, kw = w.shape
    Wo = W - kw + 1
    Wp = Wo // 2
    j = jnp.arange(Wo)
    wc = jnp.arange(W)
    diff = wc[:, None] - j[None, :]                     # (W, Wo): wc - j
    valid = (diff >= 0) & (diff < kw)
    diff_c = jnp.clip(diff, 0, kw - 1)
    wt = jnp.transpose(w, (2, 1, 0, 3))                 # (kh, Cin, Cout, kw)
    t = wt[:, :, :, diff_c]                             # (kh, Cin, Cout, W, Wo)
    t = jnp.where(valid[None, None, None, :, :], t, 0.0)
    t = t.reshape(kh, Cin, Cout, W, Wp, 2)              # j = 2*wp + parity
    t = jnp.transpose(t, (0, 1, 3, 5, 2, 4))            # (kh, Cin, W, parity, Cout, Wp)
    return t.reshape(kh, Cin * W, 2 * Cout * Wp)


def init_params(key):
    """PyTorch-default-style uniform init, PyTorch-convention shapes."""
    def uniform(k, shape, fan_in):
        bound = 1.0 / np.sqrt(float(fan_in))
        return jax.random.uniform(k, shape, jnp.float32, -bound, bound)

    ks = jax.random.split(key, 10)
    return {
        "conv1_w": uniform(ks[0], (6, 1, 5, 5), 25),
        "conv1_b": uniform(ks[1], (6,), 25),
        "conv2_w": uniform(ks[2], (16, 6, 5, 5), 150),
        "conv2_b": uniform(ks[3], (16,), 150),
        "fc1_w": uniform(ks[4], (120, 400), 400),   # (out, in) like nn.Linear
        "fc1_b": uniform(ks[5], (120,), 400),
        "fc2_w": uniform(ks[6], (84, 120), 120),
        "fc2_b": uniform(ks[7], (84,), 120),
        "fc3_w": uniform(ks[8], (10, 84), 84),
        "fc3_b": uniform(ks[9], (10,), 84),
    }


def prepare_params(p):
    """Lower PyTorch-convention params into kernel-ready (bf16) operands."""
    kp = {}
    kp["t1"] = _toeplitz_conv_weight(p["conv1_w"], W=32).astype(jnp.bfloat16)   # (5, 32, 168)
    kp["b1"] = jnp.broadcast_to(p["conv1_b"][:, None], (6, 14)).reshape(1, 84).astype(jnp.float32)
    kp["t2"] = _toeplitz_conv_weight(p["conv2_w"], W=14).astype(jnp.bfloat16)   # (5, 84, 160)
    kp["b2"] = jnp.broadcast_to(p["conv2_b"][:, None], (16, 5)).reshape(1, 80).astype(jnp.float32)
    # fc1: kernel sees features flattened as (h, c, w); torch flattens as (c, h, w).
    w1 = p["fc1_w"].T.reshape(16, 5, 5, 120).transpose(1, 0, 2, 3).reshape(400, 120)
    kp["w1"] = w1.astype(jnp.bfloat16)
    kp["b1f"] = p["fc1_b"].reshape(1, 120).astype(jnp.float32)
    kp["w2"] = p["fc2_w"].T.astype(jnp.bfloat16)
    kp["b2f"] = p["fc2_b"].reshape(1, 84).astype(jnp.float32)
    kp["w3"] = p["fc3_w"].T.astype(jnp.bfloat16)
    kp["b3f"] = p["fc3_b"].reshape(1, 10).astype(jnp.float32)
    return kp


# ---------------------------------------------------------------------------
# Forward pass (mirrors Net.forward)
# ---------------------------------------------------------------------------
@jax.jit
def net_forward(kp, x):
    # x: (N, 1, 32, 32) NCHW float32
    N = x.shape[0]
    # boundary-only glue: drop channel dim, permute rows to mod-4-major, cast bf16
    a1 = x[:, 0, ROW_PERM_32, :].astype(jnp.bfloat16)                 # (N, 32, 32)
    h1 = conv_pool(a1, kp["t1"], kp["b1"], jobs=JOBS1, hp=14, half=84)  # (N, 14, 84)
    h2 = conv_pool(h1, kp["t2"], kp["b2"], jobs=JOBS2, hp=5, half=80)   # (N, 5, 80)
    h2 = h2.reshape(N, 400)                                            # torch.flatten(x, 1) (reordered)
    return mlp(h2, kp["w1"], kp["b1f"], kp["w2"], kp["b2f"], kp["w3"], kp["b3f"])  # (N, 10) f32


# ---------------------------------------------------------------------------
# Pure-JAX reference (straight transliteration of the PyTorch module)
# ---------------------------------------------------------------------------
def net_reference(params, x):
    def conv(h, w, b):
        y = jax.lax.conv_general_dilated(
            h, w, (1, 1), "VALID", dimension_numbers=("NCHW", "OIHW", "NCHW"))
        return jax.nn.relu(y + b[None, :, None, None])

    def pool(h):
        return jax.lax.reduce_window(
            h, -jnp.inf, jax.lax.max, (1, 1, 2, 2), (1, 1, 2, 2), "VALID")

    c1 = conv(x, params["conv1_w"], params["conv1_b"])
    s2 = pool(c1)
    c3 = conv(s2, params["conv2_w"], params["conv2_b"])
    s4 = pool(c3)
    s4 = s4.reshape(s4.shape[0], -1)
    f5 = jax.nn.relu(s4 @ params["fc1_w"].T + params["fc1_b"])
    f6 = jax.nn.relu(f5 @ params["fc2_w"].T + params["fc2_b"])
    return f6 @ params["fc3_w"].T + params["fc3_b"]


if __name__ == "__main__":
    key = jax.random.PRNGKey(0)
    k_x, k_p = jax.random.split(key)
    # Input must be 32x32 so the flattened feature is 16*5*5 = 400 (as in Net).
    x = jax.random.normal(k_x, (2, 1, 32, 32), dtype=jnp.float32)
    params = init_params(k_p)
    kparams = prepare_params(params)

    out = jax.block_until_ready(net_forward(kparams, x))
    assert out.shape == (2, 10), out.shape
    assert out.dtype == jnp.float32, out.dtype

    ref = jax.block_until_ready(net_reference(params, x))
    max_diff = float(jnp.max(jnp.abs(out - ref)))
    # bf16 matmul operands -> small numerical drift vs the f32 reference
    assert max_diff < 1e-1, f"mismatch vs reference: max|diff|={max_diff}"

    print("KERNEL_OK")
</pallas_src>

<mosaic_0001>
module attributes {stable_mosaic.version = 11 : i64} {
  func.func @_conv_pool_kernel(%arg0: i32, %arg1: memref<1x32x32xbf16, #tpu.memory_space<vmem>>, %arg2: memref<5x32x168xbf16, #tpu.memory_space<vmem>>, %arg3: memref<1x84xf32, #tpu.memory_space<vmem>>, %arg4: memref<1x14x84xbf16, #tpu.memory_space<vmem>>) attributes {dimension_semantics = [#tpu.dimension_semantics<parallel>], iteration_bounds = array<i64: 2>, scalar_prefetch = 0 : i64, scratch_operands = 0 : i64, tpu.core_type = #tpu.core_type<tc>, window_params = [{transform_indices = @transform_0, window_bounds = array<i64: 1, 32, 32>}, {pipeline_mode = #tpu.pipeline_mode<synchronous>, transform_indices = @transform_1, window_bounds = array<i64: 5, 32, 168>}, {pipeline_mode = #tpu.pipeline_mode<synchronous>, transform_indices = @transform_2, window_bounds = array<i64: 1, 84>}, {transform_indices = @transform_3, window_bounds = array<i64: 1, 14, 84>}]} {
    %c0 = arith.constant 0 : index
    %c0_0 = arith.constant 0 : index
    %c0_1 = arith.constant 0 : index
    %0 = vector.load %arg1[%c0, %c0_0, %c0_1] : memref<1x32x32xbf16, #tpu.memory_space<vmem>>, vector<1x32x32xbf16>
    %1 = vector.shape_cast %0 : vector<1x32x32xbf16> to vector<32x32xbf16>
    %c0_2 = arith.constant 0 : index
    %c0_3 = arith.constant 0 : index
    %2 = vector.load %arg3[%c0_2, %c0_3] : memref<1x84xf32, #tpu.memory_space<vmem>>, vector<1x84xf32>
    %3 = vector.extract_strided_slice %1 {offsets = [0, 0], sizes = [7, 32], strides = [1, 1]} : vector<32x32xbf16> to vector<7x32xbf16>
    %c0_4 = arith.constant 0 : index
    %c0_5 = arith.constant 0 : index
    %c0_6 = arith.constant 0 : index
    %4 = vector.load %arg2[%c0_4, %c0_5, %c0_6] : memref<5x32x168xbf16, #tpu.memory_space<vmem>>, vector<1x32x168xbf16>
    %5 = vector.shape_cast %4 : vector<1x32x168xbf16> to vector<32x168xbf16>
    %cst = arith.constant dense<0.000000e+00> : vector<7x168xf32>
    %6 = tpu.matmul %3, %5, %cst {dimension_numbers = #tpu.dot_dimension_numbers<[1], [0], [0], [1], [0, 0, 1, 1], [], []>} : vector<7x32xbf16>, vector<32x168xbf16>, vector<7x168xf32> -> vector<7x168xf32>
    %7 = vector.extract_strided_slice %1 {offsets = [8, 0], sizes = [7, 32], strides = [1, 1]} : vector<32x32xbf16> to vector<7x32xbf16>
    %c1 = arith.constant 1 : index
    %c0_7 = arith.constant 0 : index
    %c0_8 = arith.constant 0 : index
    %8 = vector.load %arg2[%c1, %c0_7, %c0_8] : memref<5x32x168xbf16, #tpu.memory_space<vmem>>, vector<1x32x168xbf16>
    %9 = vector.shape_cast %8 : vector<1x32x168xbf16> to vector<32x168xbf16>
    %cst_9 = arith.constant dense<0.000000e+00> : vector<7x168xf32>
    %10 = tpu.matmul %7, %9, %cst_9 {dimension_numbers = #tpu.dot_dimension_numbers<[1], [0], [0], [1], [0, 0, 1, 1], [], []>} : vector<7x32xbf16>, vector<32x168xbf16>, vector<7x168xf32> -> vector<7x168xf32>
    %11 = arith.addf %6, %10 : vector<7x168xf32>
    %12 = vector.extract_strided_slice %1 {offsets = [16, 0], sizes = [7, 32], strides = [1, 1]} : vector<32x32xbf16> to vector<7x32xbf16>
    %c2 = arith.constant 2 : index
    %c0_10 = arith.constant 0 : index
    %c0_11 = arith.constant 0 : index
    %13 = vector.load %arg2[%c2, %c0_10, %c0_11] : memref<5x32x168xbf16, #tpu.memory_space<vmem>>, vector<1x32x168xbf16>
    %14 = vector.shape_cast %13 : vector<1x32x168xbf16> to vector<32x168xbf16>
    %cst_12 = arith.constant dense<0.000000e+00> : vector<7x168xf32>
    %15 = tpu.matmul %12, %14, %cst_12 {dimension_numbers = #tpu.dot_dimension_numbers<[1], [0], [0], [1], [0, 0, 1, 1], [], []>} : vector<7x32xbf16>, vector<32x168xbf16>, vector<7x168xf32> -> vector<7x168xf32>
    %16 = arith.addf %11, %15 : vector<7x168xf32>
    %17 = vector.extract_strided_slice %1 {offsets = [24, 0], sizes = [7, 32], strides = [1, 1]} : vector<32x32xbf16> to vector<7x32xbf16>
    %c3 = arith.constant 3 : index
    %c0_13 = arith.constant 0 : index
    %c0_14 = arith.constant 0 : index
    %18 = vector.load %arg2[%c3, %c0_13, %c0_14] : memref<5x32x168xbf16, #tpu.memory_space<vmem>>, vector<1x32x168xbf16>
    %19 = vector.shape_cast %18 : vector<1x32x168xbf16> to vector<32x168xbf16>
    %cst_15 = arith.constant dense<0.000000e+00> : vector<7x168xf32>
    %20 = tpu.matmul %17, %19, %cst_15 {dimension_numbers = #tpu.dot_dimension_numbers<[1], [0], [0], [1], [0, 0, 1, 1], [], []>} : vector<7x32xbf16>, vector<32x168xbf16>, vector<7x168xf32> -> vector<7x168xf32>
    %21 = arith.addf %16, %20 : vector<7x168xf32>
    %22 = vector.extract_strided_slice %1 {offsets = [1, 0], sizes = [7, 32], strides = [1, 1]} : vector<32x32xbf16> to vector<7x32xbf16>
    %c4 = arith.constant 4 : index
    %c0_16 = arith.constant 0 : index
    %c0_17 = arith.constant 0 : index
    %23 = vector.load %arg2[%c4, %c0_16, %c0_17] : memref<5x32x168xbf16, #tpu.memory_space<vmem>>, vector<1x32x168xbf16>
    %24 = vector.shape_cast %23 : vector<1x32x168xbf16> to vector<32x168xbf16>
    %cst_18 = arith.constant dense<0.000000e+00> : vector<7x168xf32>
    %25 = tpu.matmul %22, %24, %cst_18 {dimension_numbers = #tpu.dot_dimension_numbers<[1], [0], [0], [1], [0, 0, 1, 1], [], []>} : vector<7x32xbf16>, vector<32x168xbf16>, vector<7x168xf32> -> vector<7x168xf32>
    %26 = arith.addf %21, %25 : vector<7x168xf32>
    %27 = vector.extract_strided_slice %1 {offsets = [8, 0], sizes = [7, 32], strides = [1, 1]} : vector<32x32xbf16> to vector<7x32xbf16>
    %c0_19 = arith.constant 0 : index
    %c0_20 = arith.constant 0 : index
    %c0_21 = arith.constant 0 : index
    %28 = vector.load %arg2[%c0_19, %c0_20, %c0_21] : memref<5x32x168xbf16, #tpu.memory_space<vmem>>, vector<1x32x168xbf16>
    %29 = vector.shape_cast %28 : vector<1x32x168xbf16> to vector<32x168xbf16>
    %cst_22 = arith.constant dense<0.000000e+00> : vector<7x168xf32>
    %30 = tpu.matmul %27, %29, %cst_22 {dimension_numbers = #tpu.dot_dimension_numbers<[1], [0], [0], [1], [0, 0, 1, 1], [], []>} : vector<7x32xbf16>, vector<32x168xbf16>, vector<7x168xf32> -> vector<7x168xf32>
    %31 = vector.extract_strided_slice %1 {offsets = [16, 0], sizes = [7, 32], strides = [1, 1]} : vector<32x32xbf16> to vector<7x32xbf16>
    %c1_23 = arith.constant 1 : index
    %c0_24 = arith.constant 0 : index
    %c0_25 = arith.constant 0 : index
    %32 = vector.load %arg2[%c1_23, %c0_24, %c0_25] : memref<5x32x168xbf16, #tpu.memory_space<vmem>>, vector<1x32x168xbf16>
    %33 = vector.shape_cast %32 : vector<1x32x168xbf16> to vector<32x168xbf16>
    %cst_26 = arith.constant dense<0.000000e+00> : vector<7x168xf32>
    %34 = tpu.matmul %31, %33, %cst_26 {dimension_numbers = #tpu.dot_dimension_numbers<[1], [0], [0], [1], [0, 0, 1, 1], [], []>} : vector<7x32xbf16>, vector<32x168xbf16>, vector<7x168xf32> -> vector<7x168xf32>
    %35 = arith.addf %30, %34 : vector<7x168xf32>
    %36 = vector.extract_strided_slice %1 {offsets = [24, 0], sizes = [7, 32], strides = [1, 1]} : vector<32x32xbf16> to vector<7x32xbf16>
    %c2_27 = arith.constant 2 : index
    %c0_28 = arith.constant 0 : index
    %c0_29 = arith.constant 0 : index
    %37 = vector.load %arg2[%c2_27, %c0_28, %c0_29] : memref<5x32x168xbf16, #tpu.memory_space<vmem>>, vector<1x32x168xbf16>
    %38 = vector.shape_cast %37 : vector<1x32x168xbf16> to vector<32x168xbf16>
    %cst_30 = arith.constant dense<0.000000e+00> : vector<7x168xf32>
    %39 = tpu.matmul %36, %38, %cst_30 {dimension_numbers = #tpu.dot_dimension_numbers<[1], [0], [0], [1], [0, 0, 1, 1], [], []>} : vector<7x32xbf16>, vector<32x168xbf16>, vector<7x168xf32> -> vector<7x168xf32>
    %40 = arith.addf %35, %39 : vector<7x168xf32>
    %41 = vector.extract_strided_slice %1 {offsets = [1, 0], sizes = [7, 32], strides = [1, 1]} : vector<32x32xbf16> to vector<7x32xbf16>
    %c3_31 = arith.constant 3 : index
    %c0_32 = arith.constant 0 : index
    %c0_33 = arith.constant 0 : index
    %42 = vector.load %arg2[%c3_31, %c0_32, %c0_33] : memref<5x32x168xbf16, #tpu.memory_space<vmem>>, vector<1x32x168xbf16>
    %43 = vector.shape_cast %42 : vector<1x32x168xbf16> to vector<32x168xbf16>
    %cst_34 = arith.constant dense<0.000000e+00> : vector<7x168xf32>
    %44 = tpu.matmul %41, %43, %cst_34 {dimension_numbers = #tpu.dot_dimension_numbers<[1], [0], [0], [1], [0, 0, 1, 1], [], []>} : vector<7x32xbf16>, vector<32x168xbf16>, vector<7x168xf32> -> vector<7x168xf32>
    %45 = arith.addf %40, %44 : vector<7x168xf32>
    %46 = vector.extract_strided_slice %1 {offsets = [9, 0], sizes = [7, 32], strides = [1, 1]} : vector<32x32xbf16> to vector<7x32xbf16>
    %c4_35 = arith.constant 4 : index
    %c0_36 = arith.constant 0 : index
    %c0_37 = arith.constant 0 : index
    %47 = vector.load %arg2[%c4_35, %c0_36, %c0_37] : memref<5x32x168xbf16, #tpu.memory_space<vmem>>, vector<1x32x168xbf16>
    %48 = vector.shape_cast %47 : vector<1x32x168xbf16> to vector<32x168xbf16>
    %cst_38 = arith.constant dense<0.000000e+00> : vector<7x168xf32>
    %49 = tpu.matmul %46, %48, %cst_38 {dimension_numbers = #tpu.dot_dimension_numbers<[1], [0], [0], [1], [0, 0, 1, 1], [], []>} : vector<7x32xbf16>, vector<32x168xbf16>, vector<7x168xf32> -> vector<7x168xf32>
    %50 = arith.addf %45, %49 : vector<7x168xf32>
    %51 = arith.maximumf %26, %50 : vector<7x168xf32>
    %52 = vector.extract_strided_slice %51 {offsets = [0, 0], sizes = [7, 84], strides = [1, 1]} : vector<7x168xf32> to vector<7x84xf32>
    %53 = vector.extract_strided_slice %51 {offsets = [0, 84], sizes = [7, 84], strides = [1, 1]} : vector<7x168xf32> to vector<7x84xf32>
    %54 = arith.maximumf %52, %53 : vector<7x84xf32>
    %55 = vector.broadcast %2 : vector<1x84xf32> to vector<7x84xf32>
    %56 = arith.addf %54, %55 : vector<7x84xf32>
    %cst_39 = arith.constant 0.000000e+00 : f32
    %57 = vector.broadcast %cst_39 : f32 to vector<7x84xf32>
    %58 = arith.maximumf %56, %57 : vector<7x84xf32>
    %59 = arith.truncf %58 : vector<7x84xf32> to vector<7x84xbf16>
    %c0_40 = arith.constant 0 : index
    %c0_41 = arith.constant 0 : index
    %c0_42 = arith.constant 0 : index
    %60 = vector.load %arg4[%c0_40, %c0_41, %c0_42] : memref<1x14x84xbf16, #tpu.memory_space<vmem>>, vector<1x7x84xbf16>
    %61 = vector.shape_cast %60 : vector<1x7x84xbf16> to vector<7x84xbf16>
    %62 = vector.shape_cast %59 : vector<7x84xbf16> to vector<1x7x84xbf16>
    tpu.vector_store %arg4[%c0_40, %c0_41, %c0_42], %62 {strides = array<i32>} : memref<1x14x84xbf16, #tpu.memory_space<vmem>>, vector<1x7x84xbf16>,
    %63 = vector.extract_strided_slice %1 {offsets = [16, 0], sizes = [7, 32], strides = [1, 1]} : vector<32x32xbf16> to vector<7x32xbf16>
    %c0_43 = arith.constant 0 : index
    %c0_44 = arith.constant 0 : index
    %c0_45 = arith.constant 0 : index
    %64 = vector.load %arg2[%c0_43, %c0_44, %c0_45] : memref<5x32x168xbf16, #tpu.memory_space<vmem>>, vector<1x32x168xbf16>
    %65 = vector.shape_cast %64 : vector<1x32x168xbf16> to vector<32x168xbf16>
    %cst_46 = arith.constant dense<0.000000e+00> : vector<7x168xf32>
    %66 = tpu.matmul %63, %65, %cst_46 {dimension_numbers = #tpu.dot_dimension_numbers<[1], [0], [0], [1], [0, 0, 1, 1], [], []>} : vector<7x32xbf16>, vector<32x168xbf16>, vector<7x168xf32> -> vector<7x168xf32>
    %67 = vector.extract_strided_slice %1 {offsets = [24, 0], sizes = [7, 32], strides = [1, 1]} : vector<32x32xbf16> to vector<7x32xbf16>
    %c1_47 = arith.constant 1 : index
    %c0_48 = arith.constant 0 : index
    %c0_49 = arith.constant 0 : index
    %68 = vector.load %arg2[%c1_47, %c0_48, %c0_49] : memref<5x32x168xbf16, #tpu.memory_space<vmem>>, vector<1x32x168xbf16>
    %69 = vector.shape_cast %68 : vector<1x32x168xbf16> to vector<32x168xbf16>
    %cst_50 = arith.constant dense<0.000000e+00> : vector<7x168xf32>
    %70 = tpu.matmul %67, %69, %cst_50 {dimension_numbers = #tpu.dot_dimension_numbers<[1], [0], [0], [1], [0, 0, 1, 1], [], []>} : vector<7x32xbf16>, vector<32x168xbf16>, vector<7x168xf32> -> vector<7x168xf32>
    %71 = arith.addf %66, %70 : vector<7x168xf32>
    %72 = vector.extract_strided_slice %1 {offsets = [1, 0], sizes = [7, 32], strides = [1, 1]} : vector<32x32xbf16> to vector<7x32xbf16>
    %c2_51 = arith.constant 2 : index
    %c0_52 = arith.constant 0 : index
    %c0_53 = arith.constant 0 : index
    %73 = vector.load %arg2[%c2_51, %c0_52, %c0_53] : memref<5x32x168xbf16, #tpu.memory_space<vmem>>, vector<1x32x168xbf16>
    %74 = vector.shape_cast %73 : vector<1x32x168xbf16> to vector<32x168xbf16>
    %cst_54 = arith.constant dense<0.000000e+00> : vector<7x168xf32>
    %75 = tpu.matmul %72, %74, %cst_54 {dimension_numbers = #tpu.dot_dimension_numbers<[1], [0], [0], [1], [0, 0, 1, 1], [], []>} : vector<7x32xbf16>, vector<32x168xbf16>, vector<7x168xf32> -> vector<7x168xf32>
    %76 = arith.addf %71, %75 : vector<7x168xf32>
    %77 = vector.extract_strided_slice %1 {offsets = [9, 0], sizes = [7, 32], strides = [1, 1]} : vector<32x32xbf16> to vector<7x32xbf16>
    %c3_55 = arith.constant 3 : index
    %c0_56 = arith.constant 0 : index
    %c0_57 = arith.constant 0 : index
    %78 = vector.load %arg2[%c3_55, %c0_56, %c0_57] : memref<5x32x168xbf16, #tpu.memory_space<vmem>>, vector<1x32x168xbf16>
    %79 = vector.shape_cast %78 : vector<1x32x168xbf16> to vector<32x168xbf16>
    %cst_58 = arith.constant dense<0.000000e+00> : vector<7x168xf32>
    %80 = tpu.matmul %77, %79, %cst_58 {dimension_numbers = #tpu.dot_dimension_numbers<[1], [0], [0], [1], [0, 0, 1, 1], [], []>} : vector<7x32xbf16>, vector<32x168xbf16>, vector<7x168xf32> -> vector<7x168xf32>
    %81 = arith.addf %76, %80 : vector<7x168xf32>
    %82 = vector.extract_strided_slice %1 {offsets = [17, 0], sizes = [7, 32], strides = [1, 1]} : vector<32x32xbf16> to vector<7x32xbf16>
    %c4_59 = arith.constant 4 : index
    %c0_60 = arith.constant 0 : index
    %c0_61 = arith.constant 0 : index
    %83 = vector.load %arg2[%c4_59, %c0_60, %c0_61] : memref<5x32x168xbf16, #tpu.memory_space<vmem>>, vector<1x32x168xbf16>
    %84 = vector.shape_cast %83 : vector<1x32x168xbf16> to vector<32x168xbf16>
    %cst_62 = arith.constant dense<0.000000e+00> : vector<7x168xf32>
    %85 = tpu.matmul %82, %84, %cst_62 {dimension_numbers = #tpu.dot_dimension_numbers<[1], [0], [0], [1], [0, 0, 1, 1], [], []>} : vector<7x32xbf16>, vector<32x168xbf16>, vector<7x168xf32> -> vector<7x168xf32>
    %86 = arith.addf %81, %85 : vector<7x168xf32>
    %87 = vector.extract_strided_slice %1 {offsets = [24, 0], sizes = [7, 32], strides = [1, 1]} : vector<32x32xbf16> to vector<7x32xbf16>
    %c0_63 = arith.constant 0 : index
    %c0_64 = arith.constant 0 : index
    %c0_65 = arith.constant 0 : index
    %88 = vector.load %arg2[%c0_63, %c0_64, %c0_65] : memref<5x32x168xbf16, #tpu.memory_space<vmem>>, vector<1x32x168xbf16>
    %89 = vector.shape_cast %88 : vector<1x32x168xbf16> to vector<32x168xbf16>
    %cst_66 = arith.constant dense<0.000000e+00> : vector<7x168xf32>
    %90 = tpu.matmul %87, %89, %cst_66 {dimension_numbers = #tpu.dot_dimension_numbers<[1], [0], [0], [1], [0, 0, 1, 1], [], []>} : vector<7x32xbf16>, vector<32x168xbf16>, vector<7x168xf32> -> vector<7x168xf32>
    %91 = vector.extract_strided_slice %1 {offsets = [1, 0], sizes = [7, 32], strides = [1, 1]} : vector<32x32xbf16> to vector<7x32xbf16>
    %c1_67 = arith.constant 1 : index
    %c0_68 = arith.constant 0 : index
    %c0_69 = arith.constant 0 : index
    %92 = vector.load %arg2[%c1_67, %c0_68, %c0_69] : memref<5x32x168xbf16, #tpu.memory_space<vmem>>, vector<1x32x168xbf16>
    %93 = vector.shape_cast %92 : vector<1x32x168xbf16> to vector<32x168xbf16>
    %cst_70 = arith.constant dense<0.000000e+00> : vector<7x168xf32>
    %94 = tpu.matmul %91, %93, %cst_70 {dimension_numbers = #tpu.dot_dimension_numbers<[1], [0], [0], [1], [0, 0, 1, 1], [], []>} : vector<7x32xbf16>, vector<32x168xbf16>, vector<7x168xf32> -> vector<7x168xf32>
    %95 = arith.addf %90, %94 : vector<7x168xf32>
    %96 = vector.extract_strided_slice %1 {offsets = [9, 0], sizes = [7, 32], strides = [1, 1]} : vector<32x32xbf16> to vector<7x32xbf16>
    %c2_71 = arith.constant 2 : index
    %c0_72 = arith.constant 0 : index
    %c0_73 = arith.constant 0 : index
    %97 = vector.load %arg2[%c2_71, %c0_72, %c0_73] : memref<5x32x168xbf16, #tpu.memory_space<vmem>>, vector<1x32x168xbf16>
    %98 = vector.shape_cast %97 : vector<1x32x168xbf16> to vector<32x168xbf16>
    %cst_74 = arith.constant dense<0.000000e+00> : vector<7x168xf32>
    %99 = tpu.matmul %96, %98, %cst_74 {dimension_numbers = #tpu.dot_dimension_numbers<[1], [0], [0], [1], [0, 0, 1, 1], [], []>} : vector<7x32xbf16>, vector<32x168xbf16>, vector<7x168xf32> -> vector<7x168xf32>
    %100 = arith.addf %95, %99 : vector<7x168xf32>
    %101 = vector.extract_strided_slice %1 {offsets = [17, 0], sizes = [7, 32], strides = [1, 1]} : vector<32x32xbf16> to vector<7x32xbf16>
    %c3_75 = arith.constant 3 : index
    %c0_76 = arith.constant 0 : index
    %c0_77 = arith.constant 0 : index
    %102 = vector.load %arg2[%c3_75, %c0_76, %c0_77] : memref<5x32x168xbf16, #tpu.memory_space<vmem>>, vector<1x32x168xbf16>
    %103 = vector.shape_cast %102 : vector<1x32x168xbf16> to vector<32x168xbf16>
    %cst_78 = arith.constant dense<0.000000e+00> : vector<7x168xf32>
    %104 = tpu.matmul %101, %103, %cst_78 {dimension_numbers = #tpu.dot_dimension_numbers<[1], [0], [0], [1], [0, 0, 1, 1], [], []>} : vector<7x32xbf16>, vector<32x168xbf16>, vector<7x168xf32> -> vector<7x168xf32>
    %105 = arith.addf %100, %104 : vector<7x168xf32>
    %106 = vector.extract_strided_slice %1 {offsets = [25, 0], sizes = [7, 32], strides = [1, 1]} : vector<32x32xbf16> to vector<7x32xbf16>
    %c4_79 = arith.constant 4 : index
    %c0_80 = arith.constant 0 : index
    %c0_81 = arith.constant 0 : index
    %107 = vector.load %arg2[%c4_79, %c0_80, %c0_81] : memref<5x32x168xbf16, #tpu.memory_space<vmem>>, vector<1x32x168xbf16>
    %108 = vector.shape_cast %107 : vector<1x32x168xbf16> to vector<32x168xbf16>
    %cst_82 = arith.constant dense<0.000000e+00> : vector<7x168xf32>
    %109 = tpu.matmul %106, %108, %cst_82 {dimension_numbers = #tpu.dot_dimension_numbers<[1], [0], [0], [1], [0, 0, 1, 1], [], []>} : vector<7x32xbf16>, vector<32x168xbf16>, vector<7x168xf32> -> vector<7x168xf32>
    %110 = arith.addf %105, %109 : vector<7x168xf32>
    %111 = arith.maximumf %86, %110 : vector<7x168xf32>
    %112 = vector.extract_strided_slice %111 {offsets = [0, 0], sizes = [7, 84], strides = [1, 1]} : vector<7x168xf32> to vector<7x84xf32>
    %113 = vector.extract_strided_slice %111 {offsets = [0, 84], sizes = [7, 84], strides = [1, 1]} : vector<7x168xf32> to vector<7x84xf32>
    %114 = arith.maximumf %112, %113 : vector<7x84xf32>
    %115 = vector.broadcast %2 : vector<1x84xf32> to vector<7x84xf32>
    %116 = arith.addf %114, %115 : vector<7x84xf32>
    %cst_83 = arith.constant 0.000000e+00 : f32
    %117 = vector.broadcast %cst_83 : f32 to vector<7x84xf32>
    %118 = arith.maximumf %116, %117 : vector<7x84xf32>
    %119 = arith.truncf %118 : vector<7x84xf32> to vector<7x84xbf16>
    %c0_84 = arith.constant 0 : index
    %c7 = arith.constant 7 : index
    %c0_85 = arith.constant 0 : index
    %120 = vector.load %arg4[%c0_84, %c7, %c0_85] : memref<1x14x84xbf16, #tpu.memory_space<vmem>>, vector<1x7x84xbf16>
    %121 = vector.shape_cast %120 : vector<1x7x84xbf16> to vector<7x84xbf16>
    %122 = vector.shape_cast %119 : vector<7x84xbf16> to vector<1x7x84xbf16>
    tpu.vector_store %arg4[%c0_84, %c7, %c0_85], %122 {strides = array<i32>} : memref<1x14x84xbf16, #tpu.memory_space<vmem>>, vector<1x7x84xbf16>,
    return
  }
  func.func @transform_0(%arg0: i32) -> (i32, i32, i32) {
    %c0_i32 = arith.constant 0 : i32
    %c0_i32_0 = arith.constant 0 : i32
    %c0_i32_1 = arith.constant 0 : i32
    return %arg0, %c0_i32, %c0_i32_0 : i32, i32, i32
  }
  func.func @transform_1(%arg0: i32) -> (i32, i32, i32) {
    %c0_i32 = arith.constant 0 : i32
    %c0_i32_0 = arith.constant 0 : i32
    %c0_i32_1 = arith.constant 0 : i32
    %c0_i32_2 = arith.constant 0 : i32
    return %c0_i32, %c0_i32_0, %c0_i32_1 : i32, i32, i32
  }
  func.func @transform_2(%arg0: i32) -> (i32, i32) {
    %c0_i32 = arith.constant 0 : i32
    %c0_i32_0 = arith.constant 0 : i32
    %c0_i32_1 = arith.constant 0 : i32
    return %c0_i32, %c0_i32_0 : i32, i32
  }
  func.func @transform_3(%arg0: i32) -> (i32, i32, i32) {
    %c0_i32 = arith.constant 0 : i32
    %c0_i32_0 = arith.constant 0 : i32
    %c0_i32_1 = arith.constant 0 : i32
    return %arg0, %c0_i32, %c0_i32_0 : i32, i32, i32
  }
}

module attributes {stable_mosaic.version = 11 : i64} {
  func.func @_conv_pool_kernel(%arg0: i32, %arg1: memref<1x14x84xbf16, #tpu.memory_space<vmem>>, %arg2: memref<5x84x160xbf16, #tpu.memory_space<vmem>>, %arg3: memref<1x80xf32, #tpu.memory_space<vmem>>, %arg4: memref<1x5x80xbf16, #tpu.memory_space<vmem>>) attributes {dimension_semantics = [#tpu.dimension_semantics<parallel>], iteration_bounds = array<i64: 2>, scalar_prefetch = 0 : i64, scratch_operands = 0 : i64, tpu.core_type = #tpu.core_type<tc>, window_params = [{transform_indices = @transform_0, window_bounds = array<i64: 1, 14, 84>}, {pipeline_mode = #tpu.pipeline_mode<synchronous>, transform_indices = @transform_1, window_bounds = array<i64: 5, 84, 160>}, {pipeline_mode = #tpu.pipeline_mode<synchronous>, transform_indices = @transform_2, window_bounds = array<i64: 1, 80>}, {transform_indices = @transform_3, window_bounds = array<i64: 1, 5, 80>}]} {
    %c0 = arith.constant 0 : index
    %c0_0 = arith.constant 0 : index
    %c0_1 = arith.constant 0 : index
    %0 = vector.load %arg1[%c0, %c0_0, %c0_1] : memref<1x14x84xbf16, #tpu.memory_space<vmem>>, vector<1x14x84xbf16>
    %1 = vector.shape_cast %0 : vector<1x14x84xbf16> to vector<14x84xbf16>
    %c0_2 = arith.constant 0 : index
    %c0_3 = arith.constant 0 : index
    %2 = vector.load %arg3[%c0_2, %c0_3] : memref<1x80xf32, #tpu.memory_space<vmem>>, vector<1x80xf32>
    %3 = vector.extract_strided_slice %1 {offsets = [0, 0], sizes = [5, 84], strides = [1, 1]} : vector<14x84xbf16> to vector<5x84xbf16>
    %c0_4 = arith.constant 0 : index
    %c0_5 = arith.constant 0 : index
    %c0_6 = arith.constant 0 : index
    %4 = vector.load %arg2[%c0_4, %c0_5, %c0_6] : memref<5x84x160xbf16, #tpu.memory_space<vmem>>, vector<1x84x160xbf16>
    %5 = vector.shape_cast %4 : vector<1x84x160xbf16> to vector<84x160xbf16>
    %cst = arith.constant dense<0.000000e+00> : vector<5x160xf32>
    %6 = tpu.matmul %3, %5, %cst {dimension_numbers = #tpu.dot_dimension_numbers<[1], [0], [0], [1], [0, 0, 1, 1], [], []>} : vector<5x84xbf16>, vector<84x160xbf16>, vector<5x160xf32> -> vector<5x160xf32>
    %7 = vector.extract_strided_slice %1 {offsets = [7, 0], sizes = [5, 84], strides = [1, 1]} : vector<14x84xbf16> to vector<5x84xbf16>
    %c1 = arith.constant 1 : index
    %c0_7 = arith.constant 0 : index
    %c0_8 = arith.constant 0 : index
    %8 = vector.load %arg2[%c1, %c0_7, %c0_8] : memref<5x84x160xbf16, #tpu.memory_space<vmem>>, vector<1x84x160xbf16>
    %9 = vector.shape_cast %8 : vector<1x84x160xbf16> to vector<84x160xbf16>
    %cst_9 = arith.constant dense<0.000000e+00> : vector<5x160xf32>
    %10 = tpu.matmul %7, %9, %cst_9 {dimension_numbers = #tpu.dot_dimension_numbers<[1], [0], [0], [1], [0, 0, 1, 1], [], []>} : vector<5x84xbf16>, vector<84x160xbf16>, vector<5x160xf32> -> vector<5x160xf32>
    %11 = arith.addf %6, %10 : vector<5x160xf32>
    %12 = vector.extract_strided_slice %1 {offsets = [1, 0], sizes = [5, 84], strides = [1, 1]} : vector<14x84xbf16> to vector<5x84xbf16>
    %c2 = arith.constant 2 : index
    %c0_10 = arith.constant 0 : index
    %c0_11 = arith.constant 0 : index
    %13 = vector.load %arg2[%c2, %c0_10, %c0_11] : memref<5x84x160xbf16, #tpu.memory_space<vmem>>, vector<1x84x160xbf16>
    %14 = vector.shape_cast %13 : vector<1x84x160xbf16> to vector<84x160xbf16>
    %cst_12 = arith.constant dense<0.000000e+00> : vector<5x160xf32>
    %15 = tpu.matmul %12, %14, %cst_12 {dimension_numbers = #tpu.dot_dimension_numbers<[1], [0], [0], [1], [0, 0, 1, 1], [], []>} : vector<5x84xbf16>, vector<84x160xbf16>, vector<5x160xf32> -> vector<5x160xf32>
    %16 = arith.addf %11, %15 : vector<5x160xf32>
    %17 = vector.extract_strided_slice %1 {offsets = [8, 0], sizes = [5, 84], strides = [1, 1]} : vector<14x84xbf16> to vector<5x84xbf16>
    %c3 = arith.constant 3 : index
    %c0_13 = arith.constant 0 : index
    %c0_14 = arith.constant 0 : index
    %18 = vector.load %arg2[%c3, %c0_13, %c0_14] : memref<5x84x160xbf16, #tpu.memory_space<vmem>>, vector<1x84x160xbf16>
    %19 = vector.shape_cast %18 : vector<1x84x160xbf16> to vector<84x160xbf16>
    %cst_15 = arith.constant dense<0.000000e+00> : vector<5x160xf32>
    %20 = tpu.matmul %17, %19, %cst_15 {dimension_numbers = #tpu.dot_dimension_numbers<[1], [0], [0], [1], [0, 0, 1, 1], [], []>} : vector<5x84xbf16>, vector<84x160xbf16>, vector<5x160xf32> -> vector<5x160xf32>
    %21 = arith.addf %16, %20 : vector<5x160xf32>
    %22 = vector.extract_strided_slice %1 {offsets = [2, 0], sizes = [5, 84], strides = [1, 1]} : vector<14x84xbf16> to vector<5x84xbf16>
    %c4 = arith.constant 4 : index
    %c0_16 = arith.constant 0 : index
    %c0_17 = arith.constant 0 : index
    %23 = vector.load %arg2[%c4, %c0_16, %c0_17] : memref<5x84x160xbf16, #tpu.memory_space<vmem>>, vector<1x84x160xbf16>
    %24 = vector.shape_cast %23 : vector<1x84x160xbf16> to vector<84x160xbf16>
    %cst_18 = arith.constant dense<0.000000e+00> : vector<5x160xf32>
    %25 = tpu.matmul %22, %24, %cst_18 {dimension_numbers = #tpu.dot_dimension_numbers<[1], [0], [0], [1], [0, 0, 1, 1], [], []>} : vector<5x84xbf16>, vector<84x160xbf16>, vector<5x160xf32> -> vector<5x160xf32>
    %26 = arith.addf %21, %25 : vector<5x160xf32>
    %27 = vector.extract_strided_slice %1 {offsets = [7, 0], sizes = [5, 84], strides = [1, 1]} : vector<14x84xbf16> to vector<5x84xbf16>
    %c0_19 = arith.constant 0 : index
    %c0_20 = arith.constant 0 : index
    %c0_21 = arith.constant 0 : index
    %28 = vector.load %arg2[%c0_19, %c0_20, %c0_21] : memref<5x84x160xbf16, #tpu.memory_space<vmem>>, vector<1x84x160xbf16>
    %29 = vector.shape_cast %28 : vector<1x84x160xbf16> to vector<84x160xbf16>
    %cst_22 = arith.constant dense<0.000000e+00> : vector<5x160xf32>
    %30 = tpu.matmul %27, %29, %cst_22 {dimension_numbers = #tpu.dot_dimension_numbers<[1], [0], [0], [1], [0, 0, 1, 1], [], []>} : vector<5x84xbf16>, vector<84x160xbf16>, vector<5x160xf32> -> vector<5x160xf32>
    %31 = vector.extract_strided_slice %1 {offsets = [1, 0], sizes = [5, 84], strides = [1, 1]} : vector<14x84xbf16> to vector<5x84xbf16>
    %c1_23 = arith.constant 1 : index
    %c0_24 = arith.constant 0 : index
    %c0_25 = arith.constant 0 : index
    %32 = vector.load %arg2[%c1_23, %c0_24, %c0_25] : memref<5x84x160xbf16, #tpu.memory_space<vmem>>, vector<1x84x160xbf16>
    %33 = vector.shape_cast %32 : vector<1x84x160xbf16> to vector<84x160xbf16>
    %cst_26 = arith.constant dense<0.000000e+00> : vector<5x160xf32>
    %34 = tpu.matmul %31, %33, %cst_26 {dimension_numbers = #tpu.dot_dimension_numbers<[1], [0], [0], [1], [0, 0, 1, 1], [], []>} : vector<5x84xbf16>, vector<84x160xbf16>, vector<5x160xf32> -> vector<5x160xf32>
    %35 = arith.addf %30, %34 : vector<5x160xf32>
    %36 = vector.extract_strided_slice %1 {offsets = [8, 0], sizes = [5, 84], strides = [1, 1]} : vector<14x84xbf16> to vector<5x84xbf16>
    %c2_27 = arith.constant 2 : index
    %c0_28 = arith.constant 0 : index
    %c0_29 = arith.constant 0 : index
    %37 = vector.load %arg2[%c2_27, %c0_28, %c0_29] : memref<5x84x160xbf16, #tpu.memory_space<vmem>>, vector<1x84x160xbf16>
    %38 = vector.shape_cast %37 : vector<1x84x160xbf16> to vector<84x160xbf16>
    %cst_30 = arith.constant dense<0.000000e+00> : vector<5x160xf32>
    %39 = tpu.matmul %36, %38, %cst_30 {dimension_numbers = #tpu.dot_dimension_numbers<[1], [0], [0], [1], [0, 0, 1, 1], [], []>} : vector<5x84xbf16>, vector<84x160xbf16>, vector<5x160xf32> -> vector<5x160xf32>
    %40 = arith.addf %35, %39 : vector<5x160xf32>
    %41 = vector.extract_strided_slice %1 {offsets = [2, 0], sizes = [5, 84], strides = [1, 1]} : vector<14x84xbf16> to vector<5x84xbf16>
    %c3_31 = arith.constant 3 : index
    %c0_32 = arith.constant 0 : index
    %c0_33 = arith.constant 0 : index
    %42 = vector.load %arg2[%c3_31, %c0_32, %c0_33] : memref<5x84x160xbf16, #tpu.memory_space<vmem>>, vector<1x84x160xbf16>
    %43 = vector.shape_cast %42 : vector<1x84x160xbf16> to vector<84x160xbf16>
    %cst_34 = arith.constant dense<0.000000e+00> : vector<5x160xf32>
    %44 = tpu.matmul %41, %43, %cst_34 {dimension_numbers = #tpu.dot_dimension_numbers<[1], [0], [0], [1], [0, 0, 1, 1], [], []>} : vector<5x84xbf16>, vector<84x160xbf16>, vector<5x160xf32> -> vector<5x160xf32>
    %45 = arith.addf %40, %44 : vector<5x160xf32>
    %46 = vector.extract_strided_slice %1 {offsets = [9, 0], sizes = [5, 84], strides = [1, 1]} : vector<14x84xbf16> to vector<5x84xbf16>
    %c4_35 = arith.constant 4 : index
    %c0_36 = arith.constant 0 : index
    %c0_37 = arith.constant 0 : index
    %47 = vector.load %arg2[%c4_35, %c0_36, %c0_37] : memref<5x84x160xbf16, #tpu.memory_space<vmem>>, vector<1x84x160xbf16>
    %48 = vector.shape_cast %47 : vector<1x84x160xbf16> to vector<84x160xbf16>
    %cst_38 = arith.constant dense<0.000000e+00> : vector<5x160xf32>
    %49 = tpu.matmul %46, %48, %cst_38 {dimension_numbers = #tpu.dot_dimension_numbers<[1], [0], [0], [1], [0, 0, 1, 1], [], []>} : vector<5x84xbf16>, vector<84x160xbf16>, vector<5x160xf32> -> vector<5x160xf32>
    %50 = arith.addf %45, %49 : vector<5x160xf32>
    %51 = arith.maximumf %26, %50 : vector<5x160xf32>
    %52 = vector.extract_strided_slice %51 {offsets = [0, 0], sizes = [5, 80], strides = [1, 1]} : vector<5x160xf32> to vector<5x80xf32>
    %53 = vector.extract_strided_slice %51 {offsets = [0, 80], sizes = [5, 80], strides = [1, 1]} : vector<5x160xf32> to vector<5x80xf32>
    %54 = arith.maximumf %52, %53 : vector<5x80xf32>
    %55 = vector.broadcast %2 : vector<1x80xf32> to vector<5x80xf32>
    %56 = arith.addf %54, %55 : vector<5x80xf32>
    %cst_39 = arith.constant 0.000000e+00 : f32
    %57 = vector.broadcast %cst_39 : f32 to vector<5x80xf32>
    %58 = arith.maximumf %56, %57 : vector<5x80xf32>
    %59 = arith.truncf %58 : vector<5x80xf32> to vector<5x80xbf16>
    %c0_40 = arith.constant 0 : index
    %c0_41 = arith.constant 0 : index
    %c0_42 = arith.constant 0 : index
    %60 = vector.load %arg4[%c0_40, %c0_41, %c0_42] : memref<1x5x80xbf16, #tpu.memory_space<vmem>>, vector<1x5x80xbf16>
    %61 = vector.shape_cast %60 : vector<1x5x80xbf16> to vector<5x80xbf16>
    %62 = vector.shape_cast %59 : vector<5x80xbf16> to vector<1x5x80xbf16>
    tpu.vector_store %arg4[%c0_40, %c0_41, %c0_42], %62 {strides = array<i32>} : memref<1x5x80xbf16, #tpu.memory_space<vmem>>, vector<1x5x80xbf16>,
    return
  }
  func.func @transform_0(%arg0: i32) -> (i32, i32, i32) {
    %c0_i32 = arith.constant 0 : i32
    %c0_i32_0 = arith.constant 0 : i32
    %c0_i32_1 = arith.constant 0 : i32
    return %arg0, %c0_i32, %c0_i32_0 : i32, i32, i32
  }
  func.func @transform_1(%arg0: i32) -> (i32, i32, i32) {
    %c0_i32 = arith.constant 0 : i32
    %c0_i32_0 = arith.constant 0 : i32
    %c0_i32_1 = arith.constant 0 : i32
    %c0_i32_2 = arith.constant 0 : i32
    return %c0_i32, %c0_i32_0, %c0_i32_1 : i32, i32, i32
  }
  func.func @transform_2(%arg0: i32) -> (i32, i32) {
    %c0_i32 = arith.constant 0 : i32
    %c0_i32_0 = arith.constant 0 : i32
    %c0_i32_1 = arith.constant 0 : i32
    return %c0_i32, %c0_i32_0 : i32, i32
  }
  func.func @transform_3(%arg0: i32) -> (i32, i32, i32) {
    %c0_i32 = arith.constant 0 : i32
    %c0_i32_0 = arith.constant 0 : i32
    %c0_i32_1 = arith.constant 0 : i32
    return %arg0, %c0_i32, %c0_i32_0 : i32, i32, i32
  }
}

module attributes {stable_mosaic.version = 11 : i64} {
  func.func @_mlp_kernel(%arg0: i32, %arg1: memref<2x400xbf16, #tpu.memory_space<vmem>>, %arg2: memref<400x120xbf16, #tpu.memory_space<vmem>>, %arg3: memref<1x120xf32, #tpu.memory_space<vmem>>, %arg4: memref<120x84xbf16, #tpu.memory_space<vmem>>, %arg5: memref<1x84xf32, #tpu.memory_space<vmem>>, %arg6: memref<84x10xbf16, #tpu.memory_space<vmem>>, %arg7: memref<1x10xf32, #tpu.memory_space<vmem>>, %arg8: memref<2x10xf32, #tpu.memory_space<vmem>>) attributes {dimension_semantics = [#tpu.dimension_semantics<parallel>], iteration_bounds = array<i64: 1>, scalar_prefetch = 0 : i64, scratch_operands = 0 : i64, tpu.core_type = #tpu.core_type<tc>, window_params = [{transform_indices = @transform_0, window_bounds = array<i64: 2, 400>}, {pipeline_mode = #tpu.pipeline_mode<synchronous>, transform_indices = @transform_1, window_bounds = array<i64: 400, 120>}, {pipeline_mode = #tpu.pipeline_mode<synchronous>, transform_indices = @transform_2, window_bounds = array<i64: 1, 120>}, {pipeline_mode = #tpu.pipeline_mode<synchronous>, transform_indices = @transform_3, window_bounds = array<i64: 120, 84>}, {pipeline_mode = #tpu.pipeline_mode<synchronous>, transform_indices = @transform_4, window_bounds = array<i64: 1, 84>}, {pipeline_mode = #tpu.pipeline_mode<synchronous>, transform_indices = @transform_5, window_bounds = array<i64: 84, 10>}, {pipeline_mode = #tpu.pipeline_mode<synchronous>, transform_indices = @transform_6, window_bounds = array<i64: 1, 10>}, {transform_indices = @transform_7, window_bounds = array<i64: 2, 10>}]} {
    %c0 = arith.constant 0 : index
    %c0_0 = arith.constant 0 : index
    %0 = vector.load %arg1[%c0, %c0_0] : memref<2x400xbf16, #tpu.memory_space<vmem>>, vector<2x400xbf16>
    %c0_1 = arith.constant 0 : index
    %c0_2 = arith.constant 0 : index
    %1 = vector.load %arg2[%c0_1, %c0_2] : memref<400x120xbf16, #tpu.memory_space<vmem>>, vector<400x120xbf16>
    %cst = arith.constant dense<0.000000e+00> : vector<2x120xf32>
    %2 = tpu.matmul %0, %1, %cst {dimension_numbers = #tpu.dot_dimension_numbers<[1], [0], [0], [1], [0, 0, 1, 1], [], []>} : vector<2x400xbf16>, vector<400x120xbf16>, vector<2x120xf32> -> vector<2x120xf32>
    %c0_3 = arith.constant 0 : index
    %c0_4 = arith.constant 0 : index
    %3 = vector.load %arg3[%c0_3, %c0_4] : memref<1x120xf32, #tpu.memory_space<vmem>>, vector<1x120xf32>
    %4 = vector.broadcast %3 : vector<1x120xf32> to vector<2x120xf32>
    %5 = arith.addf %2, %4 : vector<2x120xf32>
    %cst_5 = arith.constant 0.000000e+00 : f32
    %6 = vector.broadcast %cst_5 : f32 to vector<2x120xf32>
    %7 = arith.maximumf %5, %6 : vector<2x120xf32>
    %8 = arith.truncf %7 : vector<2x120xf32> to vector<2x120xbf16>
    %c0_6 = arith.constant 0 : index
    %c0_7 = arith.constant 0 : index
    %9 = vector.load %arg4[%c0_6, %c0_7] : memref<120x84xbf16, #tpu.memory_space<vmem>>, vector<120x84xbf16>
    %cst_8 = arith.constant dense<0.000000e+00> : vector<2x84xf32>
    %10 = tpu.matmul %8, %9, %cst_8 {dimension_numbers = #tpu.dot_dimension_numbers<[1], [0], [0], [1], [0, 0, 1, 1], [], []>} : vector<2x120xbf16>, vector<120x84xbf16>, vector<2x84xf32> -> vector<2x84xf32>
    %c0_9 = arith.constant 0 : index
    %c0_10 = arith.constant 0 : index
    %11 = vector.load %arg5[%c0_9, %c0_10] : memref<1x84xf32, #tpu.memory_space<vmem>>, vector<1x84xf32>
    %12 = vector.broadcast %11 : vector<1x84xf32> to vector<2x84xf32>
    %13 = arith.addf %10, %12 : vector<2x84xf32>
    %cst_11 = arith.constant 0.000000e+00 : f32
    %14 = vector.broadcast %cst_11 : f32 to vector<2x84xf32>
    %15 = arith.maximumf %13, %14 : vector<2x84xf32>
    %16 = arith.truncf %15 : vector<2x84xf32> to vector<2x84xbf16>
    %c0_12 = arith.constant 0 : index
    %c0_13 = arith.constant 0 : index
    %17 = vector.load %arg6[%c0_12, %c0_13] : memref<84x10xbf16, #tpu.memory_space<vmem>>, vector<84x10xbf16>
    %cst_14 = arith.constant dense<0.000000e+00> : vector<2x10xf32>
    %18 = tpu.matmul %16, %17, %cst_14 {dimension_numbers = #tpu.dot_dimension_numbers<[1], [0], [0], [1], [0, 0, 1, 1], [], []>} : vector<2x84xbf16>, vector<84x10xbf16>, vector<2x10xf32> -> vector<2x10xf32>
    %c0_15 = arith.constant 0 : index
    %c0_16 = arith.constant 0 : index
    %19 = vector.load %arg7[%c0_15, %c0_16] : memref<1x10xf32, #tpu.memory_space<vmem>>, vector<1x10xf32>
    %20 = vector.broadcast %19 : vector<1x10xf32> to vector<2x10xf32>
    %21 = arith.addf %18, %20 : vector<2x10xf32>
    %c0_17 = arith.constant 0 : index
    %c0_18 = arith.constant 0 : index
    %22 = vector.load %arg8[%c0_17, %c0_18] : memref<2x10xf32, #tpu.memory_space<vmem>>, vector<2x10xf32>
    tpu.vector_store %arg8[%c0_17, %c0_18], %21 {strides = array<i32>} : memref<2x10xf32, #tpu.memory_space<vmem>>, vector<2x10xf32>,
    return
  }
  func.func @transform_0(%arg0: i32) -> (i32, i32) {
    %c0_i32 = arith.constant 0 : i32
    %c0_i32_0 = arith.constant 0 : i32
    return %arg0, %c0_i32 : i32, i32
  }
  func.func @transform_1(%arg0: i32) -> (i32, i32) {
    %c0_i32 = arith.constant 0 : i32
    %c0_i32_0 = arith.constant 0 : i32
    %c0_i32_1 = arith.constant 0 : i32
    return %c0_i32, %c0_i32_0 : i32, i32
  }
  func.func @transform_2(%arg0: i32) -> (i32, i32) {
    %c0_i32 = arith.constant 0 : i32
    %c0_i32_0 = arith.constant 0 : i32
    %c0_i32_1 = arith.constant 0 : i32
    return %c0_i32, %c0_i32_0 : i32, i32
  }
  func.func @transform_3(%arg0: i32) -> (i32, i32) {
    %c0_i32 = arith.constant 0 : i32
    %c0_i32_0 = arith.constant 0 : i32
    %c0_i32_1 = arith.constant 0 : i32
    return %c0_i32, %c0_i32_0 : i32, i32
  }
  func.func @transform_4(%arg0: i32) -> (i32, i32) {
    %c0_i32 = arith.constant 0 : i32
    %c0_i32_0 = arith.constant 0 : i32
    %c0_i32_1 = arith.constant 0 : i32
    return %c0_i32, %c0_i32_0 : i32, i32
  }
  func.func @transform_5(%arg0: i32) -> (i32, i32) {
    %c0_i32 = arith.constant 0 : i32
    %c0_i32_0 = arith.constant 0 : i32
    %c0_i32_1 = arith.constant 0 : i32
    return %c0_i32, %c0_i32_0 : i32, i32
  }
  func.func @transform_6(%arg0: i32) -> (i32, i32) {
    %c0_i32 = arith.constant 0 : i32
    %c0_i32_0 = arith.constant 0 : i32
    %c0_i32_1 = arith.constant 0 : i32
    return %c0_i32, %c0_i32_0 : i32, i32
  }
  func.func @transform_7(%arg0: i32) -> (i32, i32) {
    %c0_i32 = arith.constant 0 : i32
    %c0_i32_0 = arith.constant 0 : i32
    return %arg0, %c0_i32 : i32, i32
  }
}

</mosaic_0001>

<llo_original>
// kernel: net_forward.4
$region0: #{net_forward.4}
  #allocation0 [shape = 'u32[]', space=smem, size = 0x4, offset = 0x4, fixed_abs, tag = 'smem constant byte address 0x4 - core index']
  #allocation1 [shape = 'u32[144,128]{1,0:T(1,128)}', space=vmem, size = 0x12000, scoped, tag = 'internal scratch']
  %s0 = inlined_call_operand.vmem [shape: bf16[2,14,84], index: 0, kind: input, shape index: {}]
  %s1 = inlined_call_operand.vmem [shape: bf16[5,84,160], index: 1, kind: input, shape index: {}]
  %s2 = inlined_call_operand.vmem [shape: f32[1,80], index: 2, kind: input, shape index: {}]
  %s3 = inlined_call_operand.vmem [shape: bf16[2,5,80], index: 3, kind: output, shape index: {}]
  %s4 = sld [smem:[#allocation0]]
  $region45: #{net_forward.4} parent=0
    _
  %s6 = ssub.s32 1, %s4
  %s7 = scalar_select 0, %s6, %s4
  loop: start=0, step=1, limit=4
  $region2: #{net_forward.4} parent=0 // loop_pre_header
    _
  $region3: #{net_forward.4} parent=0 // loop_header
    %s9 = sphi 0, %s13
    %p10 = scmp.ge.s32.totalorder %s9, 4
    %s19 = sphi 0, %s21
    %s22 = sphi 0, %s19
    %s23 = sphi 0, %s22
    %s39 = sphi 0, %s23
    %s43 = sphi 0, %s43
    %s45 = sphi 0, %s43
    %s46 = sphi 0, %s45
    %s60 = sphi 0, %s46
    %s64 = sphi 0, %s64
    %s66 = sphi 0, %s64
    %s67 = sphi 0, %s66
    %s81 = sphi 0, %s67
    %s87 = sphi 0, %s89
    %s90 = sphi 0, %s87
    %s91 = sphi 0, %s90
    %s107 = sphi 0, %s91
  $region4: #{net_forward.4} parent=0 // loop_header_branch
    %12 = sbr.rel (%p10) target = $region8
  $region5: #{net_forward.4} parent=0 // loop_body
    %s14 = ssub.s32 %s9, 1
    %s15 = ssub.s32 %s9, 2
    %s16 = sadd.s32 %s9, 1
    %s17 = ssub.s32 %s9, %s16
    %p18 = scmp.eq.s32.totalorder %s17, 0
    %s20 = sadd.s32 %s19, 1
    %s21 = scalar_select %p18, %s19, %s20
    %p24 = pneg %p18
    %p25 = scmp.eq.s32.totalorder %s9, 1
    %p26 = por %p24, %p25
    %p27 = scmp.ne.s32.totalorder %s19, %s22
    %p28 = scmp.eq.s32.totalorder %s9, 0
    %p29 = por %p27, %p28
    %p30 = scmp.ne.s32.totalorder %s19, %s22
    %p31 = scmp.eq.s32.totalorder %s14, 1
    %p32 = por %p30, %p31
    %p33 = scmp.ne.s32.totalorder %s22, %s23
    %p34 = scmp.eq.s32.totalorder %s14, 0
    %p35 = por %p33, %p34
    %p36 = scmp.ne.s32.totalorder %s22, %s23
    %p37 = scmp.eq.s32.totalorder %s15, 1
    %p38 = por %p36, %p37
    %p40 = scmp.ne.s32.totalorder %s23, %s39
    %p41 = scmp.eq.s32.totalorder %s15, 0
    %p42 = por %p40, %p41
    %s44 = sadd.s32 %s43, 1
    %p47 = scmp.eq.s32.totalorder %s9, 1
    %p48 = scmp.ne.s32.totalorder %s43, %s45
    %p49 = scmp.eq.s32.totalorder %s9, 0
    %p50 = por %p48, %p49
    %p51 = scmp.ne.s32.totalorder %s43, %s45
    %p52 = scmp.eq.s32.totalorder %s14, 1
    %p53 = por %p51, %p52
    %p54 = scmp.ne.s32.totalorder %s45, %s46
    %p55 = scmp.eq.s32.totalorder %s14, 0
    %p56 = por %p54, %p55
    %p57 = scmp.ne.s32.totalorder %s45, %s46
    %p58 = scmp.eq.s32.totalorder %s15, 1
    %p59 = por %p57, %p58
    %p61 = scmp.ne.s32.totalorder %s46, %s60
    %p62 = scmp.eq.s32.totalorder %s15, 0
    %p63 = por %p61, %p62
    %s65 = sadd.s32 %s64, 1
    %p68 = scmp.eq.s32.totalorder %s9, 1
    %p69 = scmp.ne.s32.totalorder %s64, %s66
    %p70 = scmp.eq.s32.totalorder %s9, 0
    %p71 = por %p69, %p70
    %p72 = scmp.ne.s32.totalorder %s64, %s66
    %p73 = scmp.eq.s32.totalorder %s14, 1
    %p74 = por %p72, %p73
    %p75 = scmp.ne.s32.totalorder %s66, %s67
    %p76 = scmp.eq.s32.totalorder %s14, 0
    %p77 = por %p75, %p76
    %p78 = scmp.ne.s32.totalorder %s66, %s67
    %p79 = scmp.eq.s32.totalorder %s15, 1
    %p80 = por %p78, %p79
    %p82 = scmp.ne.s32.totalorder %s67, %s81
    %p83 = scmp.eq.s32.totalorder %s15, 0
    %p84 = por %p82, %p83
    %s85 = ssub.s32 %s9, %s16
    %p86 = scmp.eq.s32.totalorder %s85, 0
    %s88 = sadd.s32 %s87, 1
    %s89 = scalar_select %p86, %s87, %s88
    %p92 = pneg %p86
    %p93 = scmp.eq.s32.totalorder %s9, 1
    %p94 = por %p92, %p93
    %p95 = scmp.ne.s32.totalorder %s87, %s90
    %p96 = scmp.eq.s32.totalorder %s9, 0
    %p97 = por %p95, %p96
    %p98 = scmp.ne.s32.totalorder %s87, %s90
    %p99 = scmp.eq.s32.totalorder %s14, 1
    %p100 = por %p98, %p99
    %p101 = scmp.ne.s32.totalorder %s90, %s91
    %p102 = scmp.eq.s32.totalorder %s14, 0
    %p103 = por %p101, %p102
    %p104 = scmp.ne.s32.totalorder %s90, %s91
    %p105 = scmp.eq.s32.totalorder %s15, 1
    %p106 = por %p104, %p105
    %p108 = scmp.ne.s32.totalorder %s91, %s107
    %p109 = scmp.eq.s32.totalorder %s15, 0
    %p110 = por %p108, %p109
    %p111 = scmp.le.s32.totalorder 1, %s9
    %p112 = scmp.lt.s32.totalorder %s9, 3
    %p113 = pnand %p111, %p112
    %p114 = pneg %p113
    // Predicated region
    $region9: #{net_forward.4} parent=5 // pred_check
      _
    $region10: #{net_forward.4} parent=5 // pred_check_branch
      %116 = sbr.rel (%p113) target = $region12
    $region11: #{net_forward.4} parent=5 // pred_region
      %s117 = ssub.s32 %s9, 1
      // Predicated region
      $region13: #{net_forward.4} parent=11 // pred_check
        %p118 = pneg %p56
      $region14: #{net_forward.4} parent=11 // pred_check_branch
        %120 = sbr.rel (%p118) target = $region16
      $region15: #{net_forward.4} parent=11 // pred_region
        _
      $region16: #{net_forward.4} parent=11 // pred_fallthru
        _
      // Predicated region
      $region17: #{net_forward.4} parent=11 // pred_check
        %p121 = pneg %p77
      $region18: #{net_forward.4} parent=11 // pred_check_branch
        %123 = sbr.rel (%p121) target = $region20
      $region19: #{net_forward.4} parent=11 // pred_region
        _
      $region20: #{net_forward.4} parent=11 // pred_fallthru
        _
    $region12: #{net_forward.4} parent=5 // pred_fallthru
      _
    %p124 = scmp.lt.s32.totalorder %s9, 2
    // Predicated region
    $region21: #{net_forward.4} parent=5 // pred_check
      %p125 = pneg %p124
    $region22: #{net_forward.4} parent=5 // pred_check_branch
      %127 = sbr.rel (%p125) target = $region24
    $region23: #{net_forward.4} parent=5 // pred_region
      // Predicated region
      $region25: #{net_forward.4} parent=23 // pred_check
        %p128 = pneg %p29
      $region26: #{net_forward.4} parent=23 // pred_check_branch
        %130 = sbr.rel (%p128) target = $region28
      $region27: #{net_forward.4} parent=23 // pred_region
        %p131 = scmp.lt.s32.totalorder %s9, 1
        %s132 = scalar_select %p131, %s9, 1
        %s133 = smul.addr %s132, 2
        %s134 = smul.addr %s133, 4
        %s135 = scalar_lea.vmem %s0, %s134
      $region28: #{net_forward.4} parent=23 // pred_fallthru
        _
    $region24: #{net_forward.4} parent=5 // pred_fallthru
      _
    %p136 = scmp.le.s32.totalorder 1, %s9
    %p137 = scmp.lt.s32.totalorder %s9, 3
    %p138 = pnand %p136, %p137
    %p139 = pneg %p138
    // Predicated region
    $region29: #{net_forward.4} parent=5 // pred_check
      _
    $region30: #{net_forward.4} parent=5 // pred_check_branch
      %141 = sbr.rel (%p138) target = $region32
    $region31: #{net_forward.4} parent=5 // pred_region
      %s142 = ssub.s32 %s9, 1
      %p143 = scmp.lt.s32.totalorder %s14, 1
      %s144 = scalar_select %p143, %s14, 1
      %s145 = smul.addr %s144, 2
      %s146 = smul.addr %s145, 4
      %s147 = scalar_lea.vmem %s0, %s146
      %p148 = pneg %p35
      %p149 = pneg %p32
      %p150 = pneg %p56
      %p151 = pneg %p53
      %p152 = pneg %p77
      %p153 = pneg %p74
      %p154 = pneg %p103
      %p155 = pneg %p100
      %p156 = scmp.lt.s32.totalorder %s14, 1
      %s157 = scalar_select %p156, %s14, 1
      %s158 = smul.addr %s157, 4
      %s159 = scalar_lea.vmem %s3, %s158
      %p160 = scmp.lt.s32.totalorder %s14, 1
      %s161 = scalar_select %p160, %s14, 1
      %s162 = smul.addr %s161, 2
      %s163 = smul.addr %s162, 4
      %s164 = scalar_lea.vmem %s0, %s163
      %p165 = scmp.lt.s32.totalorder %s14, 1
      %s166 = scalar_select %p165, %s14, 1
      %s167 = smul.addr %s166, 4
      %s168 = scalar_lea.vmem %s3, %s167
      %v170 = vld [vmem:[%s164] sm:$0xf]
      %v171 = vld [vmem:[%s164 + $0x4] sm:$0x7]
      %v172 = vld [vmem:[%s2] sm:$0x1]
      %v173 = vld [vmem:[%s1] sm:$0xff]
      %v174 = vld [vmem:[%s1 + $0x8] sm:$0xff]
      %v175 = vld [vmem:[%s1 + $0x10] sm:$0xff]
      %v176 = vld [vmem:[%s1 + $0x18] sm:$0xff]
      %v177 = vld [vmem:[%s1 + $0x20] sm:$0xff]
      %v178 = vld [vmem:[%s1 + $0x28] sm:$0xff]
      %v179 = vld [vmem:[%s1 + $0x30] sm:$0xff]
      %v180 = vld [vmem:[%s1 + $0x38] sm:$0xff]
      %v181 = vld [vmem:[%s1 + $0x40] sm:$0xff]
      %v182 = vld [vmem:[%s1 + $0x48] sm:$0xff]
      %v183 = vld [vmem:[%s1 + $0x50] sm:$0x33]
      %s184 = scalar_lea.vmem %s1, 88
      %v185 = vld [vmem:[%s184] sm:$0xff]
      %v186 = vld [vmem:[%s184 + $0x8] sm:$0xff]
      %v187 = vld [vmem:[%s184 + $0x10] sm:$0xff]
      %v188 = vld [vmem:[%s184 + $0x18] sm:$0xff]
      %v189 = vld [vmem:[%s184 + $0x20] sm:$0xff]
      %v190 = vld [vmem:[%s184 + $0x28] sm:$0xff]
      %v191 = vld [vmem:[%s184 + $0x30] sm:$0xff]
      %v192 = vld [vmem:[%s184 + $0x38] sm:$0xff]
      %v193 = vld [vmem:[%s184 + $0x40] sm:$0xff]
      %v194 = vld [vmem:[%s184 + $0x48] sm:$0xff]
      %v195 = vld [vmem:[%s184 + $0x50] sm:$0x33]
      %v198 = vunpack.c.l.b16 %v170
      %v199 = vunpack.c.l.b16 %v171
      %v200 = vpack.c.b16 %v199, %v198
      %v202 = vshrl.u32 %v200, 16
      %v204 = vrot.slane %v202, 3
      %v205 = vshll.u32 %v200, 16
      %v207 = vrot.slane %v205, 4
      %v208 = vor.u32 %v204, %v207
      %v220 = vunpack.c.l.b16 %v185
      %v221 = vunpack.c.h.b16 %v185
      %v222 = vunpack.c.l.b16 %v186
      %v223 = vunpack.c.h.b16 %v186
      %v224 = vunpack.c.l.b16 %v187
      %v225 = vunpack.c.h.b16 %v187
      %v226 = vunpack.c.l.b16 %v188
      %v227 = vunpack.c.h.b16 %v188
      %v228 = vunpack.c.l.b16 %v189
      %v229 = vunpack.c.h.b16 %v189
      %v230 = vunpack.c.l.b16 %v190
      %v231 = vunpack.c.h.b16 %v190
      %v232 = vunpack.c.l.b16 %v191
      %v233 = vunpack.c.h.b16 %v191
      %v234 = vunpack.c.l.b16 %v192
      %v235 = vunpack.c.h.b16 %v192
      %v236 = vunpack.c.l.b16 %v193
      %v237 = vunpack.c.h.b16 %v193
      %v238 = vunpack.c.l.b16 %v194
      %v239 = vunpack.c.h.b16 %v194
      %v240 = vunpack.c.l.b16 %v195
      %v241 = vunpack.c.h.b16 %v195
      %v242 = vpack.c.b16 %v222, %v220
      %v243 = vpack.c.b16 %v223, %v221
      %v244 = vpack.c.b16 %v226, %v224
      %v245 = vpack.c.b16 %v227, %v225
      %v246 = vpack.c.b16 %v230, %v228
      %v247 = vpack.c.b16 %v231, %v229
      %v248 = vpack.c.b16 %v234, %v232
      %v249 = vpack.c.b16 %v235, %v233
      %v250 = vpack.c.b16 %v238, %v236
      %v251 = vpack.c.b16 %v239, %v237
      %v252 = vpack.c.b16 %v240, %v240
      %v253 = vpack.c.b16 %v241, %v241
      %vm264 = vcmask 687104
      %v266 = vsel %vm264, %v208, 0
      %vm268 = vcmask 1041408
      %v270 = vsel %vm268, %v252, 0
      %v273 = vsel %vm268, %v253, 0
      %275 = vmatprep.subr.bf16.mxu0 %v243
      %276 = vmatpush1.bf16.msra.mxu0 %v242
      %277 = vmatprep.subr.bf16.mxu0 %v245
      %278 = vmatpush1.bf16.msra.mxu0 %v244
      %279 = vmatprep.subr.bf16.mxu0 %v247
      %280 = vmatpush1.bf16.msra.mxu0 %v246
      %281 = vmatprep.subr.bf16.mxu0 %v249
      %282 = vmatpush1.bf16.msra.mxu0 %v248
      %283 = vmatprep.subr.bf16.mxu0 %v251
      %284 = vmatpush1.bf16.msra.mxu0 %v250
      %285 = vmatprep.subr.bf16.mxu0 %v273
      %286 = vmatpush1.bf16.msra.mxu0 %v270
      %287 = vmatprep.subr.bf16.mxu0 0
      %288 = vmatpush1.bf16.msra.mxu0 0
      %289 = vmatprep.subr.bf16.mxu0 0
      %290 = vmatpush1.bf16.msra.mxu0 0
      %291 = vmatprep.subr.bf16.mxu0 0
      %292 = vmatpush1.bf16.msra.mxu0 0
      %293 = vmatprep.subr.bf16.mxu0 0
      %294 = vmatpush1.bf16.msra.mxu0 0
      %295 = vmatprep.subr.bf16.mxu0 0
      %296 = vmatpush1.bf16.msra.mxu0 0
      %297 = vmatprep.subr.bf16.mxu0 0
      %298 = vmatpush1.bf16.msra.mxu0 0
      %299 = vmatprep.subr.bf16.mxu0 0
      %300 = vmatpush1.bf16.msra.mxu0 0
      %301 = vmatprep.subr.bf16.mxu0 0
      %302 = vmatpush1.bf16.msra.mxu0 0
      %303 = vmatprep.subr.bf16.mxu0 0
      %304 = vmatpush1.bf16.msra.mxu0 0
      %305 = vmatprep.subr.bf16.mxu0 0
      %306 = vmatpush1.bf16.msra.mxu0 0
      %307 = vmatprep.mubr.bf16.mxu0 0
      %308 = vmatmul.mubr.bf16.gmra.mrb[0].mxu0 %v266
      %v309 = vpop.f32.mrb[0].mxu0
      %v310 = vadd.f32 0.0, %v309
      %v311 = vpop.f32.mrb[0].mxu0
      %v312 = vadd.f32 0.0, %v311
      %v313 = vpop.f32.mrb[0].mxu0
      %v314 = vpop.f32.mrb[0].mxu0
      %315 = vdwg.mxu0
      %v327 = vunpack.c.l.b16 %v173
      %v328 = vunpack.c.h.b16 %v173
      %v329 = vunpack.c.l.b16 %v174
      %v330 = vunpack.c.h.b16 %v174
      %v331 = vunpack.c.l.b16 %v175
      %v332 = vunpack.c.h.b16 %v175
      %v333 = vunpack.c.l.b16 %v176
      %v334 = vunpack.c.h.b16 %v176
      %v335 = vunpack.c.l.b16 %v177
      %v336 = vunpack.c.h.b16 %v177
      %v337 = vunpack.c.l.b16 %v178
      %v338 = vunpack.c.h.b16 %v178
      %v339 = vunpack.c.l.b16 %v179
      %v340 = vunpack.c.h.b16 %v179
      %v341 = vunpack.c.l.b16 %v180
      %v342 = vunpack.c.h.b16 %v180
      %v343 = vunpack.c.l.b16 %v181
      %v344 = vunpack.c.h.b16 %v181
      %v345 = vunpack.c.l.b16 %v182
      %v346 = vunpack.c.h.b16 %v182
      %v347 = vunpack.c.l.b16 %v183
      %v348 = vunpack.c.h.b16 %v183
      %v349 = vpack.c.b16 %v329, %v327
      %v350 = vpack.c.b16 %v330, %v328
      %v351 = vpack.c.b16 %v333, %v331
      %v352 = vpack.c.b16 %v334, %v332
      %v353 = vpack.c.b16 %v337, %v335
      %v354 = vpack.c.b16 %v338, %v336
      %v355 = vpack.c.b16 %v341, %v339
      %v356 = vpack.c.b16 %v342, %v340
      %v357 = vpack.c.b16 %v345, %v343
      %v358 = vpack.c.b16 %v346, %v344
      %v359 = vpack.c.b16 %v347, %v347
      %v360 = vpack.c.b16 %v348, %v348
      %v372 = vsel %vm264, %v170, 0
      %v375 = vsel %vm268, %v359, 0
      %v378 = vsel %vm268, %v360, 0
      %380 = vmatprep.subr.bf16.mxu0 %v350
      %381 = vmatpush1.bf16.msra.mxu0 %v349
      %382 = vmatprep.subr.bf16.mxu0 %v352
      %383 = vmatpush1.bf16.msra.mxu0 %v351
      %384 = vmatprep.subr.bf16.mxu0 %v354
      %385 = vmatpush1.bf16.msra.mxu0 %v353
      %386 = vmatprep.subr.bf16.mxu0 %v356
      %387 = vmatpush1.bf16.msra.mxu0 %v355
      %388 = vmatprep.subr.bf16.mxu0 %v358
      %389 = vmatpush1.bf16.msra.mxu0 %v357
      %390 = vmatprep.subr.bf16.mxu0 %v378
      %391 = vmatpush1.bf16.msra.mxu0 %v375
      %392 = vmatprep.subr.bf16.mxu0 0
      %393 = vmatpush1.bf16.msra.mxu0 0
      %394 = vmatprep.subr.bf16.mxu0 0
      %395 = vmatpush1.bf16.msra.mxu0 0
      %396 = vmatprep.subr.bf16.mxu0 0
      %397 = vmatpush1.bf16.msra.mxu0 0
      %398 = vmatprep.subr.bf16.mxu0 0
      %399 = vmatpush1.bf16.msra.mxu0 0
      %400 = vmatprep.subr.bf16.mxu0 0
      %401 = vmatpush1.bf16.msra.mxu0 0
      %402 = vmatprep.subr.bf16.mxu0 0
      %403 = vmatpush1.bf16.msra.mxu0 0
      %404 = vmatprep.subr.bf16.mxu0 0
      %405 = vmatpush1.bf16.msra.mxu0 0
      %406 = vmatprep.subr.bf16.mxu0 0
      %407 = vmatpush1.bf16.msra.mxu0 0
      %408 = vmatprep.subr.bf16.mxu0 0
      %409 = vmatpush1.bf16.msra.mxu0 0
      %410 = vmatprep.subr.bf16.mxu0 0
      %411 = vmatpush1.bf16.msra.mxu0 0
      %412 = vmatprep.mubr.bf16.mxu0 0
      %413 = vmatmul.mubr.bf16.gmra.mrb[0].mxu0 %v372
      %v414 = vpop.f32.mrb[0].mxu0
      %v415 = vadd.f32 %v310, %v414
      %v416 = vpop.f32.mrb[0].mxu0
      %v417 = vadd.f32 %v312, %v416
      %v418 = vpop.f32.mrb[0].mxu0
      %v419 = vpop.f32.mrb[0].mxu0
      %420 = vdwg.mxu0
      %s421 = scalar_lea.vmem %s1, 176
      %v422 = vld [vmem:[%s421] sm:$0xff]
      %v423 = vld [vmem:[%s421 + $0x8] sm:$0xff]
      %v424 = vld [vmem:[%s421 + $0x10] sm:$0xff]
      %v425 = vld [vmem:[%s421 + $0x18] sm:$0xff]
      %v426 = vld [vmem:[%s421 + $0x20] sm:$0xff]
      %v427 = vld [vmem:[%s421 + $0x28] sm:$0xff]
      %v428 = vld [vmem:[%s421 + $0x30] sm:$0xff]
      %v429 = vld [vmem:[%s421 + $0x38] sm:$0xff]
      %v430 = vld [vmem:[%s421 + $0x40] sm:$0xff]
      %v431 = vld [vmem:[%s421 + $0x48] sm:$0xff]
      %v432 = vld [vmem:[%s421 + $0x50] sm:$0x33]
      %v433 = vpack.c.b16 %v198, %v198
      %v435 = vshrl.u32 %v433, 16
      %v437 = vshll.u32 %v433, 16
      %v439 = vrot.slane %v437, 1
      %v440 = vor.u32 %v435, %v439
      %v452 = vunpack.c.l.b16 %v422
      %v453 = vunpack.c.h.b16 %v422
      %v454 = vunpack.c.l.b16 %v423
      %v455 = vunpack.c.h.b16 %v423
      %v456 = vunpack.c.l.b16 %v424
      %v457 = vunpack.c.h.b16 %v424
      %v458 = vunpack.c.l.b16 %v425
      %v459 = vunpack.c.h.b16 %v425
      %v460 = vunpack.c.l.b16 %v426
      %v461 = vunpack.c.h.b16 %v426
      %v462 = vunpack.c.l.b16 %v427
      %v463 = vunpack.c.h.b16 %v427
      %v464 = vunpack.c.l.b16 %v428
      %v465 = vunpack.c.h.b16 %v428
      %v466 = vunpack.c.l.b16 %v429
      %v467 = vunpack.c.h.b16 %v429
      %v468 = vunpack.c.l.b16 %v430
      %v469 = vunpack.c.h.b16 %v430
      %v470 = vunpack.c.l.b16 %v431
      %v471 = vunpack.c.h.b16 %v431
      %v472 = vunpack.c.l.b16 %v432
      %v473 = vunpack.c.h.b16 %v432
      %v474 = vpack.c.b16 %v454, %v452
      %v475 = vpack.c.b16 %v455, %v453
      %v476 = vpack.c.b16 %v458, %v456
      %v477 = vpack.c.b16 %v459, %v457
      %v478 = vpack.c.b16 %v462, %v460
      %v479 = vpack.c.b16 %v463, %v461
      %v480 = vpack.c.b16 %v466, %v464
      %v481 = vpack.c.b16 %v467, %v465
      %v482 = vpack.c.b16 %v470, %v468
      %v483 = vpack.c.b16 %v471, %v469
      %v484 = vpack.c.b16 %v472, %v472
      %v485 = vpack.c.b16 %v473, %v473
      %v497 = vsel %vm264, %v440, 0
      %v500 = vsel %vm268, %v484, 0
      %v503 = vsel %vm268, %v485, 0
      %505 = vmatprep.subr.bf16.mxu0 %v475
      %506 = vmatpush1.bf16.msra.mxu0 %v474
      %507 = vmatprep.subr.bf16.mxu0 %v477
      %508 = vmatpush1.bf16.msra.mxu0 %v476
      %509 = vmatprep.subr.bf16.mxu0 %v479
      %510 = vmatpush1.bf16.msra.mxu0 %v478
      %511 = vmatprep.subr.bf16.mxu0 %v481
      %512 = vmatpush1.bf16.msra.mxu0 %v480
      %513 = vmatprep.subr.bf16.mxu0 %v483
      %514 = vmatpush1.bf16.msra.mxu0 %v482
      %515 = vmatprep.subr.bf16.mxu0 %v503
      %516 = vmatpush1.bf16.msra.mxu0 %v500
      %517 = vmatprep.subr.bf16.mxu0 0
      %518 = vmatpush1.bf16.msra.mxu0 0
      %519 = vmatprep.subr.bf16.mxu0 0
      %520 = vmatpush1.bf16.msra.mxu0 0
      %521 = vmatprep.subr.bf16.mxu0 0
      %522 = vmatpush1.bf16.msra.mxu0 0
      %523 = vmatprep.subr.bf16.mxu0 0
      %524 = vmatpush1.bf16.msra.mxu0 0
      %525 = vmatprep.subr.bf16.mxu0 0
      %526 = vmatpush1.bf16.msra.mxu0 0
      %527 = vmatprep.subr.bf16.mxu0 0
      %528 = vmatpush1.bf16.msra.mxu0 0
      %529 = vmatprep.subr.bf16.mxu0 0
      %530 = vmatpush1.bf16.msra.mxu0 0
      %531 = vmatprep.subr.bf16.mxu0 0
      %532 = vmatpush1.bf16.msra.mxu0 0
      %533 = vmatprep.subr.bf16.mxu0 0
      %534 = vmatpush1.bf16.msra.mxu0 0
      %535 = vmatprep.subr.bf16.mxu0 0
      %536 = vmatpush1.bf16.msra.mxu0 0
      %537 = vmatprep.mubr.bf16.mxu0 0
      %538 = vmatmul.mubr.bf16.gmra.mrb[0].mxu0 %v497
      %v539 = vpop.f32.mrb[0].mxu0
      %v540 = vadd.f32 0.0, %v539
      %v541 = vpop.f32.mrb[0].mxu0
      %v542 = vadd.f32 0.0, %v541
      %v543 = vpop.f32.mrb[0].mxu0
      %v544 = vpop.f32.mrb[0].mxu0
      %545 = vdwg.mxu0
      %v546 = vadd.f32 %v415, %v540
      %v547 = vadd.f32 %v417, %v542
      %s548 = scalar_lea.vmem %s1, 264
      %v549 = vld [vmem:[%s548] sm:$0xff]
      %v550 = vld [vmem:[%s548 + $0x8] sm:$0xff]
      %v551 = vld [vmem:[%s548 + $0x10] sm:$0xff]
      %v552 = vld [vmem:[%s548 + $0x18] sm:$0xff]
      %v553 = vld [vmem:[%s548 + $0x20] sm:$0xff]
      %v554 = vld [vmem:[%s548 + $0x28] sm:$0xff]
      %v555 = vld [vmem:[%s548 + $0x30] sm:$0xff]
      %v556 = vld [vmem:[%s548 + $0x38] sm:$0xff]
      %v557 = vld [vmem:[%s548 + $0x40] sm:$0xff]
      %v558 = vld [vmem:[%s548 + $0x48] sm:$0xff]
      %v559 = vld [vmem:[%s548 + $0x50] sm:$0x33]
      %v571 = vunpack.c.l.b16 %v549
      %v572 = vunpack.c.h.b16 %v549
      %v573 = vunpack.c.l.b16 %v550
      %v574 = vunpack.c.h.b16 %v550
      %v575 = vunpack.c.l.b16 %v551
      %v576 = vunpack.c.h.b16 %v551
      %v577 = vunpack.c.l.b16 %v552
      %v578 = vunpack.c.h.b16 %v552
      %v579 = vunpack.c.l.b16 %v553
      %v580 = vunpack.c.h.b16 %v553
      %v581 = vunpack.c.l.b16 %v554
      %v582 = vunpack.c.h.b16 %v554
      %v583 = vunpack.c.l.b16 %v555
      %v584 = vunpack.c.h.b16 %v555
      %v585 = vunpack.c.l.b16 %v556
      %v586 = vunpack.c.h.b16 %v556
      %v587 = vunpack.c.l.b16 %v557
      %v588 = vunpack.c.h.b16 %v557
      %v589 = vunpack.c.l.b16 %v558
      %v590 = vunpack.c.h.b16 %v558
      %v591 = vunpack.c.l.b16 %v559
      %v592 = vunpack.c.h.b16 %v559
      %v593 = vpack.c.b16 %v573, %v571
      %v594 = vpack.c.b16 %v574, %v572
      %v595 = vpack.c.b16 %v577, %v575
      %v596 = vpack.c.b16 %v578, %v576
      %v597 = vpack.c.b16 %v581, %v579
      %v598 = vpack.c.b16 %v582, %v580
      %v599 = vpack.c.b16 %v585, %v583
      %v600 = vpack.c.b16 %v586, %v584
      %v601 = vpack.c.b16 %v589, %v587
      %v602 = vpack.c.b16 %v590, %v588
      %v603 = vpack.c.b16 %v591, %v591
      %v604 = vpack.c.b16 %v592, %v592
      %v616 = vsel %vm264, %v171, 0
      %v619 = vsel %vm268, %v603, 0
      %v622 = vsel %vm268, %v604, 0
      %624 = vmatprep.subr.bf16.mxu0 %v594
      %625 = vmatpush1.bf16.msra.mxu0 %v593
      %626 = vmatprep.subr.bf16.mxu0 %v596
      %627 = vmatpush1.bf16.msra.mxu0 %v595
      %628 = vmatprep.subr.bf16.mxu0 %v598
      %629 = vmatpush1.bf16.msra.mxu0 %v597
      %630 = vmatprep.subr.bf16.mxu0 %v600
      %631 = vmatpush1.bf16.msra.mxu0 %v599
      %632 = vmatprep.subr.bf16.mxu0 %v602
      %633 = vmatpush1.bf16.msra.mxu0 %v601
      %634 = vmatprep.subr.bf16.mxu0 %v622
      %635 = vmatpush1.bf16.msra.mxu0 %v619
      %636 = vmatprep.subr.bf16.mxu0 0
      %637 = vmatpush1.bf16.msra.mxu0 0
      %638 = vmatprep.subr.bf16.mxu0 0
      %639 = vmatpush1.bf16.msra.mxu0 0
      %640 = vmatprep.subr.bf16.mxu0 0
      %641 = vmatpush1.bf16.msra.mxu0 0
      %642 = vmatprep.subr.bf16.mxu0 0
      %643 = vmatpush1.bf16.msra.mxu0 0
      %644 = vmatprep.subr.bf16.mxu0 0
      %645 = vmatpush1.bf16.msra.mxu0 0
      %646 = vmatprep.subr.bf16.mxu0 0
      %647 = vmatpush1.bf16.msra.mxu0 0
      %648 = vmatprep.subr.bf16.mxu0 0
      %649 = vmatpush1.bf16.msra.mxu0 0
      %650 = vmatprep.subr.bf16.mxu0 0
      %651 = vmatpush1.bf16.msra.mxu0 0
      %652 = vmatprep.subr.bf16.mxu0 0
      %653 = vmatpush1.bf16.msra.mxu0 0
      %654 = vmatprep.subr.bf16.mxu0 0
      %655 = vmatpush1.bf16.msra.mxu0 0
      %656 = vmatprep.mubr.bf16.mxu0 0
      %657 = vmatmul.mubr.bf16.gmra.mrb[0].mxu0 %v616
      %v658 = vpop.f32.mrb[0].mxu0
      %v659 = vadd.f32 0.0, %v658
      %v660 = vpop.f32.mrb[0].mxu0
      %v661 = vadd.f32 0.0, %v660
      %v662 = vpop.f32.mrb[0].mxu0
      %v663 = vpop.f32.mrb[0].mxu0
      %664 = vdwg.mxu0
      %v665 = vadd.f32 %v546, %v659
      %v666 = vadd.f32 %v547, %v661
      %s667 = scalar_lea.vmem %s1, 352
      %v668 = vld [vmem:[%s667] sm:$0xff]
      %v669 = vld [vmem:[%s667 + $0x8] sm:$0xff]
      %v670 = vld [vmem:[%s667 + $0x10] sm:$0xff]
      %v671 = vld [vmem:[%s667 + $0x18] sm:$0xff]
      %v672 = vld [vmem:[%s667 + $0x20] sm:$0xff]
      %v673 = vld [vmem:[%s667 + $0x28] sm:$0xff]
      %v674 = vld [vmem:[%s667 + $0x30] sm:$0xff]
      %v675 = vld [vmem:[%s667 + $0x38] sm:$0xff]
      %v676 = vld [vmem:[%s667 + $0x40] sm:$0xff]
      %v677 = vld [vmem:[%s667 + $0x48] sm:$0xff]
      %v678 = vld [vmem:[%s667 + $0x50] sm:$0x33]
      %v679 = vrot.slane %v433, 1
      %v691 = vunpack.c.l.b16 %v668
      %v692 = vunpack.c.h.b16 %v668
      %v693 = vunpack.c.l.b16 %v669
      %v694 = vunpack.c.h.b16 %v669
      %v695 = vunpack.c.l.b16 %v670
      %v696 = vunpack.c.h.b16 %v670
      %v697 = vunpack.c.l.b16 %v671
      %v698 = vunpack.c.h.b16 %v671
      %v699 = vunpack.c.l.b16 %v672
      %v700 = vunpack.c.h.b16 %v672
      %v701 = vunpack.c.l.b16 %v673
      %v702 = vunpack.c.h.b16 %v673
      %v703 = vunpack.c.l.b16 %v674
      %v704 = vunpack.c.h.b16 %v674
      %v705 = vunpack.c.l.b16 %v675
      %v706 = vunpack.c.h.b16 %v675
      %v707 = vunpack.c.l.b16 %v676
      %v708 = vunpack.c.h.b16 %v676
      %v709 = vunpack.c.l.b16 %v677
      %v710 = vunpack.c.h.b16 %v677
      %v711 = vunpack.c.l.b16 %v678
      %v712 = vunpack.c.h.b16 %v678
      %v713 = vpack.c.b16 %v693, %v691
      %v714 = vpack.c.b16 %v694, %v692
      %v715 = vpack.c.b16 %v697, %v695
      %v716 = vpack.c.b16 %v698, %v696
      %v717 = vpack.c.b16 %v701, %v699
      %v718 = vpack.c.b16 %v702, %v700
      %v719 = vpack.c.b16 %v705, %v703
      %v720 = vpack.c.b16 %v706, %v704
      %v721 = vpack.c.b16 %v709, %v707
      %v722 = vpack.c.b16 %v710, %v708
      %v723 = vpack.c.b16 %v711, %v711
      %v724 = vpack.c.b16 %v712, %v712
      %v736 = vsel %vm264, %v679, 0
      %v739 = vsel %vm268, %v723, 0
      %v742 = vsel %vm268, %v724, 0
      %744 = vmatprep.subr.bf16.mxu0 %v714
      %745 = vmatpush1.bf16.msra.mxu0 %v713
      %746 = vmatprep.subr.bf16.mxu0 %v716
      %747 = vmatpush1.bf16.msra.mxu0 %v715
      %748 = vmatprep.subr.bf16.mxu0 %v718
      %749 = vmatpush1.bf16.msra.mxu0 %v717
      %750 = vmatprep.subr.bf16.mxu0 %v720
      %751 = vmatpush1.bf16.msra.mxu0 %v719
      %752 = vmatprep.subr.bf16.mxu0 %v722
      %753 = vmatpush1.bf16.msra.mxu0 %v721
      %754 = vmatprep.subr.bf16.mxu0 %v742
      %755 = vmatpush1.bf16.msra.mxu0 %v739
      %756 = vmatprep.subr.bf16.mxu0 0
      %757 = vmatpush1.bf16.msra.mxu0 0
      %758 = vmatprep.subr.bf16.mxu0 0
      %759 = vmatpush1.bf16.msra.mxu0 0
      %760 = vmatprep.subr.bf16.mxu0 0
      %761 = vmatpush1.bf16.msra.mxu0 0
      %762 = vmatprep.subr.bf16.mxu0 0
      %763 = vmatpush1.bf16.msra.mxu0 0
      %764 = vmatprep.subr.bf16.mxu0 0
      %765 = vmatpush1.bf16.msra.mxu0 0
      %766 = vmatprep.subr.bf16.mxu0 0
      %767 = vmatpush1.bf16.msra.mxu0 0
      %768 = vmatprep.subr.bf16.mxu0 0
      %769 = vmatpush1.bf16.msra.mxu0 0
      %770 = vmatprep.subr.bf16.mxu0 0
      %771 = vmatpush1.bf16.msra.mxu0 0
      %772 = vmatprep.subr.bf16.mxu0 0
      %773 = vmatpush1.bf16.msra.mxu0 0
      %774 = vmatprep.subr.bf16.mxu0 0
      %775 = vmatpush1.bf16.msra.mxu0 0
      %776 = vmatprep.mubr.bf16.mxu0 0
      %777 = vmatmul.mubr.bf16.gmra.mrb[0].mxu0 %v736
      %v778 = vpop.f32.mrb[0].mxu0
      %v779 = vadd.f32 0.0, %v778
      %v780 = vpop.f32.mrb[0].mxu0
      %v781 = vadd.f32 0.0, %v780
      %v782 = vpop.f32.mrb[0].mxu0
      %v783 = vpop.f32.mrb[0].mxu0
      %784 = vdwg.mxu0
      %v785 = vadd.f32 %v665, %v779
      %v786 = vadd.f32 %v666, %v781
      %787 = vmatprep.subr.bf16.mxu0 %v243
      %788 = vmatpush1.bf16.msra.mxu0 %v242
      %789 = vmatprep.subr.bf16.mxu0 %v245
      %790 = vmatpush1.bf16.msra.mxu0 %v244
      %791 = vmatprep.subr.bf16.mxu0 %v247
      %792 = vmatpush1.bf16.msra.mxu0 %v246
      %793 = vmatprep.subr.bf16.mxu0 %v249
      %794 = vmatpush1.bf16.msra.mxu0 %v248
      %795 = vmatprep.subr.bf16.mxu0 %v251
      %796 = vmatpush1.bf16.msra.mxu0 %v250
      %797 = vmatprep.subr.bf16.mxu0 %v273
      %798 = vmatpush1.bf16.msra.mxu0 %v270
      %799 = vmatprep.subr.bf16.mxu0 0
      %800 = vmatpush1.bf16.msra.mxu0 0
      %801 = vmatprep.subr.bf16.mxu0 0
      %802 = vmatpush1.bf16.msra.mxu0 0
      %803 = vmatprep.subr.bf16.mxu0 0
      %804 = vmatpush1.bf16.msra.mxu0 0
      %805 = vmatprep.subr.bf16.mxu0 0
      %806 = vmatpush1.bf16.msra.mxu0 0
      %807 = vmatprep.subr.bf16.mxu0 0
      %808 = vmatpush1.bf16.msra.mxu0 0
      %809 = vmatprep.subr.bf16.mxu0 0
      %810 = vmatpush1.bf16.msra.mxu0 0
      %811 = vmatprep.subr.bf16.mxu0 0
      %812 = vmatpush1.bf16.msra.mxu0 0
      %813 = vmatprep.subr.bf16.mxu0 0
      %814 = vmatpush1.bf16.msra.mxu0 0
      %815 = vmatprep.subr.bf16.mxu0 0
      %816 = vmatpush1.bf16.msra.mxu0 0
      %817 = vmatprep.subr.bf16.mxu0 0
      %818 = vmatpush1.bf16.msra.mxu0 0
      %819 = vmatprep.mubr.bf16.mxu0 0
      %820 = vmatmul.mubr.bf16.gmra.mrb[0].mxu0 %v497
      %v821 = vpop.f32.mrb[0].mxu0
      %v822 = vadd.f32 0.0, %v821
      %v823 = vpop.f32.mrb[0].mxu0
      %v824 = vadd.f32 0.0, %v823
      %v825 = vpop.f32.mrb[0].mxu0
      %v826 = vpop.f32.mrb[0].mxu0
      %827 = vdwg.mxu0
      %828 = vmatprep.subr.bf16.mxu0 %v350
      %829 = vmatpush1.bf16.msra.mxu0 %v349
      %830 = vmatprep.subr.bf16.mxu0 %v352
      %831 = vmatpush1.bf16.msra.mxu0 %v351
      %832 = vmatprep.subr.bf16.mxu0 %v354
      %833 = vmatpush1.bf16.msra.mxu0 %v353
      %834 = vmatprep.subr.bf16.mxu0 %v356
      %835 = vmatpush1.bf16.msra.mxu0 %v355
      %836 = vmatprep.subr.bf16.mxu0 %v358
      %837 = vmatpush1.bf16.msra.mxu0 %v357
      %838 = vmatprep.subr.bf16.mxu0 %v378
      %839 = vmatpush1.bf16.msra.mxu0 %v375
      %840 = vmatprep.subr.bf16.mxu0 0
      %841 = vmatpush1.bf16.msra.mxu0 0
      %842 = vmatprep.subr.bf16.mxu0 0
      %843 = vmatpush1.bf16.msra.mxu0 0
      %844 = vmatprep.subr.bf16.mxu0 0
      %845 = vmatpush1.bf16.msra.mxu0 0
      %846 = vmatprep.subr.bf16.mxu0 0
      %847 = vmatpush1.bf16.msra.mxu0 0
      %848 = vmatprep.subr.bf16.mxu0 0
      %849 = vmatpush1.bf16.msra.mxu0 0
      %850 = vmatprep.subr.bf16.mxu0 0
      %851 = vmatpush1.bf16.msra.mxu0 0
      %852 = vmatprep.subr.bf16.mxu0 0
      %853 = vmatpush1.bf16.msra.mxu0 0
      %854 = vmatprep.subr.bf16.mxu0 0
      %855 = vmatpush1.bf16.msra.mxu0 0
      %856 = vmatprep.subr.bf16.mxu0 0
      %857 = vmatpush1.bf16.msra.mxu0 0
      %858 = vmatprep.subr.bf16.mxu0 0
      %859 = vmatpush1.bf16.msra.mxu0 0
      %860 = vmatprep.mubr.bf16.mxu0 0
      %861 = vmatmul.mubr.bf16.gmra.mrb[0].mxu0 %v266
      %v862 = vpop.f32.mrb[0].mxu0
      %v863 = vadd.f32 %v822, %v862
      %v864 = vpop.f32.mrb[0].mxu0
      %v865 = vadd.f32 %v824, %v864
      %v866 = vpop.f32.mrb[0].mxu0
      %v867 = vpop.f32.mrb[0].mxu0
      %868 = vdwg.mxu0
      %869 = vmatprep.subr.bf16.mxu0 %v475
      %870 = vmatpush1.bf16.msra.mxu0 %v474
      %871 = vmatprep.subr.bf16.mxu0 %v477
      %872 = vmatpush1.bf16.msra.mxu0 %v476
      %873 = vmatprep.subr.bf16.mxu0 %v479
      %874 = vmatpush1.bf16.msra.mxu0 %v478
      %875 = vmatprep.subr.bf16.mxu0 %v481
      %876 = vmatpush1.bf16.msra.mxu0 %v480
      %877 = vmatprep.subr.bf16.mxu0 %v483
      %878 = vmatpush1.bf16.msra.mxu0 %v482
      %879 = vmatprep.subr.bf16.mxu0 %v503
      %880 = vmatpush1.bf16.msra.mxu0 %v500
      %881 = vmatprep.subr.bf16.mxu0 0
      %882 = vmatpush1.bf16.msra.mxu0 0
      %883 = vmatprep.subr.bf16.mxu0 0
      %884 = vmatpush1.bf16.msra.mxu0 0
      %885 = vmatprep.subr.bf16.mxu0 0
      %886 = vmatpush1.bf16.msra.mxu0 0
      %887 = vmatprep.subr.bf16.mxu0 0
      %888 = vmatpush1.bf16.msra.mxu0 0
      %889 = vmatprep.subr.bf16.mxu0 0
      %890 = vmatpush1.bf16.msra.mxu0 0
      %891 = vmatprep.subr.bf16.mxu0 0
      %892 = vmatpush1.bf16.msra.mxu0 0
      %893 = vmatprep.subr.bf16.mxu0 0
      %894 = vmatpush1.bf16.msra.mxu0 0
      %895 = vmatprep.subr.bf16.mxu0 0
      %896 = vmatpush1.bf16.msra.mxu0 0
      %897 = vmatprep.subr.bf16.mxu0 0
      %898 = vmatpush1.bf16.msra.mxu0 0
      %899 = vmatprep.subr.bf16.mxu0 0
      %900 = vmatpush1.bf16.msra.mxu0 0
      %901 = vmatprep.mubr.bf16.mxu0 0
      %902 = vmatmul.mubr.bf16.gmra.mrb[0].mxu0 %v616
      %v903 = vpop.f32.mrb[0].mxu0
      %v904 = vadd.f32 0.0, %v903
      %v905 = vpop.f32.mrb[0].mxu0
      %v906 = vadd.f32 0.0, %v905
      %v907 = vpop.f32.mrb[0].mxu0
      %v908 = vpop.f32.mrb[0].mxu0
      %909 = vdwg.mxu0
      %v910 = vadd.f32 %v863, %v904
      %v911 = vadd.f32 %v865, %v906
      %912 = vmatprep.subr.bf16.mxu0 %v594
      %913 = vmatpush1.bf16.msra.mxu0 %v593
      %914 = vmatprep.subr.bf16.mxu0 %v596
      %915 = vmatpush1.bf16.msra.mxu0 %v595
      %916 = vmatprep.subr.bf16.mxu0 %v598
      %917 = vmatpush1.bf16.msra.mxu0 %v597
      %918 = vmatprep.subr.bf16.mxu0 %v600
      %919 = vmatpush1.bf16.msra.mxu0 %v599
      %920 = vmatprep.subr.bf16.mxu0 %v602
      %921 = vmatpush1.bf16.msra.mxu0 %v601
      %922 = vmatprep.subr.bf16.mxu0 %v622
      %923 = vmatpush1.bf16.msra.mxu0 %v619
      %924 = vmatprep.subr.bf16.mxu0 0
      %925 = vmatpush1.bf16.msra.mxu0 0
      %926 = vmatprep.subr.bf16.mxu0 0
      %927 = vmatpush1.bf16.msra.mxu0 0
      %928 = vmatprep.subr.bf16.mxu0 0
      %929 = vmatpush1.bf16.msra.mxu0 0
      %930 = vmatprep.subr.bf16.mxu0 0
      %931 = vmatpush1.bf16.msra.mxu0 0
      %932 = vmatprep.subr.bf16.mxu0 0
      %933 = vmatpush1.bf16.msra.mxu0 0
      %934 = vmatprep.subr.bf16.mxu0 0
      %935 = vmatpush1.bf16.msra.mxu0 0
      %936 = vmatprep.subr.bf16.mxu0 0
      %937 = vmatpush1.bf16.msra.mxu0 0
      %938 = vmatprep.subr.bf16.mxu0 0
      %939 = vmatpush1.bf16.msra.mxu0 0
      %940 = vmatprep.subr.bf16.mxu0 0
      %941 = vmatpush1.bf16.msra.mxu0 0
      %942 = vmatprep.subr.bf16.mxu0 0
      %943 = vmatpush1.bf16.msra.mxu0 0
      %944 = vmatprep.mubr.bf16.mxu0 0
      %945 = vmatmul.mubr.bf16.gmra.mrb[0].mxu0 %v736
      %v946 = vpop.f32.mrb[0].mxu0
      %v947 = vadd.f32 0.0, %v946
      %v948 = vpop.f32.mrb[0].mxu0
      %v949 = vadd.f32 0.0, %v948
      %v950 = vpop.f32.mrb[0].mxu0
      %v951 = vpop.f32.mrb[0].mxu0
      %952 = vdwg.mxu0
      %v953 = vadd.f32 %v910, %v947
      %v954 = vadd.f32 %v911, %v949
      %v955 = vpack.c.b16 %v199, %v199
      %v957 = vshrl.u32 %v955, 16
      %v959 = vshll.u32 %v955, 16
      %v961 = vrot.slane %v959, 1
      %v962 = vor.u32 %v957, %v961
      %v964 = vsel %vm264, %v962, 0
      %966 = vmatprep.subr.bf16.mxu0 %v714
      %967 = vmatpush1.bf16.msra.mxu0 %v713
      %968 = vmatprep.subr.bf16.mxu0 %v716
      %969 = vmatpush1.bf16.msra.mxu0 %v715
      %970 = vmatprep.subr.bf16.mxu0 %v718
      %971 = vmatpush1.bf16.msra.mxu0 %v717
      %972 = vmatprep.subr.bf16.mxu0 %v720
      %973 = vmatpush1.bf16.msra.mxu0 %v719
      %974 = vmatprep.subr.bf16.mxu0 %v722
      %975 = vmatpush1.bf16.msra.mxu0 %v721
      %976 = vmatprep.subr.bf16.mxu0 %v742
      %977 = vmatpush1.bf16.msra.mxu0 %v739
      %978 = vmatprep.subr.bf16.mxu0 0
      %979 = vmatpush1.bf16.msra.mxu0 0
      %980 = vmatprep.subr.bf16.mxu0 0
      %981 = vmatpush1.bf16.msra.mxu0 0
      %982 = vmatprep.subr.bf16.mxu0 0
      %983 = vmatpush1.bf16.msra.mxu0 0
      %984 = vmatprep.subr.bf16.mxu0 0
      %985 = vmatpush1.bf16.msra.mxu0 0
      %986 = vmatprep.subr.bf16.mxu0 0
      %987 = vmatpush1.bf16.msra.mxu0 0
      %988 = vmatprep.subr.bf16.mxu0 0
      %989 = vmatpush1.bf16.msra.mxu0 0
      %990 = vmatprep.subr.bf16.mxu0 0
      %991 = vmatpush1.bf16.msra.mxu0 0
      %992 = vmatprep.subr.bf16.mxu0 0
      %993 = vmatpush1.bf16.msra.mxu0 0
      %994 = vmatprep.subr.bf16.mxu0 0
      %995 = vmatpush1.bf16.msra.mxu0 0
      %996 = vmatprep.subr.bf16.mxu0 0
      %997 = vmatpush1.bf16.msra.mxu0 0
      %998 = vmatprep.mubr.bf16.mxu0 0
      %999 = vmatmul.mubr.bf16.gmra.mrb[0].mxu0 %v964
      %v1000 = vpop.f32.mrb[0].mxu0
      %v1001 = vadd.f32 0.0, %v1000
      %v1002 = vpop.f32.mrb[0].mxu0
      %v1003 = vadd.f32 0.0, %v1002
      %v1004 = vpop.f32.mrb[0].mxu0
      %v1005 = vpop.f32.mrb[0].mxu0
      %1006 = vdwg.mxu0
      %v1007 = vadd.f32 %v953, %v1001
      %v1008 = vadd.f32 %v954, %v1003
      %v1009 = vmax.f32 %v785, %v1007
      %v1010 = vmax.f32 %v786, %v1008
      %1013 = vrot.lane.b32.xlu0 %v1009, 48
      %v1014 = vpop.permute.xlu0 %1013
      %1015 = vrot.lane.b32.xlu0 %v1010, 48
      %v1016 = vpop.permute.xlu0 %1015
      %vm1017 = vcmask 392192
      %v1018 = vsel %vm1017, %v1014, %v1016
      %v1020 = vmax.f32 %v1009, %v1018
      %v1022 = vlaneseq
      %v1023 = vshrl.u32 %v1022, 7
      %v1024 = vsub.s32 0, %v1023
      %v1025 = vrot.slane %v172, %v1024
      %v1027 = vadd.f32 %v1020, %v1025
      %v1028 = vmax.f32 %v1027, 0.0
      %v1029 = vpack.c.bf16 %v1028, %v1028
      %vm1030 = vcmask 649216
      %vm1031 = vsmask.f32 2304
      %vm1032 = vmand %vm1030, %vm1031
      %v1033 = vld [vmem:[%s168] sm:$0x7]
      %v1034 = vsel %vm1032, %v1029, %v1033
      %1035 = vst [vmem:[%s168] sm:$0x7] %v1034
      %p1036 = scmp.lt.s32.totalorder %s14, 1
      %s1037 = scalar_select %p1036, %s14, 1
      %s1038 = smul.addr %s1037, 4
      %s1039 = scalar_lea.vmem %s3, %s1038
      // Predicated region
      $region33: #{net_forward.4} parent=31 // pred_check
        %p1040 = pneg %p100
      $region34: #{net_forward.4} parent=31 // pred_check_branch
        %1042 = sbr.rel (%p1040) target = $region36
      $region35: #{net_forward.4} parent=31 // pred_region
        _
      $region36: #{net_forward.4} parent=31 // pred_fallthru
        _
    $region32: #{net_forward.4} parent=5 // pred_fallthru
      _
    %p1043 = scmp.le.s32.totalorder 2, %s9
    // Predicated region
    $region37: #{net_forward.4} parent=5 // pred_check
      %p1044 = pneg %p1043
    $region38: #{net_forward.4} parent=5 // pred_check_branch
      %1046 = sbr.rel (%p1044) target = $region40
    $region39: #{net_forward.4} parent=5 // pred_region
      %s1047 = ssub.s32 %s9, 2
      // Predicated region
      $region41: #{net_forward.4} parent=39 // pred_check
        %p1048 = pneg %p106
      $region42: #{net_forward.4} parent=39 // pred_check_branch
        %1050 = sbr.rel (%p1048) target = $region44
      $region43: #{net_forward.4} parent=39 // pred_region
        %p1051 = scmp.lt.s32.totalorder %s15, 1
        %s1052 = scalar_select %p1051, %s15, 1
        %s1053 = smul.addr %s1052, 4
        %s1054 = scalar_lea.vmem %s3, %s1053
      $region44: #{net_forward.4} parent=39 // pred_fallthru
        _
    $region40: #{net_forward.4} parent=5 // pred_fallthru
      _
  $region6: #{net_forward.4} parent=0 // loop_footer
    %s13 = sadd.s32 1, %s9
  $region7: #{net_forward.4} parent=0 // loop_footer_branch
    %8 = sbr.rel target = $region3
  $region8: #{net_forward.4} parent=0 // loop_exit
    _

// kernel: net_forward.3
$region0: #{net_forward.3}
  #allocation0 [shape = 'u32[]', space=smem, size = 0x4, offset = 0x4, fixed_abs, tag = 'smem constant byte address 0x4 - core index']
  #allocation1 [shape = 'u32[144,128]{1,0:T(1,128)}', space=vmem, size = 0x12000, scoped, tag = 'internal scratch']
  %s0 = inlined_call_operand.vmem [shape: bf16[2,32,32], index: 0, kind: input, shape index: {}]
  %s1 = inlined_call_operand.hbm [shape: bf16[5,32,168], index: 1, kind: input, shape index: {}]
  %s2 = inlined_call_operand.vmem [shape: f32[1,84], index: 2, kind: input, shape index: {}]
  %s3 = inlined_call_operand.vmem [shape: bf16[2,14,84], index: 3, kind: output, shape index: {}]
  %s4 = sld [smem:[#allocation0]]
  $region49: #{net_forward.3} parent=0
    _
  %s6 = ssub.s32 1, %s4
  %s7 = scalar_select 0, %s6, %s4
  $region1: #{net_forward.3} parent=0
    #allocation2 [shape = 'u8[81920]{0}', space=vmem, size = 0x14000, scoped, tag = 'input window, operand 1, single buffered']
    #allocation3 [shape = 's32[2]{0}', space=sflag, size = 0x8, scoped, tag = 'scoped memory for net_forward.3']
    %8 = vsyncpa [#allocation3], 0
    loop: start=0, step=1, limit=4
    $region2: #{net_forward.3} parent=1 // loop_pre_header
      _
    $region3: #{net_forward.3} parent=1 // loop_header
      %s10 = sphi 0, %s14
      %p11 = scmp.ge.s32.totalorder %s10, 4
      %s20 = sphi 0, %s22
      %s23 = sphi 0, %s20
      %s24 = sphi 0, %s23
      %s40 = sphi 0, %s24
      %s44 = sphi 0, %s44
      %s46 = sphi 0, %s44
      %s47 = sphi 0, %s46
      %s61 = sphi 0, %s47
      %s65 = sphi 0, %s65
      %s67 = sphi 0, %s65
      %s68 = sphi 0, %s67
      %s82 = sphi 0, %s68
      %s88 = sphi 0, %s90
      %s91 = sphi 0, %s88
      %s92 = sphi 0, %s91
      %s108 = sphi 0, %s92
    $region4: #{net_forward.3} parent=1 // loop_header_branch
      %13 = sbr.rel (%p11) target = $region8
    $region5: #{net_forward.3} parent=1 // loop_body
      %s15 = ssub.s32 %s10, 1
      %s16 = ssub.s32 %s10, 2
      %s17 = sadd.s32 %s10, 1
      %s18 = ssub.s32 %s10, %s17
      %p19 = scmp.eq.s32.totalorder %s18, 0
      %s21 = sadd.s32 %s20, 1
      %s22 = scalar_select %p19, %s20, %s21
      %p25 = pneg %p19
      %p26 = scmp.eq.s32.totalorder %s10, 1
      %p27 = por %p25, %p26
      %p28 = scmp.ne.s32.totalorder %s20, %s23
      %p29 = scmp.eq.s32.totalorder %s10, 0
      %p30 = por %p28, %p29
      %p31 = scmp.ne.s32.totalorder %s20, %s23
      %p32 = scmp.eq.s32.totalorder %s15, 1
      %p33 = por %p31, %p32
      %p34 = scmp.ne.s32.totalorder %s23, %s24
      %p35 = scmp.eq.s32.totalorder %s15, 0
      %p36 = por %p34, %p35
      %p37 = scmp.ne.s32.totalorder %s23, %s24
      %p38 = scmp.eq.s32.totalorder %s16, 1
      %p39 = por %p37, %p38
      %p41 = scmp.ne.s32.totalorder %s24, %s40
      %p42 = scmp.eq.s32.totalorder %s16, 0
      %p43 = por %p41, %p42
      %s45 = sadd.s32 %s44, 1
      %p48 = scmp.eq.s32.totalorder %s10, 1
      %p49 = scmp.ne.s32.totalorder %s44, %s46
      %p50 = scmp.eq.s32.totalorder %s10, 0
      %p51 = por %p49, %p50
      %p52 = scmp.ne.s32.totalorder %s44, %s46
      %p53 = scmp.eq.s32.totalorder %s15, 1
      %p54 = por %p52, %p53
      %p55 = scmp.ne.s32.totalorder %s46, %s47
      %p56 = scmp.eq.s32.totalorder %s15, 0
      %p57 = por %p55, %p56
      %p58 = scmp.ne.s32.totalorder %s46, %s47
      %p59 = scmp.eq.s32.totalorder %s16, 1
      %p60 = por %p58, %p59
      %p62 = scmp.ne.s32.totalorder %s47, %s61
      %p63 = scmp.eq.s32.totalorder %s16, 0
      %p64 = por %p62, %p63
      %s66 = sadd.s32 %s65, 1
      %p69 = scmp.eq.s32.totalorder %s10, 1
      %p70 = scmp.ne.s32.totalorder %s65, %s67
      %p71 = scmp.eq.s32.totalorder %s10, 0
      %p72 = por %p70, %p71
      %p73 = scmp.ne.s32.totalorder %s65, %s67
      %p74 = scmp.eq.s32.totalorder %s15, 1
      %p75 = por %p73, %p74
      %p76 = scmp.ne.s32.totalorder %s67, %s68
      %p77 = scmp.eq.s32.totalorder %s15, 0
      %p78 = por %p76, %p77
      %p79 = scmp.ne.s32.totalorder %s67, %s68
      %p80 = scmp.eq.s32.totalorder %s16, 1
      %p81 = por %p79, %p80
      %p83 = scmp.ne.s32.totalorder %s68, %s82
      %p84 = scmp.eq.s32.totalorder %s16, 0
      %p85 = por %p83, %p84
      %s86 = ssub.s32 %s10, %s17
      %p87 = scmp.eq.s32.totalorder %s86, 0
      %s89 = sadd.s32 %s88, 1
      %s90 = scalar_select %p87, %s88, %s89
      %p93 = pneg %p87
      %p94 = scmp.eq.s32.totalorder %s10, 1
      %p95 = por %p93, %p94
      %p96 = scmp.ne.s32.totalorder %s88, %s91
      %p97 = scmp.eq.s32.totalorder %s10, 0
      %p98 = por %p96, %p97
      %p99 = scmp.ne.s32.totalorder %s88, %s91
      %p100 = scmp.eq.s32.totalorder %s15, 1
      %p101 = por %p99, %p100
      %p102 = scmp.ne.s32.totalorder %s91, %s92
      %p103 = scmp.eq.s32.totalorder %s15, 0
      %p104 = por %p102, %p103
      %p105 = scmp.ne.s32.totalorder %s91, %s92
      %p106 = scmp.eq.s32.totalorder %s16, 1
      %p107 = por %p105, %p106
      %p109 = scmp.ne.s32.totalorder %s92, %s108
      %p110 = scmp.eq.s32.totalorder %s16, 0
      %p111 = por %p109, %p110
      %p112 = scmp.le.s32.totalorder 1, %s10
      %p113 = scmp.lt.s32.totalorder %s10, 3
      %p114 = pnand %p112, %p113
      %p115 = pneg %p114
      // Predicated region
      $region9: #{net_forward.3} parent=5 // pred_check
        _
      $region10: #{net_forward.3} parent=5 // pred_check_branch
        %117 = sbr.rel (%p114) target = $region12
      $region11: #{net_forward.3} parent=5 // pred_region
        %s118 = ssub.s32 %s10, 1
        // Predicated region
        $region13: #{net_forward.3} parent=11 // pred_check
          %p119 = pneg %p57
        $region14: #{net_forward.3} parent=11 // pred_check_branch
          %121 = sbr.rel (%p119) target = $region16
        $region15: #{net_forward.3} parent=11 // pred_region
          %s123 = ssub.s32 2560, 2560
          %124 = vsyncadd [#allocation3], %s123
          %s125 = sshll.u32 [#allocation2], 4
          %s126 = int_to_ptr.vmem [resolvable:$true] %s125
          %131 = dma.hbm_to_vmem [thread:$0]  %s1, 2560, %s126, [#allocation3], 128, 128, 8
        $region16: #{net_forward.3} parent=11 // pred_fallthru
          _
        // Predicated region
        $region17: #{net_forward.3} parent=11 // pred_check
          %p132 = pneg %p78
        $region18: #{net_forward.3} parent=11 // pred_check_branch
          %134 = sbr.rel (%p132) target = $region20
        $region19: #{net_forward.3} parent=11 // pred_region
          _
        $region20: #{net_forward.3} parent=11 // pred_fallthru
          _
      $region12: #{net_forward.3} parent=5 // pred_fallthru
        _
      %p135 = scmp.lt.s32.totalorder %s10, 2
      // Predicated region
      $region21: #{net_forward.3} parent=5 // pred_check
        %p136 = pneg %p135
      $region22: #{net_forward.3} parent=5 // pred_check_branch
        %138 = sbr.rel (%p136) target = $region24
      $region23: #{net_forward.3} parent=5 // pred_region
        // Predicated region
        $region25: #{net_forward.3} parent=23 // pred_check
          %p139 = pneg %p30
        $region26: #{net_forward.3} parent=23 // pred_check_branch
          %141 = sbr.rel (%p139) target = $region28
        $region27: #{net_forward.3} parent=23 // pred_region
          %p142 = scmp.lt.s32.totalorder %s10, 1
          %s143 = scalar_select %p142, %s10, 1
          %s144 = smul.addr %s143, 4
          %s145 = smul.addr %s144, 4
          %s146 = scalar_lea.vmem %s0, %s145
        $region28: #{net_forward.3} parent=23 // pred_fallthru
          _
      $region24: #{net_forward.3} parent=5 // pred_fallthru
        _
      %p147 = scmp.le.s32.totalorder 1, %s10
      %p148 = scmp.lt.s32.totalorder %s10, 3
      %p149 = pnand %p147, %p148
      %p150 = pneg %p149
      // Predicated region
      $region29: #{net_forward.3} parent=5 // pred_check
        _
      $region30: #{net_forward.3} parent=5 // pred_check_branch
        %152 = sbr.rel (%p149) target = $region32
      $region31: #{net_forward.3} parent=5 // pred_region
        %s153 = ssub.s32 %s10, 1
        // Predicated region
        $region33: #{net_forward.3} parent=31 // pred_check
          %p154 = pneg %p57
        $region34: #{net_forward.3} parent=31 // pred_check_branch
          %156 = sbr.rel (%p154) target = $region36
        $region35: #{net_forward.3} parent=31 // pred_region
          %157 = dma.done [#allocation3], 2560
        $region36: #{net_forward.3} parent=31 // pred_fallthru
          _
        %p158 = scmp.lt.s32.totalorder %s15, 1
        %s159 = scalar_select %p158, %s15, 1
        %s160 = smul.addr %s159, 4
        %s161 = smul.addr %s160, 4
        %s162 = scalar_lea.vmem %s0, %s161
        %p163 = pneg %p36
        %p164 = pneg %p33
        %p165 = pneg %p57
        %p166 = pneg %p54
        %p167 = pneg %p78
        %p168 = pneg %p75
        %p169 = pneg %p104
        %p170 = pneg %p101
        %p171 = scmp.lt.s32.totalorder %s15, 1
        %s172 = scalar_select %p171, %s15, 1
        %s173 = smul.addr %s172, 2
        %s174 = smul.addr %s173, 4
        %s175 = scalar_lea.vmem %s3, %s174
        %p176 = scmp.lt.s32.totalorder %s15, 1
        %s177 = scalar_select %p176, %s15, 1
        %s178 = smul.addr %s177, 4
        %s179 = smul.addr %s178, 4
        %s180 = scalar_lea.vmem %s0, %s179
        %p181 = scmp.lt.s32.totalorder %s15, 1
        %s182 = scalar_select %p181, %s15, 1
        %s183 = smul.addr %s182, 2
        %s184 = smul.addr %s183, 4
        %s185 = scalar_lea.vmem %s3, %s184
        %v187 = vld [vmem:[%s180] sm:$0xf]
        %v188 = vld [vmem:[%s180 + $0x4] sm:$0xf]
        %v189 = vld [vmem:[%s180 + $0x8] sm:$0xf]
        %v190 = vld [vmem:[%s180 + $0xc] sm:$0xf]
        %v191 = vld [vmem:[%s2] sm:$0x1]
        %v192 = vld [vmem:[#allocation2] sm:$0xff]
        %v193 = vld [vmem:[#allocation2 + $0x8] sm:$0xff]
        %v194 = vld [vmem:[#allocation2 + $0x10] sm:$0xff]
        %v195 = vld [vmem:[#allocation2 + $0x18] sm:$0xff]
        %s196 = scalar_lea.vmem [#allocation2], 32
        %v197 = vld [vmem:[%s196] sm:$0xff]
        %v198 = vld [vmem:[%s196 + $0x8] sm:$0xff]
        %v199 = vld [vmem:[%s196 + $0x10] sm:$0xff]
        %v200 = vld [vmem:[%s196 + $0x18] sm:$0xff]
        %v205 = vunpack.c.l.b16 %v197
        %v206 = vunpack.c.h.b16 %v197
        %v207 = vunpack.c.l.b16 %v198
        %v208 = vunpack.c.h.b16 %v198
        %v209 = vunpack.c.l.b16 %v199
        %v210 = vunpack.c.h.b16 %v199
        %v211 = vunpack.c.l.b16 %v200
        %v212 = vunpack.c.h.b16 %v200
        %v213 = vpack.c.b16 %v207, %v205
        %v214 = vpack.c.b16 %v208, %v206
        %v215 = vpack.c.b16 %v211, %v209
        %v216 = vpack.c.b16 %v212, %v210
        %vm221 = vcmask 261120
        %v223 = vsel %vm221, %v188, 0
        %225 = vmatprep.subr.bf16.mxu0 %v214
        %226 = vmatpush1.bf16.msra.mxu0 %v213
        %227 = vmatprep.subr.bf16.mxu0 %v216
        %228 = vmatpush1.bf16.msra.mxu0 %v215
        %229 = vmatprep.subr.bf16.mxu0 0
        %230 = vmatpush1.bf16.msra.mxu0 0
        %231 = vmatprep.subr.bf16.mxu0 0
        %232 = vmatpush1.bf16.msra.mxu0 0
        %233 = vmatprep.subr.bf16.mxu0 0
        %234 = vmatpush1.bf16.msra.mxu0 0
        %235 = vmatprep.subr.bf16.mxu0 0
        %236 = vmatpush1.bf16.msra.mxu0 0
        %237 = vmatprep.subr.bf16.mxu0 0
        %238 = vmatpush1.bf16.msra.mxu0 0
        %239 = vmatprep.subr.bf16.mxu0 0
        %240 = vmatpush1.bf16.msra.mxu0 0
        %241 = vmatprep.subr.bf16.mxu0 0
        %242 = vmatpush1.bf16.msra.mxu0 0
        %243 = vmatprep.subr.bf16.mxu0 0
        %244 = vmatpush1.bf16.msra.mxu0 0
        %245 = vmatprep.subr.bf16.mxu0 0
        %246 = vmatpush1.bf16.msra.mxu0 0
        %247 = vmatprep.subr.bf16.mxu0 0
        %248 = vmatpush1.bf16.msra.mxu0 0
        %249 = vmatprep.subr.bf16.mxu0 0
        %250 = vmatpush1.bf16.msra.mxu0 0
        %251 = vmatprep.subr.bf16.mxu0 0
        %252 = vmatpush1.bf16.msra.mxu0 0
        %253 = vmatprep.subr.bf16.mxu0 0
        %254 = vmatpush1.bf16.msra.mxu0 0
        %255 = vmatprep.subr.bf16.mxu0 0
        %256 = vmatpush1.bf16.msra.mxu0 0
        %257 = vmatprep.mubr.bf16.mxu0 0
        %258 = vmatmul.mubr.bf16.gmra.mrb[0].mxu0 %v223
        %v259 = vpop.f32.mrb[0].mxu0
        %v260 = vadd.f32 0.0, %v259
        %v261 = vpop.f32.mrb[0].mxu0
        %v262 = vadd.f32 0.0, %v261
        %v263 = vpop.f32.mrb[0].mxu0
        %v264 = vpop.f32.mrb[0].mxu0
        %265 = vdwg.mxu0
        %v270 = vunpack.c.l.b16 %v192
        %v271 = vunpack.c.h.b16 %v192
        %v272 = vunpack.c.l.b16 %v193
        %v273 = vunpack.c.h.b16 %v193
        %v274 = vunpack.c.l.b16 %v194
        %v275 = vunpack.c.h.b16 %v194
        %v276 = vunpack.c.l.b16 %v195
        %v277 = vunpack.c.h.b16 %v195
        %v278 = vpack.c.b16 %v272, %v270
        %v279 = vpack.c.b16 %v273, %v271
        %v280 = vpack.c.b16 %v276, %v274
        %v281 = vpack.c.b16 %v277, %v275
        %v287 = vsel %vm221, %v187, 0
        %289 = vmatprep.subr.bf16.mxu0 %v279
        %290 = vmatpush1.bf16.msra.mxu0 %v278
        %291 = vmatprep.subr.bf16.mxu0 %v281
        %292 = vmatpush1.bf16.msra.mxu0 %v280
        %293 = vmatprep.subr.bf16.mxu0 0
        %294 = vmatpush1.bf16.msra.mxu0 0
        %295 = vmatprep.subr.bf16.mxu0 0
        %296 = vmatpush1.bf16.msra.mxu0 0
        %297 = vmatprep.subr.bf16.mxu0 0
        %298 = vmatpush1.bf16.msra.mxu0 0
        %299 = vmatprep.subr.bf16.mxu0 0
        %300 = vmatpush1.bf16.msra.mxu0 0
        %301 = vmatprep.subr.bf16.mxu0 0
        %302 = vmatpush1.bf16.msra.mxu0 0
        %303 = vmatprep.subr.bf16.mxu0 0
        %304 = vmatpush1.bf16.msra.mxu0 0
        %305 = vmatprep.subr.bf16.mxu0 0
        %306 = vmatpush1.bf16.msra.mxu0 0
        %307 = vmatprep.subr.bf16.mxu0 0
        %308 = vmatpush1.bf16.msra.mxu0 0
        %309 = vmatprep.subr.bf16.mxu0 0
        %310 = vmatpush1.bf16.msra.mxu0 0
        %311 = vmatprep.subr.bf16.mxu0 0
        %312 = vmatpush1.bf16.msra.mxu0 0
        %313 = vmatprep.subr.bf16.mxu0 0
        %314 = vmatpush1.bf16.msra.mxu0 0
        %315 = vmatprep.subr.bf16.mxu0 0
        %316 = vmatpush1.bf16.msra.mxu0 0
        %317 = vmatprep.subr.bf16.mxu0 0
        %318 = vmatpush1.bf16.msra.mxu0 0
        %319 = vmatprep.subr.bf16.mxu0 0
        %320 = vmatpush1.bf16.msra.mxu0 0
        %321 = vmatprep.mubr.bf16.mxu0 0
        %322 = vmatmul.mubr.bf16.gmra.mrb[0].mxu0 %v287
        %v323 = vpop.f32.mrb[0].mxu0
        %v324 = vadd.f32 %v260, %v323
        %v325 = vpop.f32.mrb[0].mxu0
        %v326 = vadd.f32 %v262, %v325
        %v327 = vpop.f32.mrb[0].mxu0
        %v328 = vpop.f32.mrb[0].mxu0
        %329 = vdwg.mxu0
        %s330 = scalar_lea.vmem [#allocation2], 64
        %v331 = vld [vmem:[%s330] sm:$0xff]
        %v332 = vld [vmem:[%s330 + $0x8] sm:$0xff]
        %v333 = vld [vmem:[%s330 + $0x10] sm:$0xff]
        %v334 = vld [vmem:[%s330 + $0x18] sm:$0xff]
        %v339 = vunpack.c.l.b16 %v331
        %v340 = vunpack.c.h.b16 %v331
        %v341 = vunpack.c.l.b16 %v332
        %v342 = vunpack.c.h.b16 %v332
        %v343 = vunpack.c.l.b16 %v333
        %v344 = vunpack.c.h.b16 %v333
        %v345 = vunpack.c.l.b16 %v334
        %v346 = vunpack.c.h.b16 %v334
        %v347 = vpack.c.b16 %v341, %v339
        %v348 = vpack.c.b16 %v342, %v340
        %v349 = vpack.c.b16 %v345, %v343
        %v350 = vpack.c.b16 %v346, %v344
        %v356 = vsel %vm221, %v189, 0
        %358 = vmatprep.subr.bf16.mxu0 %v348
        %359 = vmatpush1.bf16.msra.mxu0 %v347
        %360 = vmatprep.subr.bf16.mxu0 %v350
        %361 = vmatpush1.bf16.msra.mxu0 %v349
        %362 = vmatprep.subr.bf16.mxu0 0
        %363 = vmatpush1.bf16.msra.mxu0 0
        %364 = vmatprep.subr.bf16.mxu0 0
        %365 = vmatpush1.bf16.msra.mxu0 0
        %366 = vmatprep.subr.bf16.mxu0 0
        %367 = vmatpush1.bf16.msra.mxu0 0
        %368 = vmatprep.subr.bf16.mxu0 0
        %369 = vmatpush1.bf16.msra.mxu0 0
        %370 = vmatprep.subr.bf16.mxu0 0
        %371 = vmatpush1.bf16.msra.mxu0 0
        %372 = vmatprep.subr.bf16.mxu0 0
        %373 = vmatpush1.bf16.msra.mxu0 0
        %374 = vmatprep.subr.bf16.mxu0 0
        %375 = vmatpush1.bf16.msra.mxu0 0
        %376 = vmatprep.subr.bf16.mxu0 0
        %377 = vmatpush1.bf16.msra.mxu0 0
        %378 = vmatprep.subr.bf16.mxu0 0
        %379 = vmatpush1.bf16.msra.mxu0 0
        %380 = vmatprep.subr.bf16.mxu0 0
        %381 = vmatpush1.bf16.msra.mxu0 0
        %382 = vmatprep.subr.bf16.mxu0 0
        %383 = vmatpush1.bf16.msra.mxu0 0
        %384 = vmatprep.subr.bf16.mxu0 0
        %385 = vmatpush1.bf16.msra.mxu0 0
        %386 = vmatprep.subr.bf16.mxu0 0
        %387 = vmatpush1.bf16.msra.mxu0 0
        %388 = vmatprep.subr.bf16.mxu0 0
        %389 = vmatpush1.bf16.msra.mxu0 0
        %390 = vmatprep.mubr.bf16.mxu0 0
        %391 = vmatmul.mubr.bf16.gmra.mrb[0].mxu0 %v356
        %v392 = vpop.f32.mrb[0].mxu0
        %v393 = vadd.f32 0.0, %v392
        %v394 = vpop.f32.mrb[0].mxu0
        %v395 = vadd.f32 0.0, %v394
        %v396 = vpop.f32.mrb[0].mxu0
        %v397 = vpop.f32.mrb[0].mxu0
        %398 = vdwg.mxu0
        %v399 = vadd.f32 %v324, %v393
        %v400 = vadd.f32 %v326, %v395
        %s401 = scalar_lea.vmem [#allocation2], 96
        %v402 = vld [vmem:[%s401] sm:$0xff]
        %v403 = vld [vmem:[%s401 + $0x8] sm:$0xff]
        %v404 = vld [vmem:[%s401 + $0x10] sm:$0xff]
        %v405 = vld [vmem:[%s401 + $0x18] sm:$0xff]
        %v410 = vunpack.c.l.b16 %v402
        %v411 = vunpack.c.h.b16 %v402
        %v412 = vunpack.c.l.b16 %v403
        %v413 = vunpack.c.h.b16 %v403
        %v414 = vunpack.c.l.b16 %v404
        %v415 = vunpack.c.h.b16 %v404
        %v416 = vunpack.c.l.b16 %v405
        %v417 = vunpack.c.h.b16 %v405
        %v418 = vpack.c.b16 %v412, %v410
        %v419 = vpack.c.b16 %v413, %v411
        %v420 = vpack.c.b16 %v416, %v414
        %v421 = vpack.c.b16 %v417, %v415
        %v427 = vsel %vm221, %v190, 0
        %429 = vmatprep.subr.bf16.mxu0 %v419
        %430 = vmatpush1.bf16.msra.mxu0 %v418
        %431 = vmatprep.subr.bf16.mxu0 %v421
        %432 = vmatpush1.bf16.msra.mxu0 %v420
        %433 = vmatprep.subr.bf16.mxu0 0
        %434 = vmatpush1.bf16.msra.mxu0 0
        %435 = vmatprep.subr.bf16.mxu0 0
        %436 = vmatpush1.bf16.msra.mxu0 0
        %437 = vmatprep.subr.bf16.mxu0 0
        %438 = vmatpush1.bf16.msra.mxu0 0
        %439 = vmatprep.subr.bf16.mxu0 0
        %440 = vmatpush1.bf16.msra.mxu0 0
        %441 = vmatprep.subr.bf16.mxu0 0
        %442 = vmatpush1.bf16.msra.mxu0 0
        %443 = vmatprep.subr.bf16.mxu0 0
        %444 = vmatpush1.bf16.msra.mxu0 0
        %445 = vmatprep.subr.bf16.mxu0 0
        %446 = vmatpush1.bf16.msra.mxu0 0
        %447 = vmatprep.subr.bf16.mxu0 0
        %448 = vmatpush1.bf16.msra.mxu0 0
        %449 = vmatprep.subr.bf16.mxu0 0
        %450 = vmatpush1.bf16.msra.mxu0 0
        %451 = vmatprep.subr.bf16.mxu0 0
        %452 = vmatpush1.bf16.msra.mxu0 0
        %453 = vmatprep.subr.bf16.mxu0 0
        %454 = vmatpush1.bf16.msra.mxu0 0
        %455 = vmatprep.subr.bf16.mxu0 0
        %456 = vmatpush1.bf16.msra.mxu0 0
        %457 = vmatprep.subr.bf16.mxu0 0
        %458 = vmatpush1.bf16.msra.mxu0 0
        %459 = vmatprep.subr.bf16.mxu0 0
        %460 = vmatpush1.bf16.msra.mxu0 0
        %461 = vmatprep.mubr.bf16.mxu0 0
        %462 = vmatmul.mubr.bf16.gmra.mrb[0].mxu0 %v427
        %v463 = vpop.f32.mrb[0].mxu0
        %v464 = vadd.f32 0.0, %v463
        %v465 = vpop.f32.mrb[0].mxu0
        %v466 = vadd.f32 0.0, %v465
        %v467 = vpop.f32.mrb[0].mxu0
        %v468 = vpop.f32.mrb[0].mxu0
        %469 = vdwg.mxu0
        %v470 = vadd.f32 %v399, %v464
        %v471 = vadd.f32 %v400, %v466
        %s472 = scalar_lea.vmem [#allocation2], 128
        %v473 = vld [vmem:[%s472] sm:$0xff]
        %v474 = vld [vmem:[%s472 + $0x8] sm:$0xff]
        %v475 = vld [vmem:[%s472 + $0x10] sm:$0xff]
        %v476 = vld [vmem:[%s472 + $0x18] sm:$0xff]
        %v478 = vunpack.c.l.b16 %v187
        %v479 = vpack.c.b16 %v478, %v478
        %v481 = vshrl.u32 %v479, 16
        %v483 = vshll.u32 %v479, 16
        %v485 = vrot.slane %v483, 1
        %v486 = vor.u32 %v481, %v485
        %v491 = vunpack.c.l.b16 %v473
        %v492 = vunpack.c.h.b16 %v473
        %v493 = vunpack.c.l.b16 %v474
        %v494 = vunpack.c.h.b16 %v474
        %v495 = vunpack.c.l.b16 %v475
        %v496 = vunpack.c.h.b16 %v475
        %v497 = vunpack.c.l.b16 %v476
        %v498 = vunpack.c.h.b16 %v476
        %v499 = vpack.c.b16 %v493, %v491
        %v500 = vpack.c.b16 %v494, %v492
        %v501 = vpack.c.b16 %v497, %v495
        %v502 = vpack.c.b16 %v498, %v496
        %v508 = vsel %vm221, %v486, 0
        %510 = vmatprep.subr.bf16.mxu0 %v500
        %511 = vmatpush1.bf16.msra.mxu0 %v499
        %512 = vmatprep.subr.bf16.mxu0 %v502
        %513 = vmatpush1.bf16.msra.mxu0 %v501
        %514 = vmatprep.subr.bf16.mxu0 0
        %515 = vmatpush1.bf16.msra.mxu0 0
        %516 = vmatprep.subr.bf16.mxu0 0
        %517 = vmatpush1.bf16.msra.mxu0 0
        %518 = vmatprep.subr.bf16.mxu0 0
        %519 = vmatpush1.bf16.msra.mxu0 0
        %520 = vmatprep.subr.bf16.mxu0 0
        %521 = vmatpush1.bf16.msra.mxu0 0
        %522 = vmatprep.subr.bf16.mxu0 0
        %523 = vmatpush1.bf16.msra.mxu0 0
        %524 = vmatprep.subr.bf16.mxu0 0
        %525 = vmatpush1.bf16.msra.mxu0 0
        %526 = vmatprep.subr.bf16.mxu0 0
        %527 = vmatpush1.bf16.msra.mxu0 0
        %528 = vmatprep.subr.bf16.mxu0 0
        %529 = vmatpush1.bf16.msra.mxu0 0
        %530 = vmatprep.subr.bf16.mxu0 0
        %531 = vmatpush1.bf16.msra.mxu0 0
        %532 = vmatprep.subr.bf16.mxu0 0
        %533 = vmatpush1.bf16.msra.mxu0 0
        %534 = vmatprep.subr.bf16.mxu0 0
        %535 = vmatpush1.bf16.msra.mxu0 0
        %536 = vmatprep.subr.bf16.mxu0 0
        %537 = vmatpush1.bf16.msra.mxu0 0
        %538 = vmatprep.subr.bf16.mxu0 0
        %539 = vmatpush1.bf16.msra.mxu0 0
        %540 = vmatprep.subr.bf16.mxu0 0
        %541 = vmatpush1.bf16.msra.mxu0 0
        %542 = vmatprep.mubr.bf16.mxu0 0
        %543 = vmatmul.mubr.bf16.gmra.mrb[0].mxu0 %v508
        %v544 = vpop.f32.mrb[0].mxu0
        %v545 = vadd.f32 0.0, %v544
        %v546 = vpop.f32.mrb[0].mxu0
        %v547 = vadd.f32 0.0, %v546
        %v548 = vpop.f32.mrb[0].mxu0
        %v549 = vpop.f32.mrb[0].mxu0
        %550 = vdwg.mxu0
        %v551 = vadd.f32 %v470, %v545
        %v552 = vadd.f32 %v471, %v547
        %553 = vmatprep.subr.bf16.mxu0 %v214
        %554 = vmatpush1.bf16.msra.mxu0 %v213
        %555 = vmatprep.subr.bf16.mxu0 %v216
        %556 = vmatpush1.bf16.msra.mxu0 %v215
        %557 = vmatprep.subr.bf16.mxu0 0
        %558 = vmatpush1.bf16.msra.mxu0 0
        %559 = vmatprep.subr.bf16.mxu0 0
        %560 = vmatpush1.bf16.msra.mxu0 0
        %561 = vmatprep.subr.bf16.mxu0 0
        %562 = vmatpush1.bf16.msra.mxu0 0
        %563 = vmatprep.subr.bf16.mxu0 0
        %564 = vmatpush1.bf16.msra.mxu0 0
        %565 = vmatprep.subr.bf16.mxu0 0
        %566 = vmatpush1.bf16.msra.mxu0 0
        %567 = vmatprep.subr.bf16.mxu0 0
        %568 = vmatpush1.bf16.msra.mxu0 0
        %569 = vmatprep.subr.bf16.mxu0 0
        %570 = vmatpush1.bf16.msra.mxu0 0
        %571 = vmatprep.subr.bf16.mxu0 0
        %572 = vmatpush1.bf16.msra.mxu0 0
        %573 = vmatprep.subr.bf16.mxu0 0
        %574 = vmatpush1.bf16.msra.mxu0 0
        %575 = vmatprep.subr.bf16.mxu0 0
        %576 = vmatpush1.bf16.msra.mxu0 0
        %577 = vmatprep.subr.bf16.mxu0 0
        %578 = vmatpush1.bf16.msra.mxu0 0
        %579 = vmatprep.subr.bf16.mxu0 0
        %580 = vmatpush1.bf16.msra.mxu0 0
        %581 = vmatprep.subr.bf16.mxu0 0
        %582 = vmatpush1.bf16.msra.mxu0 0
        %583 = vmatprep.subr.bf16.mxu0 0
        %584 = vmatpush1.bf16.msra.mxu0 0
        %585 = vmatprep.mubr.bf16.mxu0 0
        %586 = vmatmul.mubr.bf16.gmra.mrb[0].mxu0 %v356
        %v587 = vpop.f32.mrb[0].mxu0
        %v588 = vadd.f32 0.0, %v587
        %v589 = vpop.f32.mrb[0].mxu0
        %v590 = vadd.f32 0.0, %v589
        %v591 = vpop.f32.mrb[0].mxu0
        %v592 = vpop.f32.mrb[0].mxu0
        %593 = vdwg.mxu0
        %594 = vmatprep.subr.bf16.mxu0 %v279
        %595 = vmatpush1.bf16.msra.mxu0 %v278
        %596 = vmatprep.subr.bf16.mxu0 %v281
        %597 = vmatpush1.bf16.msra.mxu0 %v280
        %598 = vmatprep.subr.bf16.mxu0 0
        %599 = vmatpush1.bf16.msra.mxu0 0
        %600 = vmatprep.subr.bf16.mxu0 0
        %601 = vmatpush1.bf16.msra.mxu0 0
        %602 = vmatprep.subr.bf16.mxu0 0
        %603 = vmatpush1.bf16.msra.mxu0 0
        %604 = vmatprep.subr.bf16.mxu0 0
        %605 = vmatpush1.bf16.msra.mxu0 0
        %606 = vmatprep.subr.bf16.mxu0 0
        %607 = vmatpush1.bf16.msra.mxu0 0
        %608 = vmatprep.subr.bf16.mxu0 0
        %609 = vmatpush1.bf16.msra.mxu0 0
        %610 = vmatprep.subr.bf16.mxu0 0
        %611 = vmatpush1.bf16.msra.mxu0 0
        %612 = vmatprep.subr.bf16.mxu0 0
        %613 = vmatpush1.bf16.msra.mxu0 0
        %614 = vmatprep.subr.bf16.mxu0 0
        %615 = vmatpush1.bf16.msra.mxu0 0
        %616 = vmatprep.subr.bf16.mxu0 0
        %617 = vmatpush1.bf16.msra.mxu0 0
        %618 = vmatprep.subr.bf16.mxu0 0
        %619 = vmatpush1.bf16.msra.mxu0 0
        %620 = vmatprep.subr.bf16.mxu0 0
        %621 = vmatpush1.bf16.msra.mxu0 0
        %622 = vmatprep.subr.bf16.mxu0 0
        %623 = vmatpush1.bf16.msra.mxu0 0
        %624 = vmatprep.subr.bf16.mxu0 0
        %625 = vmatpush1.bf16.msra.mxu0 0
        %626 = vmatprep.mubr.bf16.mxu0 0
        %627 = vmatmul.mubr.bf16.gmra.mrb[0].mxu0 %v223
        %v628 = vpop.f32.mrb[0].mxu0
        %v629 = vadd.f32 %v588, %v628
        %v630 = vpop.f32.mrb[0].mxu0
        %v631 = vadd.f32 %v590, %v630
        %v632 = vpop.f32.mrb[0].mxu0
        %v633 = vpop.f32.mrb[0].mxu0
        %634 = vdwg.mxu0
        %635 = vmatprep.subr.bf16.mxu0 %v348
        %636 = vmatpush1.bf16.msra.mxu0 %v347
        %637 = vmatprep.subr.bf16.mxu0 %v350
        %638 = vmatpush1.bf16.msra.mxu0 %v349
        %639 = vmatprep.subr.bf16.mxu0 0
        %640 = vmatpush1.bf16.msra.mxu0 0
        %641 = vmatprep.subr.bf16.mxu0 0
        %642 = vmatpush1.bf16.msra.mxu0 0
        %643 = vmatprep.subr.bf16.mxu0 0
        %644 = vmatpush1.bf16.msra.mxu0 0
        %645 = vmatprep.subr.bf16.mxu0 0
        %646 = vmatpush1.bf16.msra.mxu0 0
        %647 = vmatprep.subr.bf16.mxu0 0
        %648 = vmatpush1.bf16.msra.mxu0 0
        %649 = vmatprep.subr.bf16.mxu0 0
        %650 = vmatpush1.bf16.msra.mxu0 0
        %651 = vmatprep.subr.bf16.mxu0 0
        %652 = vmatpush1.bf16.msra.mxu0 0
        %653 = vmatprep.subr.bf16.mxu0 0
        %654 = vmatpush1.bf16.msra.mxu0 0
        %655 = vmatprep.subr.bf16.mxu0 0
        %656 = vmatpush1.bf16.msra.mxu0 0
        %657 = vmatprep.subr.bf16.mxu0 0
        %658 = vmatpush1.bf16.msra.mxu0 0
        %659 = vmatprep.subr.bf16.mxu0 0
        %660 = vmatpush1.bf16.msra.mxu0 0
        %661 = vmatprep.subr.bf16.mxu0 0
        %662 = vmatpush1.bf16.msra.mxu0 0
        %663 = vmatprep.subr.bf16.mxu0 0
        %664 = vmatpush1.bf16.msra.mxu0 0
        %665 = vmatprep.subr.bf16.mxu0 0
        %666 = vmatpush1.bf16.msra.mxu0 0
        %667 = vmatprep.mubr.bf16.mxu0 0
        %668 = vmatmul.mubr.bf16.gmra.mrb[0].mxu0 %v427
        %v669 = vpop.f32.mrb[0].mxu0
        %v670 = vadd.f32 0.0, %v669
        %v671 = vpop.f32.mrb[0].mxu0
        %v672 = vadd.f32 0.0, %v671
        %v673 = vpop.f32.mrb[0].mxu0
        %v674 = vpop.f32.mrb[0].mxu0
        %675 = vdwg.mxu0
        %v676 = vadd.f32 %v629, %v670
        %v677 = vadd.f32 %v631, %v672
        %678 = vmatprep.subr.bf16.mxu0 %v419
        %679 = vmatpush1.bf16.msra.mxu0 %v418
        %680 = vmatprep.subr.bf16.mxu0 %v421
        %681 = vmatpush1.bf16.msra.mxu0 %v420
        %682 = vmatprep.subr.bf16.mxu0 0
        %683 = vmatpush1.bf16.msra.mxu0 0
        %684 = vmatprep.subr.bf16.mxu0 0
        %685 = vmatpush1.bf16.msra.mxu0 0
        %686 = vmatprep.subr.bf16.mxu0 0
        %687 = vmatpush1.bf16.msra.mxu0 0
        %688 = vmatprep.subr.bf16.mxu0 0
        %689 = vmatpush1.bf16.msra.mxu0 0
        %690 = vmatprep.subr.bf16.mxu0 0
        %691 = vmatpush1.bf16.msra.mxu0 0
        %692 = vmatprep.subr.bf16.mxu0 0
        %693 = vmatpush1.bf16.msra.mxu0 0
        %694 = vmatprep.subr.bf16.mxu0 0
        %695 = vmatpush1.bf16.msra.mxu0 0
        %696 = vmatprep.subr.bf16.mxu0 0
        %697 = vmatpush1.bf16.msra.mxu0 0
        %698 = vmatprep.subr.bf16.mxu0 0
        %699 = vmatpush1.bf16.msra.mxu0 0
        %700 = vmatprep.subr.bf16.mxu0 0
        %701 = vmatpush1.bf16.msra.mxu0 0
        %702 = vmatprep.subr.bf16.mxu0 0
        %703 = vmatpush1.bf16.msra.mxu0 0
        %704 = vmatprep.subr.bf16.mxu0 0
        %705 = vmatpush1.bf16.msra.mxu0 0
        %706 = vmatprep.subr.bf16.mxu0 0
        %707 = vmatpush1.bf16.msra.mxu0 0
        %708 = vmatprep.subr.bf16.mxu0 0
        %709 = vmatpush1.bf16.msra.mxu0 0
        %710 = vmatprep.mubr.bf16.mxu0 0
        %711 = vmatmul.mubr.bf16.gmra.mrb[0].mxu0 %v508
        %v712 = vpop.f32.mrb[0].mxu0
        %v713 = vadd.f32 0.0, %v712
        %v714 = vpop.f32.mrb[0].mxu0
        %v715 = vadd.f32 0.0, %v714
        %v716 = vpop.f32.mrb[0].mxu0
        %v717 = vpop.f32.mrb[0].mxu0
        %718 = vdwg.mxu0
        %v719 = vadd.f32 %v676, %v713
        %v720 = vadd.f32 %v677, %v715
        %v722 = vunpack.c.l.b16 %v188
        %v723 = vpack.c.b16 %v722, %v722
        %v725 = vshrl.u32 %v723, 16
        %v727 = vshll.u32 %v723, 16
        %v729 = vrot.slane %v727, 1
        %v730 = vor.u32 %v725, %v729
        %v732 = vsel %vm221, %v730, 0
        %734 = vmatprep.subr.bf16.mxu0 %v500
        %735 = vmatpush1.bf16.msra.mxu0 %v499
        %736 = vmatprep.subr.bf16.mxu0 %v502
        %737 = vmatpush1.bf16.msra.mxu0 %v501
        %738 = vmatprep.subr.bf16.mxu0 0
        %739 = vmatpush1.bf16.msra.mxu0 0
        %740 = vmatprep.subr.bf16.mxu0 0
        %741 = vmatpush1.bf16.msra.mxu0 0
        %742 = vmatprep.subr.bf16.mxu0 0
        %743 = vmatpush1.bf16.msra.mxu0 0
        %744 = vmatprep.subr.bf16.mxu0 0
        %745 = vmatpush1.bf16.msra.mxu0 0
        %746 = vmatprep.subr.bf16.mxu0 0
        %747 = vmatpush1.bf16.msra.mxu0 0
        %748 = vmatprep.subr.bf16.mxu0 0
        %749 = vmatpush1.bf16.msra.mxu0 0
        %750 = vmatprep.subr.bf16.mxu0 0
        %751 = vmatpush1.bf16.msra.mxu0 0
        %752 = vmatprep.subr.bf16.mxu0 0
        %753 = vmatpush1.bf16.msra.mxu0 0
        %754 = vmatprep.subr.bf16.mxu0 0
        %755 = vmatpush1.bf16.msra.mxu0 0
        %756 = vmatprep.subr.bf16.mxu0 0
        %757 = vmatpush1.bf16.msra.mxu0 0
        %758 = vmatprep.subr.bf16.mxu0 0
        %759 = vmatpush1.bf16.msra.mxu0 0
        %760 = vmatprep.subr.bf16.mxu0 0
        %761 = vmatpush1.bf16.msra.mxu0 0
        %762 = vmatprep.subr.bf16.mxu0 0
        %763 = vmatpush1.bf16.msra.mxu0 0
        %764 = vmatprep.subr.bf16.mxu0 0
        %765 = vmatpush1.bf16.msra.mxu0 0
        %766 = vmatprep.mubr.bf16.mxu0 0
        %767 = vmatmul.mubr.bf16.gmra.mrb[0].mxu0 %v732
        %v768 = vpop.f32.mrb[0].mxu0
        %v769 = vadd.f32 0.0, %v768
        %v770 = vpop.f32.mrb[0].mxu0
        %v771 = vadd.f32 0.0, %v770
        %v772 = vpop.f32.mrb[0].mxu0
        %v773 = vpop.f32.mrb[0].mxu0
        %774 = vdwg.mxu0
        %v775 = vadd.f32 %v719, %v769
        %v776 = vadd.f32 %v720, %v771
        %v777 = vmax.f32 %v551, %v775
        %v778 = vmax.f32 %v552, %v776
        %781 = vrot.lane.b32.xlu0 %v777, 44
        %v782 = vpop.permute.xlu0 %781
        %783 = vrot.lane.b32.xlu0 %v778, 44
        %v784 = vpop.permute.xlu0 %783
        %vm785 = vcmask 359424
        %v786 = vsel %vm785, %v782, %v784
        %v788 = vmax.f32 %v777, %v786
        %v790 = vlaneseq
        %v791 = vshrl.u32 %v790, 7
        %v792 = vsub.s32 0, %v791
        %v793 = vrot.slane %v191, %v792
        %v795 = vadd.f32 %v788, %v793
        %v796 = vmax.f32 %v795, 0.0
        %v797 = vpack.c.bf16 %v796, %v796
        %vm798 = vcmask 683008
        %vm799 = vsmask.f32 3328
        %vm800 = vmand %vm798, %vm799
        %v801 = vld [vmem:[%s185] sm:$0xf]
        %v802 = vsel %vm800, %v797, %v801
        %803 = vst [vmem:[%s185] sm:$0xf] %v802
        %v804 = vld [vmem:[#allocation2] sm:$0xff]
        %v805 = vld [vmem:[#allocation2 + $0x8] sm:$0xff]
        %v806 = vld [vmem:[#allocation2 + $0x10] sm:$0xff]
        %v807 = vld [vmem:[#allocation2 + $0x18] sm:$0xff]
        %v808 = vld [vmem:[%s196] sm:$0xff]
        %v809 = vld [vmem:[%s196 + $0x8] sm:$0xff]
        %v810 = vld [vmem:[%s196 + $0x10] sm:$0xff]
        %v811 = vld [vmem:[%s196 + $0x18] sm:$0xff]
        %v816 = vunpack.c.l.b16 %v808
        %v817 = vunpack.c.h.b16 %v808
        %v818 = vunpack.c.l.b16 %v809
        %v819 = vunpack.c.h.b16 %v809
        %v820 = vunpack.c.l.b16 %v810
        %v821 = vunpack.c.h.b16 %v810
        %v822 = vunpack.c.l.b16 %v811
        %v823 = vunpack.c.h.b16 %v811
        %v824 = vpack.c.b16 %v818, %v816
        %v825 = vpack.c.b16 %v819, %v817
        %v826 = vpack.c.b16 %v822, %v820
        %v827 = vpack.c.b16 %v823, %v821
        %832 = vmatprep.subr.bf16.mxu0 %v825
        %833 = vmatpush1.bf16.msra.mxu0 %v824
        %834 = vmatprep.subr.bf16.mxu0 %v827
        %835 = vmatpush1.bf16.msra.mxu0 %v826
        %836 = vmatprep.subr.bf16.mxu0 0
        %837 = vmatpush1.bf16.msra.mxu0 0
        %838 = vmatprep.subr.bf16.mxu0 0
        %839 = vmatpush1.bf16.msra.mxu0 0
        %840 = vmatprep.subr.bf16.mxu0 0
        %841 = vmatpush1.bf16.msra.mxu0 0
        %842 = vmatprep.subr.bf16.mxu0 0
        %843 = vmatpush1.bf16.msra.mxu0 0
        %844 = vmatprep.subr.bf16.mxu0 0
        %845 = vmatpush1.bf16.msra.mxu0 0
        %846 = vmatprep.subr.bf16.mxu0 0
        %847 = vmatpush1.bf16.msra.mxu0 0
        %848 = vmatprep.subr.bf16.mxu0 0
        %849 = vmatpush1.bf16.msra.mxu0 0
        %850 = vmatprep.subr.bf16.mxu0 0
        %851 = vmatpush1.bf16.msra.mxu0 0
        %852 = vmatprep.subr.bf16.mxu0 0
        %853 = vmatpush1.bf16.msra.mxu0 0
        %854 = vmatprep.subr.bf16.mxu0 0
        %855 = vmatpush1.bf16.msra.mxu0 0
        %856 = vmatprep.subr.bf16.mxu0 0
        %857 = vmatpush1.bf16.msra.mxu0 0
        %858 = vmatprep.subr.bf16.mxu0 0
        %859 = vmatpush1.bf16.msra.mxu0 0
        %860 = vmatprep.subr.bf16.mxu0 0
        %861 = vmatpush1.bf16.msra.mxu0 0
        %862 = vmatprep.subr.bf16.mxu0 0
        %863 = vmatpush1.bf16.msra.mxu0 0
        %864 = vmatprep.mubr.bf16.mxu0 0
        %865 = vmatmul.mubr.bf16.gmra.mrb[0].mxu0 %v427
        %v866 = vpop.f32.mrb[0].mxu0
        %v867 = vadd.f32 0.0, %v866
        %v868 = vpop.f32.mrb[0].mxu0
        %v869 = vadd.f32 0.0, %v868
        %v870 = vpop.f32.mrb[0].mxu0
        %v871 = vpop.f32.mrb[0].mxu0
        %872 = vdwg.mxu0
        %v877 = vunpack.c.l.b16 %v804
        %v878 = vunpack.c.h.b16 %v804
        %v879 = vunpack.c.l.b16 %v805
        %v880 = vunpack.c.h.b16 %v805
        %v881 = vunpack.c.l.b16 %v806
        %v882 = vunpack.c.h.b16 %v806
        %v883 = vunpack.c.l.b16 %v807
        %v884 = vunpack.c.h.b16 %v807
        %v885 = vpack.c.b16 %v879, %v877
        %v886 = vpack.c.b16 %v880, %v878
        %v887 = vpack.c.b16 %v883, %v881
        %v888 = vpack.c.b16 %v884, %v882
        %893 = vmatprep.subr.bf16.mxu0 %v886
        %894 = vmatpush1.bf16.msra.mxu0 %v885
        %895 = vmatprep.subr.bf16.mxu0 %v888
        %896 = vmatpush1.bf16.msra.mxu0 %v887
        %897 = vmatprep.subr.bf16.mxu0 0
        %898 = vmatpush1.bf16.msra.mxu0 0
        %899 = vmatprep.subr.bf16.mxu0 0
        %900 = vmatpush1.bf16.msra.mxu0 0
        %901 = vmatprep.subr.bf16.mxu0 0
        %902 = vmatpush1.bf16.msra.mxu0 0
        %903 = vmatprep.subr.bf16.mxu0 0
        %904 = vmatpush1.bf16.msra.mxu0 0
        %905 = vmatprep.subr.bf16.mxu0 0
        %906 = vmatpush1.bf16.msra.mxu0 0
        %907 = vmatprep.subr.bf16.mxu0 0
        %908 = vmatpush1.bf16.msra.mxu0 0
        %909 = vmatprep.subr.bf16.mxu0 0
        %910 = vmatpush1.bf16.msra.mxu0 0
        %911 = vmatprep.subr.bf16.mxu0 0
        %912 = vmatpush1.bf16.msra.mxu0 0
        %913 = vmatprep.subr.bf16.mxu0 0
        %914 = vmatpush1.bf16.msra.mxu0 0
        %915 = vmatprep.subr.bf16.mxu0 0
        %916 = vmatpush1.bf16.msra.mxu0 0
        %917 = vmatprep.subr.bf16.mxu0 0
        %918 = vmatpush1.bf16.msra.mxu0 0
        %919 = vmatprep.subr.bf16.mxu0 0
        %920 = vmatpush1.bf16.msra.mxu0 0
        %921 = vmatprep.subr.bf16.mxu0 0
        %922 = vmatpush1.bf16.msra.mxu0 0
        %923 = vmatprep.subr.bf16.mxu0 0
        %924 = vmatpush1.bf16.msra.mxu0 0
        %925 = vmatprep.mubr.bf16.mxu0 0
        %926 = vmatmul.mubr.bf16.gmra.mrb[0].mxu0 %v356
        %v927 = vpop.f32.mrb[0].mxu0
        %v928 = vadd.f32 %v867, %v927
        %v929 = vpop.f32.mrb[0].mxu0
        %v930 = vadd.f32 %v869, %v929
        %v931 = vpop.f32.mrb[0].mxu0
        %v932 = vpop.f32.mrb[0].mxu0
        %933 = vdwg.mxu0
        %v934 = vld [vmem:[%s330] sm:$0xff]
        %v935 = vld [vmem:[%s330 + $0x8] sm:$0xff]
        %v936 = vld [vmem:[%s330 + $0x10] sm:$0xff]
        %v937 = vld [vmem:[%s330 + $0x18] sm:$0xff]
        %v942 = vunpack.c.l.b16 %v934
        %v943 = vunpack.c.h.b16 %v934
        %v944 = vunpack.c.l.b16 %v935
        %v945 = vunpack.c.h.b16 %v935
        %v946 = vunpack.c.l.b16 %v936
        %v947 = vunpack.c.h.b16 %v936
        %v948 = vunpack.c.l.b16 %v937
        %v949 = vunpack.c.h.b16 %v937
        %v950 = vpack.c.b16 %v944, %v942
        %v951 = vpack.c.b16 %v945, %v943
        %v952 = vpack.c.b16 %v948, %v946
        %v953 = vpack.c.b16 %v949, %v947
        %958 = vmatprep.subr.bf16.mxu0 %v951
        %959 = vmatpush1.bf16.msra.mxu0 %v950
        %960 = vmatprep.subr.bf16.mxu0 %v953
        %961 = vmatpush1.bf16.msra.mxu0 %v952
        %962 = vmatprep.subr.bf16.mxu0 0
        %963 = vmatpush1.bf16.msra.mxu0 0
        %964 = vmatprep.subr.bf16.mxu0 0
        %965 = vmatpush1.bf16.msra.mxu0 0
        %966 = vmatprep.subr.bf16.mxu0 0
        %967 = vmatpush1.bf16.msra.mxu0 0
        %968 = vmatprep.subr.bf16.mxu0 0
        %969 = vmatpush1.bf16.msra.mxu0 0
        %970 = vmatprep.subr.bf16.mxu0 0
        %971 = vmatpush1.bf16.msra.mxu0 0
        %972 = vmatprep.subr.bf16.mxu0 0
        %973 = vmatpush1.bf16.msra.mxu0 0
        %974 = vmatprep.subr.bf16.mxu0 0
        %975 = vmatpush1.bf16.msra.mxu0 0
        %976 = vmatprep.subr.bf16.mxu0 0
        %977 = vmatpush1.bf16.msra.mxu0 0
        %978 = vmatprep.subr.bf16.mxu0 0
        %979 = vmatpush1.bf16.msra.mxu0 0
        %980 = vmatprep.subr.bf16.mxu0 0
        %981 = vmatpush1.bf16.msra.mxu0 0
        %982 = vmatprep.subr.bf16.mxu0 0
        %983 = vmatpush1.bf16.msra.mxu0 0
        %984 = vmatprep.subr.bf16.mxu0 0
        %985 = vmatpush1.bf16.msra.mxu0 0
        %986 = vmatprep.subr.bf16.mxu0 0
        %987 = vmatpush1.bf16.msra.mxu0 0
        %988 = vmatprep.subr.bf16.mxu0 0
        %989 = vmatpush1.bf16.msra.mxu0 0
        %990 = vmatprep.mubr.bf16.mxu0 0
        %991 = vmatmul.mubr.bf16.gmra.mrb[0].mxu0 %v508
        %v992 = vpop.f32.mrb[0].mxu0
        %v993 = vadd.f32 0.0, %v992
        %v994 = vpop.f32.mrb[0].mxu0
        %v995 = vadd.f32 0.0, %v994
        %v996 = vpop.f32.mrb[0].mxu0
        %v997 = vpop.f32.mrb[0].mxu0
        %998 = vdwg.mxu0
        %v999 = vadd.f32 %v928, %v993
        %v1000 = vadd.f32 %v930, %v995
        %v1001 = vld [vmem:[%s401] sm:$0xff]
        %v1002 = vld [vmem:[%s401 + $0x8] sm:$0xff]
        %v1003 = vld [vmem:[%s401 + $0x10] sm:$0xff]
        %v1004 = vld [vmem:[%s401 + $0x18] sm:$0xff]
        %v1009 = vunpack.c.l.b16 %v1001
        %v1010 = vunpack.c.h.b16 %v1001
        %v1011 = vunpack.c.l.b16 %v1002
        %v1012 = vunpack.c.h.b16 %v1002
        %v1013 = vunpack.c.l.b16 %v1003
        %v1014 = vunpack.c.h.b16 %v1003
        %v1015 = vunpack.c.l.b16 %v1004
        %v1016 = vunpack.c.h.b16 %v1004
        %v1017 = vpack.c.b16 %v1011, %v1009
        %v1018 = vpack.c.b16 %v1012, %v1010
        %v1019 = vpack.c.b16 %v1015, %v1013
        %v1020 = vpack.c.b16 %v1016, %v1014
        %1025 = vmatprep.subr.bf16.mxu0 %v1018
        %1026 = vmatpush1.bf16.msra.mxu0 %v1017
        %1027 = vmatprep.subr.bf16.mxu0 %v1020
        %1028 = vmatpush1.bf16.msra.mxu0 %v1019
        %1029 = vmatprep.subr.bf16.mxu0 0
        %1030 = vmatpush1.bf16.msra.mxu0 0
        %1031 = vmatprep.subr.bf16.mxu0 0
        %1032 = vmatpush1.bf16.msra.mxu0 0
        %1033 = vmatprep.subr.bf16.mxu0 0
        %1034 = vmatpush1.bf16.msra.mxu0 0
        %1035 = vmatprep.subr.bf16.mxu0 0
        %1036 = vmatpush1.bf16.msra.mxu0 0
        %1037 = vmatprep.subr.bf16.mxu0 0
        %1038 = vmatpush1.bf16.msra.mxu0 0
        %1039 = vmatprep.subr.bf16.mxu0 0
        %1040 = vmatpush1.bf16.msra.mxu0 0
        %1041 = vmatprep.subr.bf16.mxu0 0
        %1042 = vmatpush1.bf16.msra.mxu0 0
        %1043 = vmatprep.subr.bf16.mxu0 0
        %1044 = vmatpush1.bf16.msra.mxu0 0
        %1045 = vmatprep.subr.bf16.mxu0 0
        %1046 = vmatpush1.bf16.msra.mxu0 0
        %1047 = vmatprep.subr.bf16.mxu0 0
        %1048 = vmatpush1.bf16.msra.mxu0 0
        %1049 = vmatprep.subr.bf16.mxu0 0
        %1050 = vmatpush1.bf16.msra.mxu0 0
        %1051 = vmatprep.subr.bf16.mxu0 0
        %1052 = vmatpush1.bf16.msra.mxu0 0
        %1053 = vmatprep.subr.bf16.mxu0 0
        %1054 = vmatpush1.bf16.msra.mxu0 0
        %1055 = vmatprep.subr.bf16.mxu0 0
        %1056 = vmatpush1.bf16.msra.mxu0 0
        %1057 = vmatprep.mubr.bf16.mxu0 0
        %1058 = vmatmul.mubr.bf16.gmra.mrb[0].mxu0 %v732
        %v1059 = vpop.f32.mrb[0].mxu0
        %v1060 = vadd.f32 0.0, %v1059
        %v1061 = vpop.f32.mrb[0].mxu0
        %v1062 = vadd.f32 0.0, %v1061
        %v1063 = vpop.f32.mrb[0].mxu0
        %v1064 = vpop.f32.mrb[0].mxu0
        %1065 = vdwg.mxu0
        %v1066 = vadd.f32 %v999, %v1060
        %v1067 = vadd.f32 %v1000, %v1062
        %v1068 = vld [vmem:[%s472] sm:$0xff]
        %v1069 = vld [vmem:[%s472 + $0x8] sm:$0xff]
        %v1070 = vld [vmem:[%s472 + $0x10] sm:$0xff]
        %v1071 = vld [vmem:[%s472 + $0x18] sm:$0xff]
        %v1073 = vunpack.c.l.b16 %v189
        %v1074 = vpack.c.b16 %v1073, %v1073
        %v1076 = vshrl.u32 %v1074, 16
        %v1078 = vshll.u32 %v1074, 16
        %v1080 = vrot.slane %v1078, 1
        %v1081 = vor.u32 %v1076, %v1080
        %v1086 = vunpack.c.l.b16 %v1068
        %v1087 = vunpack.c.h.b16 %v1068
        %v1088 = vunpack.c.l.b16 %v1069
        %v1089 = vunpack.c.h.b16 %v1069
        %v1090 = vunpack.c.l.b16 %v1070
        %v1091 = vunpack.c.h.b16 %v1070
        %v1092 = vunpack.c.l.b16 %v1071
        %v1093 = vunpack.c.h.b16 %v1071
        %v1094 = vpack.c.b16 %v1088, %v1086
        %v1095 = vpack.c.b16 %v1089, %v1087
        %v1096 = vpack.c.b16 %v1092, %v1090
        %v1097 = vpack.c.b16 %v1093, %v1091
        %v1103 = vsel %vm221, %v1081, 0
        %1105 = vmatprep.subr.bf16.mxu0 %v1095
        %1106 = vmatpush1.bf16.msra.mxu0 %v1094
        %1107 = vmatprep.subr.bf16.mxu0 %v1097
        %1108 = vmatpush1.bf16.msra.mxu0 %v1096
        %1109 = vmatprep.subr.bf16.mxu0 0
        %1110 = vmatpush1.bf16.msra.mxu0 0
        %1111 = vmatprep.subr.bf16.mxu0 0
        %1112 = vmatpush1.bf16.msra.mxu0 0
        %1113 = vmatprep.subr.bf16.mxu0 0
        %1114 = vmatpush1.bf16.msra.mxu0 0
        %1115 = vmatprep.subr.bf16.mxu0 0
        %1116 = vmatpush1.bf16.msra.mxu0 0
        %1117 = vmatprep.subr.bf16.mxu0 0
        %1118 = vmatpush1.bf16.msra.mxu0 0
        %1119 = vmatprep.subr.bf16.mxu0 0
        %1120 = vmatpush1.bf16.msra.mxu0 0
        %1121 = vmatprep.subr.bf16.mxu0 0
        %1122 = vmatpush1.bf16.msra.mxu0 0
        %1123 = vmatprep.subr.bf16.mxu0 0
        %1124 = vmatpush1.bf16.msra.mxu0 0
        %1125 = vmatprep.subr.bf16.mxu0 0
        %1126 = vmatpush1.bf16.msra.mxu0 0
        %1127 = vmatprep.subr.bf16.mxu0 0
        %1128 = vmatpush1.bf16.msra.mxu0 0
        %1129 = vmatprep.subr.bf16.mxu0 0
        %1130 = vmatpush1.bf16.msra.mxu0 0
        %1131 = vmatprep.subr.bf16.mxu0 0
        %1132 = vmatpush1.bf16.msra.mxu0 0
        %1133 = vmatprep.subr.bf16.mxu0 0
        %1134 = vmatpush1.bf16.msra.mxu0 0
        %1135 = vmatprep.subr.bf16.mxu0 0
        %1136 = vmatpush1.bf16.msra.mxu0 0
        %1137 = vmatprep.mubr.bf16.mxu0 0
        %1138 = vmatmul.mubr.bf16.gmra.mrb[0].mxu0 %v1103
        %v1139 = vpop.f32.mrb[0].mxu0
        %v1140 = vadd.f32 0.0, %v1139
        %v1141 = vpop.f32.mrb[0].mxu0
        %v1142 = vadd.f32 0.0, %v1141
        %v1143 = vpop.f32.mrb[0].mxu0
        %v1144 = vpop.f32.mrb[0].mxu0
        %1145 = vdwg.mxu0
        %v1146 = vadd.f32 %v1066, %v1140
        %v1147 = vadd.f32 %v1067, %v1142
        %1148 = vmatprep.subr.bf16.mxu0 %v825
        %1149 = vmatpush1.bf16.msra.mxu0 %v824
        %1150 = vmatprep.subr.bf16.mxu0 %v827
        %1151 = vmatpush1.bf16.msra.mxu0 %v826
        %1152 = vmatprep.subr.bf16.mxu0 0
        %1153 = vmatpush1.bf16.msra.mxu0 0
        %1154 = vmatprep.subr.bf16.mxu0 0
        %1155 = vmatpush1.bf16.msra.mxu0 0
        %1156 = vmatprep.subr.bf16.mxu0 0
        %1157 = vmatpush1.bf16.msra.mxu0 0
        %1158 = vmatprep.subr.bf16.mxu0 0
        %1159 = vmatpush1.bf16.msra.mxu0 0
        %1160 = vmatprep.subr.bf16.mxu0 0
        %1161 = vmatpush1.bf16.msra.mxu0 0
        %1162 = vmatprep.subr.bf16.mxu0 0
        %1163 = vmatpush1.bf16.msra.mxu0 0
        %1164 = vmatprep.subr.bf16.mxu0 0
        %1165 = vmatpush1.bf16.msra.mxu0 0
        %1166 = vmatprep.subr.bf16.mxu0 0
        %1167 = vmatpush1.bf16.msra.mxu0 0
        %1168 = vmatprep.subr.bf16.mxu0 0
        %1169 = vmatpush1.bf16.msra.mxu0 0
        %1170 = vmatprep.subr.bf16.mxu0 0
        %1171 = vmatpush1.bf16.msra.mxu0 0
        %1172 = vmatprep.subr.bf16.mxu0 0
        %1173 = vmatpush1.bf16.msra.mxu0 0
        %1174 = vmatprep.subr.bf16.mxu0 0
        %1175 = vmatpush1.bf16.msra.mxu0 0
        %1176 = vmatprep.subr.bf16.mxu0 0
        %1177 = vmatpush1.bf16.msra.mxu0 0
        %1178 = vmatprep.subr.bf16.mxu0 0
        %1179 = vmatpush1.bf16.msra.mxu0 0
        %1180 = vmatprep.mubr.bf16.mxu0 0
        %1181 = vmatmul.mubr.bf16.gmra.mrb[0].mxu0 %v508
        %v1182 = vpop.f32.mrb[0].mxu0
        %v1183 = vadd.f32 0.0, %v1182
        %v1184 = vpop.f32.mrb[0].mxu0
        %v1185 = vadd.f32 0.0, %v1184
        %v1186 = vpop.f32.mrb[0].mxu0
        %v1187 = vpop.f32.mrb[0].mxu0
        %1188 = vdwg.mxu0
        %1189 = vmatprep.subr.bf16.mxu0 %v886
        %1190 = vmatpush1.bf16.msra.mxu0 %v885
        %1191 = vmatprep.subr.bf16.mxu0 %v888
        %1192 = vmatpush1.bf16.msra.mxu0 %v887
        %1193 = vmatprep.subr.bf16.mxu0 0
        %1194 = vmatpush1.bf16.msra.mxu0 0
        %1195 = vmatprep.subr.bf16.mxu0 0
        %1196 = vmatpush1.bf16.msra.mxu0 0
        %1197 = vmatprep.subr.bf16.mxu0 0
        %1198 = vmatpush1.bf16.msra.mxu0 0
        %1199 = vmatprep.subr.bf16.mxu0 0
        %1200 = vmatpush1.bf16.msra.mxu0 0
        %1201 = vmatprep.subr.bf16.mxu0 0
        %1202 = vmatpush1.bf16.msra.mxu0 0
        %1203 = vmatprep.subr.bf16.mxu0 0
        %1204 = vmatpush1.bf16.msra.mxu0 0
        %1205 = vmatprep.subr.bf16.mxu0 0
        %1206 = vmatpush1.bf16.msra.mxu0 0
        %1207 = vmatprep.subr.bf16.mxu0 0
        %1208 = vmatpush1.bf16.msra.mxu0 0
        %1209 = vmatprep.subr.bf16.mxu0 0
        %1210 = vmatpush1.bf16.msra.mxu0 0
        %1211 = vmatprep.subr.bf16.mxu0 0
        %1212 = vmatpush1.bf16.msra.mxu0 0
        %1213 = vmatprep.subr.bf16.mxu0 0
        %1214 = vmatpush1.bf16.msra.mxu0 0
        %1215 = vmatprep.subr.bf16.mxu0 0
        %1216 = vmatpush1.bf16.msra.mxu0 0
        %1217 = vmatprep.subr.bf16.mxu0 0
        %1218 = vmatpush1.bf16.msra.mxu0 0
        %1219 = vmatprep.subr.bf16.mxu0 0
        %1220 = vmatpush1.bf16.msra.mxu0 0
        %1221 = vmatprep.mubr.bf16.mxu0 0
        %1222 = vmatmul.mubr.bf16.gmra.mrb[0].mxu0 %v427
        %v1223 = vpop.f32.mrb[0].mxu0
        %v1224 = vadd.f32 %v1183, %v1223
        %v1225 = vpop.f32.mrb[0].mxu0
        %v1226 = vadd.f32 %v1185, %v1225
        %v1227 = vpop.f32.mrb[0].mxu0
        %v1228 = vpop.f32.mrb[0].mxu0
        %1229 = vdwg.mxu0
        %1230 = vmatprep.subr.bf16.mxu0 %v951
        %1231 = vmatpush1.bf16.msra.mxu0 %v950
        %1232 = vmatprep.subr.bf16.mxu0 %v953
        %1233 = vmatpush1.bf16.msra.mxu0 %v952
        %1234 = vmatprep.subr.bf16.mxu0 0
        %1235 = vmatpush1.bf16.msra.mxu0 0
        %1236 = vmatprep.subr.bf16.mxu0 0
        %1237 = vmatpush1.bf16.msra.mxu0 0
        %1238 = vmatprep.subr.bf16.mxu0 0
        %1239 = vmatpush1.bf16.msra.mxu0 0
        %1240 = vmatprep.subr.bf16.mxu0 0
        %1241 = vmatpush1.bf16.msra.mxu0 0
        %1242 = vmatprep.subr.bf16.mxu0 0
        %1243 = vmatpush1.bf16.msra.mxu0 0
        %1244 = vmatprep.subr.bf16.mxu0 0
        %1245 = vmatpush1.bf16.msra.mxu0 0
        %1246 = vmatprep.subr.bf16.mxu0 0
        %1247 = vmatpush1.bf16.msra.mxu0 0
        %1248 = vmatprep.subr.bf16.mxu0 0
        %1249 = vmatpush1.bf16.msra.mxu0 0
        %1250 = vmatprep.subr.bf16.mxu0 0
        %1251 = vmatpush1.bf16.msra.mxu0 0
        %1252 = vmatprep.subr.bf16.mxu0 0
        %1253 = vmatpush1.bf16.msra.mxu0 0
        %1254 = vmatprep.subr.bf16.mxu0 0
        %1255 = vmatpush1.bf16.msra.mxu0 0
        %1256 = vmatprep.subr.bf16.mxu0 0
        %1257 = vmatpush1.bf16.msra.mxu0 0
        %1258 = vmatprep.subr.bf16.mxu0 0
        %1259 = vmatpush1.bf16.msra.mxu0 0
        %1260 = vmatprep.subr.bf16.mxu0 0
        %1261 = vmatpush1.bf16.msra.mxu0 0
        %1262 = vmatprep.mubr.bf16.mxu0 0
        %1263 = vmatmul.mubr.bf16.gmra.mrb[0].mxu0 %v732
        %v1264 = vpop.f32.mrb[0].mxu0
        %v1265 = vadd.f32 0.0, %v1264
        %v1266 = vpop.f32.mrb[0].mxu0
        %v1267 = vadd.f32 0.0, %v1266
        %v1268 = vpop.f32.mrb[0].mxu0
        %v1269 = vpop.f32.mrb[0].mxu0
        %1270 = vdwg.mxu0
        %v1271 = vadd.f32 %v1224, %v1265
        %v1272 = vadd.f32 %v1226, %v1267
        %1273 = vmatprep.subr.bf16.mxu0 %v1018
        %1274 = vmatpush1.bf16.msra.mxu0 %v1017
        %1275 = vmatprep.subr.bf16.mxu0 %v1020
        %1276 = vmatpush1.bf16.msra.mxu0 %v1019
        %1277 = vmatprep.subr.bf16.mxu0 0
        %1278 = vmatpush1.bf16.msra.mxu0 0
        %1279 = vmatprep.subr.bf16.mxu0 0
        %1280 = vmatpush1.bf16.msra.mxu0 0
        %1281 = vmatprep.subr.bf16.mxu0 0
        %1282 = vmatpush1.bf16.msra.mxu0 0
        %1283 = vmatprep.subr.bf16.mxu0 0
        %1284 = vmatpush1.bf16.msra.mxu0 0
        %1285 = vmatprep.subr.bf16.mxu0 0
        %1286 = vmatpush1.bf16.msra.mxu0 0
        %1287 = vmatprep.subr.bf16.mxu0 0
        %1288 = vmatpush1.bf16.msra.mxu0 0
        %1289 = vmatprep.subr.bf16.mxu0 0
        %1290 = vmatpush1.bf16.msra.mxu0 0
        %1291 = vmatprep.subr.bf16.mxu0 0
        %1292 = vmatpush1.bf16.msra.mxu0 0
        %1293 = vmatprep.subr.bf16.mxu0 0
        %1294 = vmatpush1.bf16.msra.mxu0 0
        %1295 = vmatprep.subr.bf16.mxu0 0
        %1296 = vmatpush1.bf16.msra.mxu0 0
        %1297 = vmatprep.subr.bf16.mxu0 0
        %1298 = vmatpush1.bf16.msra.mxu0 0
        %1299 = vmatprep.subr.bf16.mxu0 0
        %1300 = vmatpush1.bf16.msra.mxu0 0
        %1301 = vmatprep.subr.bf16.mxu0 0
        %1302 = vmatpush1.bf16.msra.mxu0 0
        %1303 = vmatprep.subr.bf16.mxu0 0
        %1304 = vmatpush1.bf16.msra.mxu0 0
        %1305 = vmatprep.mubr.bf16.mxu0 0
        %1306 = vmatmul.mubr.bf16.gmra.mrb[0].mxu0 %v1103
        %v1307 = vpop.f32.mrb[0].mxu0
        %v1308 = vadd.f32 0.0, %v1307
        %v1309 = vpop.f32.mrb[0].mxu0
        %v1310 = vadd.f32 0.0, %v1309
        %v1311 = vpop.f32.mrb[0].mxu0
        %v1312 = vpop.f32.mrb[0].mxu0
        %1313 = vdwg.mxu0
        %v1314 = vadd.f32 %v1271, %v1308
        %v1315 = vadd.f32 %v1272, %v1310
        %v1317 = vunpack.c.l.b16 %v190
        %v1318 = vpack.c.b16 %v1317, %v1317
        %v1320 = vshrl.u32 %v1318, 16
        %v1322 = vshll.u32 %v1318, 16
        %v1324 = vrot.slane %v1322, 1
        %v1325 = vor.u32 %v1320, %v1324
        %v1327 = vsel %vm221, %v1325, 0
        %1329 = vmatprep.subr.bf16.mxu0 %v1095
        %1330 = vmatpush1.bf16.msra.mxu0 %v1094
        %1331 = vmatprep.subr.bf16.mxu0 %v1097
        %1332 = vmatpush1.bf16.msra.mxu0 %v1096
        %1333 = vmatprep.subr.bf16.mxu0 0
        %1334 = vmatpush1.bf16.msra.mxu0 0
        %1335 = vmatprep.subr.bf16.mxu0 0
        %1336 = vmatpush1.bf16.msra.mxu0 0
        %1337 = vmatprep.subr.bf16.mxu0 0
        %1338 = vmatpush1.bf16.msra.mxu0 0
        %1339 = vmatprep.subr.bf16.mxu0 0
        %1340 = vmatpush1.bf16.msra.mxu0 0
        %1341 = vmatprep.subr.bf16.mxu0 0
        %1342 = vmatpush1.bf16.msra.mxu0 0
        %1343 = vmatprep.subr.bf16.mxu0 0
        %1344 = vmatpush1.bf16.msra.mxu0 0
        %1345 = vmatprep.subr.bf16.mxu0 0
        %1346 = vmatpush1.bf16.msra.mxu0 0
        %1347 = vmatprep.subr.bf16.mxu0 0
        %1348 = vmatpush1.bf16.msra.mxu0 0
        %1349 = vmatprep.subr.bf16.mxu0 0
        %1350 = vmatpush1.bf16.msra.mxu0 0
        %1351 = vmatprep.subr.bf16.mxu0 0
        %1352 = vmatpush1.bf16.msra.mxu0 0
        %1353 = vmatprep.subr.bf16.mxu0 0
        %1354 = vmatpush1.bf16.msra.mxu0 0
        %1355 = vmatprep.subr.bf16.mxu0 0
        %1356 = vmatpush1.bf16.msra.mxu0 0
        %1357 = vmatprep.subr.bf16.mxu0 0
        %1358 = vmatpush1.bf16.msra.mxu0 0
        %1359 = vmatprep.subr.bf16.mxu0 0
        %1360 = vmatpush1.bf16.msra.mxu0 0
        %1361 = vmatprep.mubr.bf16.mxu0 0
        %1362 = vmatmul.mubr.bf16.gmra.mrb[0].mxu0 %v1327
        %v1363 = vpop.f32.mrb[0].mxu0
        %v1364 = vadd.f32 0.0, %v1363
        %v1365 = vpop.f32.mrb[0].mxu0
        %v1366 = vadd.f32 0.0, %v1365
        %v1367 = vpop.f32.mrb[0].mxu0
        %v1368 = vpop.f32.mrb[0].mxu0
        %1369 = vdwg.mxu0
        %v1370 = vadd.f32 %v1314, %v1364
        %v1371 = vadd.f32 %v1315, %v1366
        %v1372 = vmax.f32 %v1146, %v1370
        %v1373 = vmax.f32 %v1147, %v1371
        %1376 = vrot.lane.b32.xlu0 %v1372, 44
        %v1377 = vpop.permute.xlu0 %1376
        %1378 = vrot.lane.b32.xlu0 %v1373, 44
        %v1379 = vpop.permute.xlu0 %1378
        %v1380 = vsel %vm785, %v1377, %v1379
        %v1382 = vmax.f32 %v1372, %v1380
        %v1383 = vadd.f32 %v1382, %v793
        %v1384 = vmax.f32 %v1383, 0.0
        %v1385 = vpack.c.bf16 %v1384, %v1384
        %v1387 = vunpack.c.l.b16 %v1385
        %v1388 = vpack.c.b16 %v1387, %v1387
        %v1390 = vshll.u32 %v1388, 16
        %v1392 = vrot.slane %v1390, 5
        %v1393 = vshrl.u32 %v1388, 16
        %v1395 = vrot.slane %v1393, 4
        %v1396 = vor.u32 %v1395, %v1392
        %v1397 = vrot.slane %v1396, 4
        %vm1400 = vcmask 683011
        %vm1401 = vsmask.f32 7950
        %vm1402 = vmand %vm1400, %vm1401
        %v1403 = vld [vmem:[%s185] sm:$0x8]
        %v1404 = vsel %vm1402, %v1392, %v1403
        %1405 = vst [vmem:[%s185] sm:$0x8] %v1404
        %vm1406 = vcmask 681984
        %1407 = vst.msk [vmem:[%s185 + $0x4] sm:$0x7] %vm1406, %v1397
        %p1408 = scmp.lt.s32.totalorder %s15, 1
        %s1409 = scalar_select %p1408, %s15, 1
        %s1410 = smul.addr %s1409, 2
        %s1411 = smul.addr %s1410, 4
        %s1412 = scalar_lea.vmem %s3, %s1411
        // Predicated region
        $region37: #{net_forward.3} parent=31 // pred_check
          %p1413 = pneg %p101
        $region38: #{net_forward.3} parent=31 // pred_check_branch
          %1415 = sbr.rel (%p1413) target = $region40
        $region39: #{net_forward.3} parent=31 // pred_region
          _
        $region40: #{net_forward.3} parent=31 // pred_fallthru
          _
      $region32: #{net_forward.3} parent=5 // pred_fallthru
        _
      %p1416 = scmp.le.s32.totalorder 2, %s10
      // Predicated region
      $region41: #{net_forward.3} parent=5 // pred_check
        %p1417 = pneg %p1416
      $region42: #{net_forward.3} parent=5 // pred_check_branch
        %1419 = sbr.rel (%p1417) target = $region44
      $region43: #{net_forward.3} parent=5 // pred_region
        %s1420 = ssub.s32 %s10, 2
        // Predicated region
        $region45: #{net_forward.3} parent=43 // pred_check
          %p1421 = pneg %p107
        $region46: #{net_forward.3} parent=43 // pred_check_branch
          %1423 = sbr.rel (%p1421) target = $region48
        $region47: #{net_forward.3} parent=43 // pred_region
          %p1424 = scmp.lt.s32.totalorder %s16, 1
          %s1425 = scalar_select %p1424, %s16, 1
          %s1426 = smul.addr %s1425, 2
          %s1427 = smul.addr %s1426, 4
          %s1428 = scalar_lea.vmem %s3, %s1427
        $region48: #{net_forward.3} parent=43 // pred_fallthru
          _
      $region44: #{net_forward.3} parent=5 // pred_fallthru
        _
    $region6: #{net_forward.3} parent=1 // loop_footer
      %s14 = sadd.s32 1, %s10
    $region7: #{net_forward.3} parent=1 // loop_footer_branch
      %9 = sbr.rel target = $region3
    $region8: #{net_forward.3} parent=1 // loop_exit
      _
    %1429 = vsyncpa [#allocation3], 1
    %s1430 = scalar_lea.sflag [#allocation3], 1
    %1431 = vsyncpa %s1430, 1

// kernel: net_forward.5
$region0: #{net_forward.5}
  #allocation0 [shape = 'u32[]', space=smem, size = 0x4, offset = 0x4, fixed_abs, tag = 'smem constant byte address 0x4 - core index']
  #allocation1 [shape = 'u32[144,128]{1,0:T(1,128)}', space=vmem, size = 0x12000, scoped, tag = 'internal scratch']
  %s0 = inlined_call_operand.vmem [shape: bf16[2,400], index: 0, kind: input, shape index: {}]
  %s1 = inlined_call_operand.vmem [shape: bf16[400,120], index: 1, kind: input, shape index: {}]
  %s2 = inlined_call_operand.vmem [shape: f32[1,120], index: 2, kind: input, shape index: {}]
  %s3 = inlined_call_operand.vmem [shape: bf16[120,84], index: 3, kind: input, shape index: {}]
  %s4 = inlined_call_operand.vmem [shape: f32[1,84], index: 4, kind: input, shape index: {}]
  %s5 = inlined_call_operand.vmem [shape: bf16[84,10], index: 5, kind: input, shape index: {}]
  %s6 = inlined_call_operand.vmem [shape: f32[1,10], index: 6, kind: input, shape index: {}]
  %s7 = inlined_call_operand.hbm [shape: f32[2,10], index: 7, kind: output, shape index: {}]
  %s8 = sld [smem:[#allocation0]]
  $region38: #{net_forward.5} parent=0
    _
  %s10 = ssub.s32 1, %s8
  %s11 = scalar_select 0, %s10, %s8
  $region1: #{net_forward.5} parent=0
    #allocation2 [shape = 'u8[1024]{0}', space=vmem, size = 0x400, scoped, tag = 'output window, operand 0, single buffered']
    #allocation3 [shape = 's32[1]{0}', space=sflag, size = 0x4, scoped, tag = 'scoped memory for net_forward.5']
    %12 = vsyncpa [#allocation3], 0
    // Predicated region
    $region2: #{net_forward.5} parent=1 // pred_check
      _
    $region3: #{net_forward.5} parent=1 // pred_check_branch
      %14 = sbr.rel (0) target = $region5
    $region4: #{net_forward.5} parent=1 // pred_region
      _
    $region5: #{net_forward.5} parent=1 // pred_fallthru
      _
    // Predicated region
    $region6: #{net_forward.5} parent=1 // pred_check
      _
    $region7: #{net_forward.5} parent=1 // pred_check_branch
      %16 = sbr.rel (0) target = $region9
    $region8: #{net_forward.5} parent=1 // pred_region
      _
    $region9: #{net_forward.5} parent=1 // pred_fallthru
      _
    // Predicated region
    $region10: #{net_forward.5} parent=1 // pred_check
      _
    $region11: #{net_forward.5} parent=1 // pred_check_branch
      %18 = sbr.rel (0) target = $region13
    $region12: #{net_forward.5} parent=1 // pred_region
      _
    $region13: #{net_forward.5} parent=1 // pred_fallthru
      _
    // Predicated region
    $region14: #{net_forward.5} parent=1 // pred_check
      _
    $region15: #{net_forward.5} parent=1 // pred_check_branch
      %20 = sbr.rel (0) target = $region17
    $region16: #{net_forward.5} parent=1 // pred_region
      _
    $region17: #{net_forward.5} parent=1 // pred_fallthru
      _
    // Predicated region
    $region18: #{net_forward.5} parent=1 // pred_check
      _
    $region19: #{net_forward.5} parent=1 // pred_check_branch
      %22 = sbr.rel (0) target = $region21
    $region20: #{net_forward.5} parent=1 // pred_region
      _
    $region21: #{net_forward.5} parent=1 // pred_fallthru
      _
    // Predicated region
    $region22: #{net_forward.5} parent=1 // pred_check
      _
    $region23: #{net_forward.5} parent=1 // pred_check_branch
      %24 = sbr.rel (0) target = $region25
    $region24: #{net_forward.5} parent=1 // pred_region
      _
    $region25: #{net_forward.5} parent=1 // pred_fallthru
      _
    // Predicated region
    $region26: #{net_forward.5} parent=1 // pred_check
      _
    $region27: #{net_forward.5} parent=1 // pred_check_branch
      %26 = sbr.rel (0) target = $region29
    $region28: #{net_forward.5} parent=1 // pred_region
      _
    $region29: #{net_forward.5} parent=1 // pred_fallthru
      _
    %v28 = vld [vmem:[%s0] sm:$0xf]
    %v29 = vld [vmem:[%s1] sm:$0xf]
    %v30 = vld [vmem:[%s1 + $0x4] sm:$0xf]
    %v31 = vld [vmem:[%s1 + $0x8] sm:$0xf]
    %v32 = vld [vmem:[%s1 + $0xc] sm:$0xf]
    %v33 = vld [vmem:[%s1 + $0x10] sm:$0xf]
    %v34 = vld [vmem:[%s1 + $0x14] sm:$0xf]
    %v35 = vld [vmem:[%s1 + $0x18] sm:$0xf]
    %v36 = vld [vmem:[%s1 + $0x1c] sm:$0xf]
    %v37 = vld [vmem:[%s1 + $0x20] sm:$0xf]
    %v38 = vld [vmem:[%s1 + $0x24] sm:$0xf]
    %v39 = vld [vmem:[%s1 + $0x28] sm:$0xf]
    %v40 = vld [vmem:[%s1 + $0x2c] sm:$0xf]
    %v41 = vld [vmem:[%s1 + $0x30] sm:$0xf]
    %v42 = vld [vmem:[%s1 + $0x34] sm:$0xf]
    %v43 = vld [vmem:[%s1 + $0x38] sm:$0xf]
    %v44 = vld [vmem:[%s1 + $0x3c] sm:$0xf]
    %v45 = vld [vmem:[%s1 + $0x40] sm:$0xf]
    %v46 = vld [vmem:[%s1 + $0x44] sm:$0xf]
    %v47 = vld [vmem:[%s1 + $0x48] sm:$0xf]
    %v48 = vld [vmem:[%s1 + $0x4c] sm:$0xf]
    %v49 = vld [vmem:[%s1 + $0x50] sm:$0xf]
    %v50 = vld [vmem:[%s1 + $0x54] sm:$0xf]
    %v51 = vld [vmem:[%s1 + $0x58] sm:$0xf]
    %v52 = vld [vmem:[%s1 + $0x5c] sm:$0xf]
    %v53 = vld [vmem:[%s1 + $0x60] sm:$0xf]
    %v54 = vld [vmem:[%s1 + $0x64] sm:$0xf]
    %v55 = vld [vmem:[%s1 + $0x68] sm:$0xf]
    %v56 = vld [vmem:[%s1 + $0x6c] sm:$0xf]
    %v57 = vld [vmem:[%s1 + $0x70] sm:$0xf]
    %v58 = vld [vmem:[%s1 + $0x74] sm:$0xf]
    %v59 = vld [vmem:[%s1 + $0x78] sm:$0xf]
    %v60 = vld [vmem:[%s1 + $0x7c] sm:$0xf]
    %v61 = vld [vmem:[%s1 + $0x80] sm:$0xf]
    %v62 = vld [vmem:[%s1 + $0x84] sm:$0xf]
    %v63 = vld [vmem:[%s1 + $0x88] sm:$0xf]
    %v64 = vld [vmem:[%s1 + $0x8c] sm:$0xf]
    %v65 = vld [vmem:[%s1 + $0x90] sm:$0xf]
    %v66 = vld [vmem:[%s1 + $0x94] sm:$0xf]
    %v67 = vld [vmem:[%s1 + $0x98] sm:$0xf]
    %v68 = vld [vmem:[%s1 + $0x9c] sm:$0xf]
    %v69 = vld [vmem:[%s1 + $0xa0] sm:$0xf]
    %v70 = vld [vmem:[%s1 + $0xa4] sm:$0xf]
    %v71 = vld [vmem:[%s1 + $0xa8] sm:$0xf]
    %v72 = vld [vmem:[%s1 + $0xac] sm:$0xf]
    %v73 = vld [vmem:[%s1 + $0xb0] sm:$0xf]
    %v74 = vld [vmem:[%s1 + $0xb4] sm:$0xf]
    %v75 = vld [vmem:[%s1 + $0xb8] sm:$0xf]
    %v76 = vld [vmem:[%s1 + $0xbc] sm:$0xf]
    %v77 = vld [vmem:[%s1 + $0xc0] sm:$0xf]
    %v78 = vld [vmem:[%s1 + $0xc4] sm:$0xf]
    %v79 = vld [vmem:[%s2] sm:$0x1]
    %v81 = vlaneseq
    %v82 = vshrl.u32 %v81, 7
    %v83 = vsub.s32 0, %v82
    %v84 = vrot.slane %v79, %v83
    %v88 = vunpack.c.l.s4 1966171168
    %v89 = vunpack.c.0.s8 %v88
    %v90 = vlaneseq
    %v91 = vshrl.u32 %v90, 7
    %v92 = vsub.s32 %v89, %v91
    %v93 = vrot.slane %v28, %v92
    %v94 = vcombine.high %v93, %v93
    %v96 = vunpack.c.l.s4 1966171168
    %v97 = vunpack.c.0.s8 %v96
    %v98 = vlaneseq
    %v99 = vshrl.u32 %v98, 7
    %v100 = vsub.s32 %v97, %v99
    %v101 = vrot.slane %v93, %v100
    %v103 = vunpack.c.l.s4 1966171168
    %v104 = vunpack.c.0.s8 %v103
    %v105 = vlaneseq
    %v106 = vshrl.u32 %v105, 7
    %v107 = vsub.s32 %v104, %v106
    %v108 = vrot.slane %v94, %v107
    %v109 = vcombine.high %v101, %v101
    %v110 = vcombine.high %v108, %v108
    %v164 = vunpack.c.l.b16 %v29
    %v165 = vunpack.c.l.b16 %v30
    %v166 = vunpack.c.l.b16 %v31
    %v167 = vunpack.c.l.b16 %v32
    %v168 = vunpack.c.l.b16 %v33
    %v169 = vunpack.c.l.b16 %v34
    %v170 = vunpack.c.l.b16 %v35
    %v171 = vunpack.c.l.b16 %v36
    %v172 = vunpack.c.l.b16 %v37
    %v173 = vunpack.c.l.b16 %v38
    %v174 = vunpack.c.l.b16 %v39
    %v175 = vunpack.c.l.b16 %v40
    %v176 = vunpack.c.l.b16 %v41
    %v177 = vunpack.c.l.b16 %v42
    %v178 = vunpack.c.l.b16 %v43
    %v179 = vunpack.c.l.b16 %v44
    %v180 = vunpack.c.l.b16 %v45
    %v181 = vunpack.c.l.b16 %v46
    %v182 = vunpack.c.l.b16 %v47
    %v183 = vunpack.c.l.b16 %v48
    %v184 = vunpack.c.l.b16 %v49
    %v185 = vunpack.c.l.b16 %v50
    %v186 = vunpack.c.l.b16 %v51
    %v187 = vunpack.c.l.b16 %v52
    %v188 = vunpack.c.l.b16 %v53
    %v189 = vunpack.c.l.b16 %v54
    %v190 = vunpack.c.l.b16 %v55
    %v191 = vunpack.c.l.b16 %v56
    %v192 = vunpack.c.l.b16 %v57
    %v193 = vunpack.c.l.b16 %v58
    %v194 = vunpack.c.l.b16 %v59
    %v195 = vunpack.c.l.b16 %v60
    %v196 = vunpack.c.l.b16 %v61
    %v197 = vunpack.c.l.b16 %v62
    %v198 = vunpack.c.l.b16 %v63
    %v199 = vunpack.c.l.b16 %v64
    %v200 = vunpack.c.l.b16 %v65
    %v201 = vunpack.c.l.b16 %v66
    %v202 = vunpack.c.l.b16 %v67
    %v203 = vunpack.c.l.b16 %v68
    %v204 = vunpack.c.l.b16 %v69
    %v205 = vunpack.c.l.b16 %v70
    %v206 = vunpack.c.l.b16 %v71
    %v207 = vunpack.c.l.b16 %v72
    %v208 = vunpack.c.l.b16 %v73
    %v209 = vunpack.c.l.b16 %v74
    %v210 = vunpack.c.l.b16 %v75
    %v211 = vunpack.c.l.b16 %v76
    %v212 = vunpack.c.l.b16 %v77
    %v213 = vunpack.c.l.b16 %v78
    %v214 = vpack.c.b16 %v165, %v164
    %v215 = vpack.c.b16 %v167, %v166
    %v216 = vpack.c.b16 %v169, %v168
    %v217 = vpack.c.b16 %v171, %v170
    %v218 = vpack.c.b16 %v173, %v172
    %v219 = vpack.c.b16 %v175, %v174
    %v220 = vpack.c.b16 %v177, %v176
    %v221 = vpack.c.b16 %v179, %v178
    %v222 = vpack.c.b16 %v181, %v180
    %v223 = vpack.c.b16 %v183, %v182
    %v224 = vpack.c.b16 %v185, %v184
    %v225 = vpack.c.b16 %v187, %v186
    %v226 = vpack.c.b16 %v189, %v188
    %v227 = vpack.c.b16 %v191, %v190
    %v228 = vpack.c.b16 %v193, %v192
    %v229 = vpack.c.b16 %v195, %v194
    %v230 = vpack.c.b16 %v197, %v196
    %v231 = vpack.c.b16 %v199, %v198
    %v232 = vpack.c.b16 %v201, %v200
    %v233 = vpack.c.b16 %v203, %v202
    %v234 = vpack.c.b16 %v205, %v204
    %v235 = vpack.c.b16 %v207, %v206
    %v236 = vpack.c.b16 %v209, %v208
    %v237 = vpack.c.b16 %v211, %v210
    %v238 = vpack.c.b16 %v213, %v212
    %vm264 = vcmask 130048
    %v266 = vsel %vm264, %v110, 0
    %268 = vmatprep.subr.bf16.mxu0 0
    %269 = vmatpush1.bf16.msra.mxu0 %v214
    %270 = vmatprep.subr.bf16.mxu0 0
    %271 = vmatpush1.bf16.msra.mxu0 %v215
    %272 = vmatprep.subr.bf16.mxu0 0
    %273 = vmatpush1.bf16.msra.mxu0 %v216
    %274 = vmatprep.subr.bf16.mxu0 0
    %275 = vmatpush1.bf16.msra.mxu0 %v217
    %276 = vmatprep.subr.bf16.mxu0 0
    %277 = vmatpush1.bf16.msra.mxu0 %v218
    %278 = vmatprep.subr.bf16.mxu0 0
    %279 = vmatpush1.bf16.msra.mxu0 %v219
    %280 = vmatprep.subr.bf16.mxu0 0
    %281 = vmatpush1.bf16.msra.mxu0 %v220
    %282 = vmatprep.subr.bf16.mxu0 0
    %283 = vmatpush1.bf16.msra.mxu0 %v221
    %284 = vmatprep.subr.bf16.mxu0 0
    %285 = vmatpush1.bf16.msra.mxu0 %v222
    %286 = vmatprep.subr.bf16.mxu0 0
    %287 = vmatpush1.bf16.msra.mxu0 %v223
    %288 = vmatprep.subr.bf16.mxu0 0
    %289 = vmatpush1.bf16.msra.mxu0 %v224
    %290 = vmatprep.subr.bf16.mxu0 0
    %291 = vmatpush1.bf16.msra.mxu0 %v225
    %292 = vmatprep.subr.bf16.mxu0 0
    %293 = vmatpush1.bf16.msra.mxu0 %v226
    %294 = vmatprep.subr.bf16.mxu0 0
    %295 = vmatpush1.bf16.msra.mxu0 %v227
    %296 = vmatprep.subr.bf16.mxu0 0
    %297 = vmatpush1.bf16.msra.mxu0 %v228
    %298 = vmatprep.subr.bf16.mxu0 0
    %299 = vmatpush1.bf16.msra.mxu0 %v229
    %300 = vmatprep.mubr.bf16.mxu0 %v108
    %301 = vmatmul.mubr.bf16.gmra.mrb[0].mxu0 %v101
    %v302 = vpop.f32.mrb[0].mxu0
    %v303 = vadd.f32 %v84, %v302
    %v304 = vpop.f32.mrb[0].mxu0
    %v305 = vpop.f32.mrb[0].mxu0
    %v306 = vpop.f32.mrb[0].mxu0
    %307 = vdwg.mxu0
    %308 = vmatprep.subr.bf16.mxu0 0
    %309 = vmatpush1.bf16.msra.mxu0 %v230
    %310 = vmatprep.subr.bf16.mxu0 0
    %311 = vmatpush1.bf16.msra.mxu0 %v231
    %312 = vmatprep.subr.bf16.mxu0 0
    %313 = vmatpush1.bf16.msra.mxu0 %v232
    %314 = vmatprep.subr.bf16.mxu0 0
    %315 = vmatpush1.bf16.msra.mxu0 %v233
    %316 = vmatprep.subr.bf16.mxu0 0
    %317 = vmatpush1.bf16.msra.mxu0 %v234
    %318 = vmatprep.subr.bf16.mxu0 0
    %319 = vmatpush1.bf16.msra.mxu0 %v235
    %320 = vmatprep.subr.bf16.mxu0 0
    %321 = vmatpush1.bf16.msra.mxu0 %v236
    %322 = vmatprep.subr.bf16.mxu0 0
    %323 = vmatpush1.bf16.msra.mxu0 %v237
    %324 = vmatprep.subr.bf16.mxu0 0
    %325 = vmatpush1.bf16.msra.mxu0 %v238
    %326 = vmatprep.subr.bf16.mxu0 0
    %327 = vmatpush1.bf16.msra.mxu0 0
    %328 = vmatprep.subr.bf16.mxu0 0
    %329 = vmatpush1.bf16.msra.mxu0 0
    %330 = vmatprep.subr.bf16.mxu0 0
    %331 = vmatpush1.bf16.msra.mxu0 0
    %332 = vmatprep.subr.bf16.mxu0 0
    %333 = vmatpush1.bf16.msra.mxu0 0
    %334 = vmatprep.subr.bf16.mxu0 0
    %335 = vmatpush1.bf16.msra.mxu0 0
    %336 = vmatprep.subr.bf16.mxu0 0
    %337 = vmatpush1.bf16.msra.mxu0 0
    %338 = vmatprep.subr.bf16.mxu0 0
    %339 = vmatpush1.bf16.msra.mxu0 0
    %340 = vmatprep.mubr.bf16.mxu0 %v266
    %341 = vmatmul.mubr.bf16.gmra.mrb[0].mxu0 %v109
    %v342 = vpop.f32.mrb[0].mxu0
    %v343 = vadd.f32 %v303, %v342
    %v344 = vpop.f32.mrb[0].mxu0
    %v345 = vpop.f32.mrb[0].mxu0
    %v346 = vpop.f32.mrb[0].mxu0
    %347 = vdwg.mxu0
    %v348 = vmax.f32 %v343, 0.0
    %v349 = vpack.c.bf16 %v348, %v348
    %v350 = vld [vmem:[%s3] sm:$0xf]
    %v351 = vld [vmem:[%s3 + $0x4] sm:$0xf]
    %v352 = vld [vmem:[%s3 + $0x8] sm:$0xf]
    %v353 = vld [vmem:[%s3 + $0xc] sm:$0xf]
    %v354 = vld [vmem:[%s3 + $0x10] sm:$0xf]
    %v355 = vld [vmem:[%s3 + $0x14] sm:$0xf]
    %v356 = vld [vmem:[%s3 + $0x18] sm:$0xf]
    %v357 = vld [vmem:[%s3 + $0x1c] sm:$0xf]
    %v358 = vld [vmem:[%s3 + $0x20] sm:$0xf]
    %v359 = vld [vmem:[%s3 + $0x24] sm:$0xf]
    %v360 = vld [vmem:[%s3 + $0x28] sm:$0xf]
    %v361 = vld [vmem:[%s3 + $0x2c] sm:$0xf]
    %v362 = vld [vmem:[%s3 + $0x30] sm:$0xf]
    %v363 = vld [vmem:[%s3 + $0x34] sm:$0xf]
    %v364 = vld [vmem:[%s3 + $0x38] sm:$0xf]
    %v365 = vld [vmem:[%s4] sm:$0x1]
    %v367 = vlaneseq
    %v368 = vshrl.u32 %v367, 7
    %v369 = vsub.s32 0, %v368
    %v370 = vrot.slane %v365, %v369
    %v387 = vunpack.c.l.b16 %v350
    %v388 = vunpack.c.l.b16 %v351
    %v389 = vunpack.c.l.b16 %v352
    %v390 = vunpack.c.l.b16 %v353
    %v391 = vunpack.c.l.b16 %v354
    %v392 = vunpack.c.l.b16 %v355
    %v393 = vunpack.c.l.b16 %v356
    %v394 = vunpack.c.l.b16 %v357
    %v395 = vunpack.c.l.b16 %v358
    %v396 = vunpack.c.l.b16 %v359
    %v397 = vunpack.c.l.b16 %v360
    %v398 = vunpack.c.l.b16 %v361
    %v399 = vunpack.c.l.b16 %v362
    %v400 = vunpack.c.l.b16 %v363
    %v401 = vunpack.c.l.b16 %v364
    %v402 = vpack.c.b16 %v388, %v387
    %v403 = vpack.c.b16 %v390, %v389
    %v404 = vpack.c.b16 %v392, %v391
    %v405 = vpack.c.b16 %v394, %v393
    %v406 = vpack.c.b16 %v396, %v395
    %v407 = vpack.c.b16 %v398, %v397
    %v408 = vpack.c.b16 %v400, %v399
    %v409 = vpack.c.b16 %v401, %v401
    %vm417 = vcmask 982016
    %v419 = vsel %vm417, %v349, 0
    %vm421 = vcmask 1043456
    %v423 = vsel %vm421, %v409, 0
    %425 = vmatprep.subr.bf16.mxu0 0
    %426 = vmatpush1.bf16.msra.mxu0 %v402
    %427 = vmatprep.subr.bf16.mxu0 0
    %428 = vmatpush1.bf16.msra.mxu0 %v403
    %429 = vmatprep.subr.bf16.mxu0 0
    %430 = vmatpush1.bf16.msra.mxu0 %v404
    %431 = vmatprep.subr.bf16.mxu0 0
    %432 = vmatpush1.bf16.msra.mxu0 %v405
    %433 = vmatprep.subr.bf16.mxu0 0
    %434 = vmatpush1.bf16.msra.mxu0 %v406
    %435 = vmatprep.subr.bf16.mxu0 0
    %436 = vmatpush1.bf16.msra.mxu0 %v407
    %437 = vmatprep.subr.bf16.mxu0 0
    %438 = vmatpush1.bf16.msra.mxu0 %v408
    %439 = vmatprep.subr.bf16.mxu0 0
    %440 = vmatpush1.bf16.msra.mxu0 %v423
    %441 = vmatprep.subr.bf16.mxu0 0
    %442 = vmatpush1.bf16.msra.mxu0 0
    %443 = vmatprep.subr.bf16.mxu0 0
    %444 = vmatpush1.bf16.msra.mxu0 0
    %445 = vmatprep.subr.bf16.mxu0 0
    %446 = vmatpush1.bf16.msra.mxu0 0
    %447 = vmatprep.subr.bf16.mxu0 0
    %448 = vmatpush1.bf16.msra.mxu0 0
    %449 = vmatprep.subr.bf16.mxu0 0
    %450 = vmatpush1.bf16.msra.mxu0 0
    %451 = vmatprep.subr.bf16.mxu0 0
    %452 = vmatpush1.bf16.msra.mxu0 0
    %453 = vmatprep.subr.bf16.mxu0 0
    %454 = vmatpush1.bf16.msra.mxu0 0
    %455 = vmatprep.subr.bf16.mxu0 0
    %456 = vmatpush1.bf16.msra.mxu0 0
    %457 = vmatprep.mubr.bf16.mxu0 0
    %458 = vmatmul.mubr.bf16.gmra.mrb[0].mxu0 %v419
    %v459 = vpop.f32.mrb[0].mxu0
    %v460 = vadd.f32 %v370, %v459
    %v461 = vpop.f32.mrb[0].mxu0
    %v462 = vpop.f32.mrb[0].mxu0
    %v463 = vpop.f32.mrb[0].mxu0
    %464 = vdwg.mxu0
    %v465 = vmax.f32 %v460, 0.0
    %v466 = vpack.c.bf16 %v465, %v465
    %v467 = vld [vmem:[%s5] sm:$0xf]
    %v468 = vld [vmem:[%s5 + $0x4] sm:$0xf]
    %v469 = vld [vmem:[%s5 + $0x8] sm:$0xf]
    %v470 = vld [vmem:[%s5 + $0xc] sm:$0xf]
    %v471 = vld [vmem:[%s5 + $0x10] sm:$0xf]
    %v472 = vld [vmem:[%s5 + $0x14] sm:$0xf]
    %v473 = vld [vmem:[%s5 + $0x18] sm:$0xf]
    %v474 = vld [vmem:[%s5 + $0x1c] sm:$0xf]
    %v475 = vld [vmem:[%s5 + $0x20] sm:$0xf]
    %v476 = vld [vmem:[%s5 + $0x24] sm:$0xf]
    %v477 = vld [vmem:[%s5 + $0x28] sm:$0x3]
    %v478 = vld [vmem:[%s6] sm:$0x1]
    %v480 = vlaneseq
    %v481 = vshrl.u32 %v480, 7
    %v482 = vsub.s32 0, %v481
    %v483 = vrot.slane %v478, %v482
    %v496 = vunpack.c.l.b16 %v467
    %v497 = vunpack.c.l.b16 %v468
    %v498 = vunpack.c.l.b16 %v469
    %v499 = vunpack.c.l.b16 %v470
    %v500 = vunpack.c.l.b16 %v471
    %v501 = vunpack.c.l.b16 %v472
    %v502 = vunpack.c.l.b16 %v473
    %v503 = vunpack.c.l.b16 %v474
    %v504 = vunpack.c.l.b16 %v475
    %v505 = vunpack.c.l.b16 %v476
    %v506 = vunpack.c.l.b16 %v477
    %v507 = vpack.c.b16 %v497, %v496
    %v508 = vpack.c.b16 %v499, %v498
    %v509 = vpack.c.b16 %v501, %v500
    %v510 = vpack.c.b16 %v503, %v502
    %v511 = vpack.c.b16 %v505, %v504
    %v512 = vpack.c.b16 %v506, %v506
    %vm518 = vcmask 687104
    %v520 = vsel %vm518, %v466, 0
    %vm522 = vcmask 1041408
    %v524 = vsel %vm522, %v512, 0
    %526 = vmatprep.subr.bf16.mxu0 0
    %527 = vmatpush1.bf16.msra.mxu0 %v507
    %528 = vmatprep.subr.bf16.mxu0 0
    %529 = vmatpush1.bf16.msra.mxu0 %v508
    %530 = vmatprep.subr.bf16.mxu0 0
    %531 = vmatpush1.bf16.msra.mxu0 %v509
    %532 = vmatprep.subr.bf16.mxu0 0
    %533 = vmatpush1.bf16.msra.mxu0 %v510
    %534 = vmatprep.subr.bf16.mxu0 0
    %535 = vmatpush1.bf16.msra.mxu0 %v511
    %536 = vmatprep.subr.bf16.mxu0 0
    %537 = vmatpush1.bf16.msra.mxu0 %v524
    %538 = vmatprep.subr.bf16.mxu0 0
    %539 = vmatpush1.bf16.msra.mxu0 0
    %540 = vmatprep.subr.bf16.mxu0 0
    %541 = vmatpush1.bf16.msra.mxu0 0
    %542 = vmatprep.subr.bf16.mxu0 0
    %543 = vmatpush1.bf16.msra.mxu0 0
    %544 = vmatprep.subr.bf16.mxu0 0
    %545 = vmatpush1.bf16.msra.mxu0 0
    %546 = vmatprep.subr.bf16.mxu0 0
    %547 = vmatpush1.bf16.msra.mxu0 0
    %548 = vmatprep.subr.bf16.mxu0 0
    %549 = vmatpush1.bf16.msra.mxu0 0
    %550 = vmatprep.subr.bf16.mxu0 0
    %551 = vmatpush1.bf16.msra.mxu0 0
    %552 = vmatprep.subr.bf16.mxu0 0
    %553 = vmatpush1.bf16.msra.mxu0 0
    %554 = vmatprep.subr.bf16.mxu0 0
    %555 = vmatpush1.bf16.msra.mxu0 0
    %556 = vmatprep.subr.bf16.mxu0 0
    %557 = vmatpush1.bf16.msra.mxu0 0
    %558 = vmatprep.mubr.bf16.mxu0 0
    %559 = vmatmul.mubr.bf16.gmra.mrb[0].mxu0 %v520
    %v560 = vpop.f32.mrb[0].mxu0
    %v561 = vadd.f32 %v483, %v560
    %v562 = vpop.f32.mrb[0].mxu0
    %v563 = vpop.f32.mrb[0].mxu0
    %v564 = vpop.f32.mrb[0].mxu0
    %565 = vdwg.mxu0
    %vm566 = vcmask 74752
    %567 = vst.msk [vmem:[#allocation2] sm:$0x3] %vm566, %v561
    // Predicated region
    $region30: #{net_forward.5} parent=1 // pred_check
      _
    $region31: #{net_forward.5} parent=1 // pred_check_branch
      %569 = sbr.rel (0) target = $region33
    $region32: #{net_forward.5} parent=1 // pred_region
      %s571 = ssub.s32 32, 32
      %572 = vsyncadd [#allocation3], %s571
      %s574 = sshll.u32 [#allocation2], 4
      %s575 = int_to_ptr.vmem [resolvable:$true] %s574
      %577 = dma.vmem_to_hbm [thread:$0]  %s575, 32, %s7, [#allocation3]
    $region33: #{net_forward.5} parent=1 // pred_fallthru
      _
    // Predicated region
    $region34: #{net_forward.5} parent=1 // pred_check
      _
    $region35: #{net_forward.5} parent=1 // pred_check_branch
      %579 = sbr.rel (0) target = $region37
    $region36: #{net_forward.5} parent=1 // pred_region
      %580 = dma.done [#allocation3], 32
    $region37: #{net_forward.5} parent=1 // pred_fallthru
      _
    %581 = vsyncpa [#allocation3], 1

</llo_original>
